<compile_context>
chip_gen: v6e
topology: v6e:2x2x1
jax: 0.10.0
libtpu: 0.0.40
codegen_flags: <defaults>
</compile_context>

<pallas_src>
import math

import numpy as np
import jax
import jax.numpy as jnp
from jax import lax
from jax.experimental import pallas as pl
from jax.experimental.pallas import tpu as pltpu  # noqa: F401  (TPU backend)


# -----------------------------------------------------------------------------
# Pallas kernel: the whole LSTMAtt forward in one invocation (no grid).
# -----------------------------------------------------------------------------
def lstm_att_kernel(x_ref,     # (seq*batch, KP)    bf16  packed [r|d|w|pad] features
                    w_ref,     # (KP + 9H, 12H)     bf16  [W0x; W0h; W1x; W1h] block-diag
                    p_ref,     # (8, 12H)           f32   biases / fc params
                    out_ref):  # (batch, 1)         f32
    NB = 3
    batch = out_ref.shape[0]
    SB, KP = x_ref.shape
    seq = SB // batch
    G = w_ref.shape[1]          # 12H = 3 * 4H
    H3 = G // 4                 # 3H  (one gate slab across branches)
    H = H3 // NB
    SIG = 3 * H3                # [i|f|o] sigmoid slab width

    # Weight views (bf16-tile aligned static slices; no load yet — loads stream
    # right next to each matmul that consumes them).
    w0x = w_ref.at[0:KP, :]
    w0h = w_ref.at[KP:KP + H3, :]
    w1x = w_ref.at[KP + H3:KP + 2 * H3, :]
    w1h = w_ref.at[KP + 2 * H3:KP + 3 * H3, :]

    # Layer-0 input projection for every timestep (+ bias), hoisted off the
    # recurrence critical path: one (seq*batch, KP) @ (KP, 12H) matmul.
    xp = (jnp.dot(x_ref[...], w0x[...], preferred_element_type=jnp.float32)
          + p_ref[0:1, :])                               # (seq*batch, 12H) f32
    b1 = jnp.broadcast_to(p_ref[1:2, :], (batch, G))     # hoisted broadcast

    def gates_to_hc(g, c):
        s = jax.nn.sigmoid(g[:, :SIG])       # one dispatch for the [i|f|o] slab
        gg = jnp.tanh(g[:, SIG:])            # one dispatch for the g slab
        i, f, o = s[:, :H3], s[:, H3:2 * H3], s[:, 2 * H3:]
        c_new = f * c + i * gg
        return o * jnp.tanh(c_new), c_new

    zeros = jnp.zeros((batch, H3), jnp.float32)
    h0, c0, h1, c1 = zeros, zeros, zeros, zeros
    hs = []
    for t in range(seq):                     # fully unrolled: seq is small & static
        # layer 0 (all 3 branches in one block-diag matmul)
        g0 = xp[t * batch:(t + 1) * batch, :] + jnp.dot(
            h0.astype(jnp.bfloat16), w0h[...], preferred_element_type=jnp.float32)
        h0, c0 = gates_to_hc(g0, c0)
        # layer 1: h0 @ Wih1 + h1 @ Whh1 (no concatenate on the critical path)
        g1 = (jnp.dot(h0.astype(jnp.bfloat16), w1x[...],
                      preferred_element_type=jnp.float32)
              + jnp.dot(h1.astype(jnp.bfloat16), w1h[...],
                        preferred_element_type=jnp.float32) + b1)
        h1, c1 = gates_to_hc(g1, c1)
        hs.append(h1)                        # (batch, 3H) layer-1 output at step t

    # ---------------- attention tail (batched over branches) -----------------
    hall = jnp.stack(hs, axis=1)             # (batch, seq, 3H) — attention-ready
    hb = hall.astype(jnp.bfloat16)
    inv_sqrt_dk = jnp.float32(1.0 / math.sqrt(H))

    scores, ys = [], []
    for n in range(NB):                      # 3 tiny matmuls; softmax is batched below
        xn = hb[:, :, n * H:(n + 1) * H]     # (batch, seq, H)
        scores.append(jnp.einsum('bqh,bkh->bqk', xn, xn,
                                 preferred_element_type=jnp.float32))
        # fc_{r,d,w} (pre-scaled by the final fc weight) folded into the tail:
        #   sum_q softmax(S) @ X @ w == (sum_q softmax(S)) . (X @ w)
        fcw_n = p_ref[2 + n:3 + n, 0:H]      # (1, H)
        ys.append(jnp.sum(hall[:, :, n * H:(n + 1) * H] * fcw_n[None], axis=-1))

    s_all = jnp.concatenate(scores, axis=0) * inv_sqrt_dk   # (3*batch, seq, seq)
    m = jnp.max(s_all, axis=-1, keepdims=True)
    e = jnp.exp(s_all - m)
    p = e * pl.reciprocal(jnp.sum(e, axis=-1, keepdims=True), approx=True)
    p_sum = jnp.sum(p, axis=1)                               # (3*batch, seq)  sum over q
    y_all = jnp.concatenate(ys, axis=0)                      # (3*batch, seq)

    contrib = jnp.sum(p_sum * y_all, axis=-1, keepdims=True)  # (3*batch, 1)
    # final 3 -> 1 Linear is already folded into y_all / the packed bias.
    out_ref[...] = (contrib[0:batch] + contrib[batch:2 * batch]
                    + contrib[2 * batch:3 * batch] + p_ref[5:6, 0:1])


# -----------------------------------------------------------------------------
# Wrapper
# -----------------------------------------------------------------------------
@jax.jit
def lstm_att_forward(r_feature, d_feature, w_feature, kparams):
    """Full LSTMAtt forward.  Inputs: (seq, batch, in_dim) each -> (batch, 1)."""
    W, P = kparams['W'], kparams['P']
    seq, batch, in_dim = r_feature.shape
    nb = 3
    H3 = W.shape[1] // 4
    KP = W.shape[0] - 3 * H3
    x = jnp.concatenate([r_feature, d_feature, w_feature], axis=-1)  # (seq, batch, 3*in)
    pad = KP - nb * in_dim
    if pad:
        x = jnp.pad(x, ((0, 0), (0, 0), (0, pad)))
    x = x.reshape(seq * batch, KP).astype(jnp.bfloat16)              # one bf16 tile
    return pl.pallas_call(
        lstm_att_kernel,
        out_shape=jax.ShapeDtypeStruct((batch, 1), jnp.float32),
    )(x, W, P)


def prepare_kernel_params(p):
    """Torch-layout params -> packed kernel buffers (block-diag, gate-reordered)."""
    wih0 = np.asarray(p['wih0'], np.float32)   # (3, 4H, in_dim)
    whh0 = np.asarray(p['whh0'], np.float32)   # (3, 4H, H)
    b0   = np.asarray(p['b0'],   np.float32)   # (3, 4H)   (b_ih + b_hh)
    wih1 = np.asarray(p['wih1'], np.float32)   # (3, 4H, H)
    whh1 = np.asarray(p['whh1'], np.float32)   # (3, 4H, H)
    b1   = np.asarray(p['b1'],   np.float32)   # (3, 4H)
    fcw  = np.asarray(p['fcw'],  np.float32)   # (3, 1, H)
    fcb  = np.asarray(p['fcb'],  np.float32)   # (3, 1)
    fc_w = np.asarray(p['fc_w'], np.float32)   # (1, 3)
    fc_b = np.asarray(p['fc_b'], np.float32)   # (1,)

    nb, G4, in_dim = wih0.shape
    H = G4 // 4
    G = nb * G4                                   # 12H gate columns
    KP = -(-(nb * in_dim) // 16) * 16             # bf16 sublane-tile aligned rows
    GATE_ORDER = (0, 1, 3, 2)                     # torch [i,f,g,o] -> kernel [i,f,o,g]

    def bdiag(w, rows):
        """(nb, 4H, K) torch layout -> (rows, 12H) block-diag, gate-reordered."""
        K = w.shape[2]
        out = np.zeros((rows, G), np.float32)
        for n in range(nb):
            for gi, sg in enumerate(GATE_ORDER):
                out[n * K:(n + 1) * K,
                    (gi * nb + n) * H:(gi * nb + n + 1) * H] = \
                    w[n, sg * H:(sg + 1) * H, :].T
        return out

    def bias_pack(b):
        out = np.zeros((G,), np.float32)
        for n in range(nb):
            for gi, sg in enumerate(GATE_ORDER):
                out[(gi * nb + n) * H:(gi * nb + n + 1) * H] = b[n, sg * H:(sg + 1) * H]
        return out

    W = np.concatenate([bdiag(wih0, KP),          # layer-0 input projection (rows 0:KP)
                        bdiag(whh0, nb * H),      # layer-0 recurrent
                        bdiag(wih1, nb * H),      # layer-1 "input"  (applied to h0)
                        bdiag(whh1, nb * H)],     # layer-1 recurrent (applied to h1)
                       axis=0)

    P = np.zeros((8, G), np.float32)
    P[0] = bias_pack(b0)                          # row 0: combined layer-0 bias
    P[1] = bias_pack(b1)                          # row 1: combined layer-1 bias
    for n in range(nb):
        P[2 + n, 0:H] = fcw[n, 0] * fc_w[0, n]    # rows 2-4: fc_{r,d,w} * final fc w
    P[5, 0] = float(fc_w[0] @ fcb[:, 0] + fc_b[0])  # row 5: folded output bias

    return {'W': jnp.asarray(W, dtype=jnp.bfloat16),
            'P': jnp.asarray(P, dtype=jnp.float32)}


# -----------------------------------------------------------------------------
# Pure-JAX reference (for a sanity check)
# -----------------------------------------------------------------------------
def _lstm_layer_ref(x, wih, whh, b):
    H = whh.shape[1]

    def cell(carry, x_t):
        h, c = carry
        g = x_t @ wih.T + h @ whh.T + b
        i = jax.nn.sigmoid(g[:, :H])
        f = jax.nn.sigmoid(g[:, H:2 * H])
        gg = jnp.tanh(g[:, 2 * H:3 * H])
        o = jax.nn.sigmoid(g[:, 3 * H:])
        c = f * c + i * gg
        h = o * jnp.tanh(c)
        return (h, c), h

    B = x.shape[1]
    init = (jnp.zeros((B, H), jnp.float32), jnp.zeros((B, H), jnp.float32))
    _, ys = lax.scan(cell, init, x)
    return ys


def forward_ref(r, d, w, params):
    logits = []
    for i, x in enumerate((r, d, w)):
        out = _lstm_layer_ref(x, params['wih0'][i], params['whh0'][i], params['b0'][i])
        out = _lstm_layer_ref(out, params['wih1'][i], params['whh1'][i], params['b1'][i])
        xa = jnp.transpose(out, (1, 0, 2))                  # (batch, seq, H)
        H = xa.shape[-1]
        scores = jnp.einsum('bqh,bkh->bqk', xa, xa) / math.sqrt(H)
        p = jax.nn.softmax(scores, axis=-1)
        ctx = jnp.einsum('bqk,bkh->bqh', p, xa).sum(axis=1)
        logits.append(ctx @ params['fcw'][i].T + params['fcb'][i])
    logit_cat = jnp.concatenate(logits, axis=1)
    return logit_cat @ params['fc_w'].T + params['fc_b']


# -----------------------------------------------------------------------------
# Parameter init (deterministic, PyTorch-style U(-1/sqrt(H), 1/sqrt(H)))
# -----------------------------------------------------------------------------
def init_params(key, in_dim, hidden_dim, n_branch=3):
    H = hidden_dim
    k = 1.0 / math.sqrt(H)
    keys = jax.random.split(key, 12)

    def u(kk, shape, lim=k):
        return jax.random.uniform(kk, shape, jnp.float32, minval=-lim, maxval=lim)

    return {
        'wih0': u(keys[0], (n_branch, 4 * H, in_dim)),
        'whh0': u(keys[1], (n_branch, 4 * H, H)),
        'b0':   u(keys[2], (n_branch, 4 * H)) + u(keys[3], (n_branch, 4 * H)),
        'wih1': u(keys[4], (n_branch, 4 * H, H)),
        'whh1': u(keys[5], (n_branch, 4 * H, H)),
        'b1':   u(keys[6], (n_branch, 4 * H)) + u(keys[7], (n_branch, 4 * H)),
        'fcw':  u(keys[8], (n_branch, 1, H)),
        'fcb':  u(keys[9], (n_branch, 1)),
        'fc_w': u(keys[10], (1, 3), 1.0 / math.sqrt(3)),
        'fc_b': u(keys[11], (1,), 1.0 / math.sqrt(3)),
    }


# -----------------------------------------------------------------------------
if __name__ == "__main__":
    seq, batch, in_dim, hidden = 8, 2, 4, 32

    key = jax.random.PRNGKey(0)
    k_p, k_r, k_d, k_w = jax.random.split(key, 4)
    params = init_params(k_p, in_dim, hidden)
    kparams = prepare_kernel_params(params)

    r_feature = jax.random.normal(k_r, (seq, batch, in_dim), jnp.float32)
    d_feature = jax.random.normal(k_d, (seq, batch, in_dim), jnp.float32)
    w_feature = jax.random.normal(k_w, (seq, batch, in_dim), jnp.float32)

    out = lstm_att_forward(r_feature, d_feature, w_feature, kparams)
    out = jax.block_until_ready(out)
    assert out.shape == (batch, 1), out.shape

    # f32 reference; kernel uses bf16 MXU operands with f32 accumulation,
    # so agreement is to ~1e-3 — 2e-2 tolerance is ample.
    ref = forward_ref(r_feature, d_feature, w_feature, params)
    assert jnp.allclose(out, ref, rtol=2e-2, atol=2e-2), (out, ref)

    print("KERNEL_OK")
</pallas_src>

<mosaic_0001>
module attributes {stable_mosaic.version = 11 : i64} {
  func.func @lstm_att_kernel(%arg0: memref<16x16xbf16, #tpu.memory_space<vmem>>, %arg1: memref<304x384xbf16, #tpu.memory_space<vmem>>, %arg2: memref<8x384xf32, #tpu.memory_space<vmem>>, %arg3: memref<2x1xf32, #tpu.memory_space<vmem>>) attributes {dimension_semantics = [], scalar_prefetch = 0 : i64, scratch_operands = 0 : i64, tpu.core_type = #tpu.core_type<tc>} {
    %c0 = arith.constant 0 : index
    %c0_0 = arith.constant 0 : index
    %0 = vector.load %arg0[%c0, %c0_0] : memref<16x16xbf16, #tpu.memory_space<vmem>>, vector<16x16xbf16>
    %c0_1 = arith.constant 0 : index
    %c0_2 = arith.constant 0 : index
    %1 = vector.load %arg1[%c0_1, %c0_2] : memref<304x384xbf16, #tpu.memory_space<vmem>>, vector<16x384xbf16>
    %cst = arith.constant dense<0.000000e+00> : vector<16x384xf32>
    %2 = tpu.matmul %0, %1, %cst {dimension_numbers = #tpu.dot_dimension_numbers<[1], [0], [0], [1], [0, 0, 1, 1], [], []>} : vector<16x16xbf16>, vector<16x384xbf16>, vector<16x384xf32> -> vector<16x384xf32>
    %c0_3 = arith.constant 0 : index
    %c0_4 = arith.constant 0 : index
    %3 = vector.load %arg2[%c0_3, %c0_4] : memref<8x384xf32, #tpu.memory_space<vmem>>, vector<1x384xf32>
    %4 = vector.broadcast %3 : vector<1x384xf32> to vector<16x384xf32>
    %5 = arith.addf %2, %4 : vector<16x384xf32>
    %c1 = arith.constant 1 : index
    %c0_5 = arith.constant 0 : index
    %6 = vector.load %arg2[%c1, %c0_5] : memref<8x384xf32, #tpu.memory_space<vmem>>, vector<1x384xf32>
    %7 = vector.shape_cast %6 : vector<1x384xf32> to vector<1x384xf32>
    %8 = vector.broadcast %7 : vector<1x384xf32> to vector<2x384xf32>
    %cst_6 = arith.constant 0.000000e+00 : f32
    %9 = vector.broadcast %cst_6 : f32 to vector<2x96xf32>
    %10 = vector.extract_strided_slice %5 {offsets = [0, 0], sizes = [2, 384], strides = [1, 1]} : vector<16x384xf32> to vector<2x384xf32>
    %11 = arith.truncf %9 : vector<2x96xf32> to vector<2x96xbf16>
    %c16 = arith.constant 16 : index
    %c0_7 = arith.constant 0 : index
    %12 = vector.load %arg1[%c16, %c0_7] : memref<304x384xbf16, #tpu.memory_space<vmem>>, vector<96x384xbf16>
    %cst_8 = arith.constant dense<0.000000e+00> : vector<2x384xf32>
    %13 = tpu.matmul %11, %12, %cst_8 {dimension_numbers = #tpu.dot_dimension_numbers<[1], [0], [0], [1], [0, 0, 1, 1], [], []>} : vector<2x96xbf16>, vector<96x384xbf16>, vector<2x384xf32> -> vector<2x384xf32>
    %14 = arith.addf %10, %13 : vector<2x384xf32>
    %15 = vector.extract_strided_slice %14 {offsets = [0, 0], sizes = [2, 288], strides = [1, 1]} : vector<2x384xf32> to vector<2x288xf32>
    %16 = arith.negf %15 : vector<2x288xf32>
    %17 = math.exp %16 : vector<2x288xf32>
    %cst_9 = arith.constant 1.000000e+00 : f32
    %18 = vector.broadcast %cst_9 : f32 to vector<2x288xf32>
    %19 = arith.addf %18, %17 : vector<2x288xf32>
    %20 = arith.divf %18, %19 : vector<2x288xf32>
    %21 = vector.extract_strided_slice %14 {offsets = [0, 288], sizes = [2, 96], strides = [1, 1]} : vector<2x384xf32> to vector<2x96xf32>
    %22 = math.tanh %21 : vector<2x96xf32>
    %23 = vector.extract_strided_slice %20 {offsets = [0, 0], sizes = [2, 96], strides = [1, 1]} : vector<2x288xf32> to vector<2x96xf32>
    %24 = vector.extract_strided_slice %20 {offsets = [0, 96], sizes = [2, 96], strides = [1, 1]} : vector<2x288xf32> to vector<2x96xf32>
    %25 = vector.extract_strided_slice %20 {offsets = [0, 192], sizes = [2, 96], strides = [1, 1]} : vector<2x288xf32> to vector<2x96xf32>
    %26 = arith.mulf %24, %9 : vector<2x96xf32>
    %27 = arith.mulf %23, %22 : vector<2x96xf32>
    %28 = arith.addf %26, %27 : vector<2x96xf32>
    %29 = math.tanh %28 : vector<2x96xf32>
    %30 = arith.mulf %25, %29 : vector<2x96xf32>
    %31 = arith.truncf %30 : vector<2x96xf32> to vector<2x96xbf16>
    %c112 = arith.constant 112 : index
    %c0_10 = arith.constant 0 : index
    %32 = vector.load %arg1[%c112, %c0_10] : memref<304x384xbf16, #tpu.memory_space<vmem>>, vector<96x384xbf16>
    %cst_11 = arith.constant dense<0.000000e+00> : vector<2x384xf32>
    %33 = tpu.matmul %31, %32, %cst_11 {dimension_numbers = #tpu.dot_dimension_numbers<[1], [0], [0], [1], [0, 0, 1, 1], [], []>} : vector<2x96xbf16>, vector<96x384xbf16>, vector<2x384xf32> -> vector<2x384xf32>
    %34 = arith.truncf %9 : vector<2x96xf32> to vector<2x96xbf16>
    %c208 = arith.constant 208 : index
    %c0_12 = arith.constant 0 : index
    %35 = vector.load %arg1[%c208, %c0_12] : memref<304x384xbf16, #tpu.memory_space<vmem>>, vector<96x384xbf16>
    %cst_13 = arith.constant dense<0.000000e+00> : vector<2x384xf32>
    %36 = tpu.matmul %34, %35, %cst_13 {dimension_numbers = #tpu.dot_dimension_numbers<[1], [0], [0], [1], [0, 0, 1, 1], [], []>} : vector<2x96xbf16>, vector<96x384xbf16>, vector<2x384xf32> -> vector<2x384xf32>
    %37 = arith.addf %33, %36 : vector<2x384xf32>
    %38 = arith.addf %37, %8 : vector<2x384xf32>
    %39 = vector.extract_strided_slice %38 {offsets = [0, 0], sizes = [2, 288], strides = [1, 1]} : vector<2x384xf32> to vector<2x288xf32>
    %40 = arith.negf %39 : vector<2x288xf32>
    %41 = math.exp %40 : vector<2x288xf32>
    %cst_14 = arith.constant 1.000000e+00 : f32
    %42 = vector.broadcast %cst_14 : f32 to vector<2x288xf32>
    %43 = arith.addf %42, %41 : vector<2x288xf32>
    %44 = arith.divf %42, %43 : vector<2x288xf32>
    %45 = vector.extract_strided_slice %38 {offsets = [0, 288], sizes = [2, 96], strides = [1, 1]} : vector<2x384xf32> to vector<2x96xf32>
    %46 = math.tanh %45 : vector<2x96xf32>
    %47 = vector.extract_strided_slice %44 {offsets = [0, 0], sizes = [2, 96], strides = [1, 1]} : vector<2x288xf32> to vector<2x96xf32>
    %48 = vector.extract_strided_slice %44 {offsets = [0, 96], sizes = [2, 96], strides = [1, 1]} : vector<2x288xf32> to vector<2x96xf32>
    %49 = vector.extract_strided_slice %44 {offsets = [0, 192], sizes = [2, 96], strides = [1, 1]} : vector<2x288xf32> to vector<2x96xf32>
    %50 = arith.mulf %48, %9 : vector<2x96xf32>
    %51 = arith.mulf %47, %46 : vector<2x96xf32>
    %52 = arith.addf %50, %51 : vector<2x96xf32>
    %53 = math.tanh %52 : vector<2x96xf32>
    %54 = arith.mulf %49, %53 : vector<2x96xf32>
    %55 = vector.extract_strided_slice %5 {offsets = [2, 0], sizes = [2, 384], strides = [1, 1]} : vector<16x384xf32> to vector<2x384xf32>
    %56 = arith.truncf %30 : vector<2x96xf32> to vector<2x96xbf16>
    %c16_15 = arith.constant 16 : index
    %c0_16 = arith.constant 0 : index
    %57 = vector.load %arg1[%c16_15, %c0_16] : memref<304x384xbf16, #tpu.memory_space<vmem>>, vector<96x384xbf16>
    %cst_17 = arith.constant dense<0.000000e+00> : vector<2x384xf32>
    %58 = tpu.matmul %56, %57, %cst_17 {dimension_numbers = #tpu.dot_dimension_numbers<[1], [0], [0], [1], [0, 0, 1, 1], [], []>} : vector<2x96xbf16>, vector<96x384xbf16>, vector<2x384xf32> -> vector<2x384xf32>
    %59 = arith.addf %55, %58 : vector<2x384xf32>
    %60 = vector.extract_strided_slice %59 {offsets = [0, 0], sizes = [2, 288], strides = [1, 1]} : vector<2x384xf32> to vector<2x288xf32>
    %61 = arith.negf %60 : vector<2x288xf32>
    %62 = math.exp %61 : vector<2x288xf32>
    %cst_18 = arith.constant 1.000000e+00 : f32
    %63 = vector.broadcast %cst_18 : f32 to vector<2x288xf32>
    %64 = arith.addf %63, %62 : vector<2x288xf32>
    %65 = arith.divf %63, %64 : vector<2x288xf32>
    %66 = vector.extract_strided_slice %59 {offsets = [0, 288], sizes = [2, 96], strides = [1, 1]} : vector<2x384xf32> to vector<2x96xf32>
    %67 = math.tanh %66 : vector<2x96xf32>
    %68 = vector.extract_strided_slice %65 {offsets = [0, 0], sizes = [2, 96], strides = [1, 1]} : vector<2x288xf32> to vector<2x96xf32>
    %69 = vector.extract_strided_slice %65 {offsets = [0, 96], sizes = [2, 96], strides = [1, 1]} : vector<2x288xf32> to vector<2x96xf32>
    %70 = vector.extract_strided_slice %65 {offsets = [0, 192], sizes = [2, 96], strides = [1, 1]} : vector<2x288xf32> to vector<2x96xf32>
    %71 = arith.mulf %69, %28 : vector<2x96xf32>
    %72 = arith.mulf %68, %67 : vector<2x96xf32>
    %73 = arith.addf %71, %72 : vector<2x96xf32>
    %74 = math.tanh %73 : vector<2x96xf32>
    %75 = arith.mulf %70, %74 : vector<2x96xf32>
    %76 = arith.truncf %75 : vector<2x96xf32> to vector<2x96xbf16>
    %c112_19 = arith.constant 112 : index
    %c0_20 = arith.constant 0 : index
    %77 = vector.load %arg1[%c112_19, %c0_20] : memref<304x384xbf16, #tpu.memory_space<vmem>>, vector<96x384xbf16>
    %cst_21 = arith.constant dense<0.000000e+00> : vector<2x384xf32>
    %78 = tpu.matmul %76, %77, %cst_21 {dimension_numbers = #tpu.dot_dimension_numbers<[1], [0], [0], [1], [0, 0, 1, 1], [], []>} : vector<2x96xbf16>, vector<96x384xbf16>, vector<2x384xf32> -> vector<2x384xf32>
    %79 = arith.truncf %54 : vector<2x96xf32> to vector<2x96xbf16>
    %c208_22 = arith.constant 208 : index
    %c0_23 = arith.constant 0 : index
    %80 = vector.load %arg1[%c208_22, %c0_23] : memref<304x384xbf16, #tpu.memory_space<vmem>>, vector<96x384xbf16>
    %cst_24 = arith.constant dense<0.000000e+00> : vector<2x384xf32>
    %81 = tpu.matmul %79, %80, %cst_24 {dimension_numbers = #tpu.dot_dimension_numbers<[1], [0], [0], [1], [0, 0, 1, 1], [], []>} : vector<2x96xbf16>, vector<96x384xbf16>, vector<2x384xf32> -> vector<2x384xf32>
    %82 = arith.addf %78, %81 : vector<2x384xf32>
    %83 = arith.addf %82, %8 : vector<2x384xf32>
    %84 = vector.extract_strided_slice %83 {offsets = [0, 0], sizes = [2, 288], strides = [1, 1]} : vector<2x384xf32> to vector<2x288xf32>
    %85 = arith.negf %84 : vector<2x288xf32>
    %86 = math.exp %85 : vector<2x288xf32>
    %cst_25 = arith.constant 1.000000e+00 : f32
    %87 = vector.broadcast %cst_25 : f32 to vector<2x288xf32>
    %88 = arith.addf %87, %86 : vector<2x288xf32>
    %89 = arith.divf %87, %88 : vector<2x288xf32>
    %90 = vector.extract_strided_slice %83 {offsets = [0, 288], sizes = [2, 96], strides = [1, 1]} : vector<2x384xf32> to vector<2x96xf32>
    %91 = math.tanh %90 : vector<2x96xf32>
    %92 = vector.extract_strided_slice %89 {offsets = [0, 0], sizes = [2, 96], strides = [1, 1]} : vector<2x288xf32> to vector<2x96xf32>
    %93 = vector.extract_strided_slice %89 {offsets = [0, 96], sizes = [2, 96], strides = [1, 1]} : vector<2x288xf32> to vector<2x96xf32>
    %94 = vector.extract_strided_slice %89 {offsets = [0, 192], sizes = [2, 96], strides = [1, 1]} : vector<2x288xf32> to vector<2x96xf32>
    %95 = arith.mulf %93, %52 : vector<2x96xf32>
    %96 = arith.mulf %92, %91 : vector<2x96xf32>
    %97 = arith.addf %95, %96 : vector<2x96xf32>
    %98 = math.tanh %97 : vector<2x96xf32>
    %99 = arith.mulf %94, %98 : vector<2x96xf32>
    %100 = vector.extract_strided_slice %5 {offsets = [4, 0], sizes = [2, 384], strides = [1, 1]} : vector<16x384xf32> to vector<2x384xf32>
    %101 = arith.truncf %75 : vector<2x96xf32> to vector<2x96xbf16>
    %c16_26 = arith.constant 16 : index
    %c0_27 = arith.constant 0 : index
    %102 = vector.load %arg1[%c16_26, %c0_27] : memref<304x384xbf16, #tpu.memory_space<vmem>>, vector<96x384xbf16>
    %cst_28 = arith.constant dense<0.000000e+00> : vector<2x384xf32>
    %103 = tpu.matmul %101, %102, %cst_28 {dimension_numbers = #tpu.dot_dimension_numbers<[1], [0], [0], [1], [0, 0, 1, 1], [], []>} : vector<2x96xbf16>, vector<96x384xbf16>, vector<2x384xf32> -> vector<2x384xf32>
    %104 = arith.addf %100, %103 : vector<2x384xf32>
    %105 = vector.extract_strided_slice %104 {offsets = [0, 0], sizes = [2, 288], strides = [1, 1]} : vector<2x384xf32> to vector<2x288xf32>
    %106 = arith.negf %105 : vector<2x288xf32>
    %107 = math.exp %106 : vector<2x288xf32>
    %cst_29 = arith.constant 1.000000e+00 : f32
    %108 = vector.broadcast %cst_29 : f32 to vector<2x288xf32>
    %109 = arith.addf %108, %107 : vector<2x288xf32>
    %110 = arith.divf %108, %109 : vector<2x288xf32>
    %111 = vector.extract_strided_slice %104 {offsets = [0, 288], sizes = [2, 96], strides = [1, 1]} : vector<2x384xf32> to vector<2x96xf32>
    %112 = math.tanh %111 : vector<2x96xf32>
    %113 = vector.extract_strided_slice %110 {offsets = [0, 0], sizes = [2, 96], strides = [1, 1]} : vector<2x288xf32> to vector<2x96xf32>
    %114 = vector.extract_strided_slice %110 {offsets = [0, 96], sizes = [2, 96], strides = [1, 1]} : vector<2x288xf32> to vector<2x96xf32>
    %115 = vector.extract_strided_slice %110 {offsets = [0, 192], sizes = [2, 96], strides = [1, 1]} : vector<2x288xf32> to vector<2x96xf32>
    %116 = arith.mulf %114, %73 : vector<2x96xf32>
    %117 = arith.mulf %113, %112 : vector<2x96xf32>
    %118 = arith.addf %116, %117 : vector<2x96xf32>
    %119 = math.tanh %118 : vector<2x96xf32>
    %120 = arith.mulf %115, %119 : vector<2x96xf32>
    %121 = arith.truncf %120 : vector<2x96xf32> to vector<2x96xbf16>
    %c112_30 = arith.constant 112 : index
    %c0_31 = arith.constant 0 : index
    %122 = vector.load %arg1[%c112_30, %c0_31] : memref<304x384xbf16, #tpu.memory_space<vmem>>, vector<96x384xbf16>
    %cst_32 = arith.constant dense<0.000000e+00> : vector<2x384xf32>
    %123 = tpu.matmul %121, %122, %cst_32 {dimension_numbers = #tpu.dot_dimension_numbers<[1], [0], [0], [1], [0, 0, 1, 1], [], []>} : vector<2x96xbf16>, vector<96x384xbf16>, vector<2x384xf32> -> vector<2x384xf32>
    %124 = arith.truncf %99 : vector<2x96xf32> to vector<2x96xbf16>
    %c208_33 = arith.constant 208 : index
    %c0_34 = arith.constant 0 : index
    %125 = vector.load %arg1[%c208_33, %c0_34] : memref<304x384xbf16, #tpu.memory_space<vmem>>, vector<96x384xbf16>
    %cst_35 = arith.constant dense<0.000000e+00> : vector<2x384xf32>
    %126 = tpu.matmul %124, %125, %cst_35 {dimension_numbers = #tpu.dot_dimension_numbers<[1], [0], [0], [1], [0, 0, 1, 1], [], []>} : vector<2x96xbf16>, vector<96x384xbf16>, vector<2x384xf32> -> vector<2x384xf32>
    %127 = arith.addf %123, %126 : vector<2x384xf32>
    %128 = arith.addf %127, %8 : vector<2x384xf32>
    %129 = vector.extract_strided_slice %128 {offsets = [0, 0], sizes = [2, 288], strides = [1, 1]} : vector<2x384xf32> to vector<2x288xf32>
    %130 = arith.negf %129 : vector<2x288xf32>
    %131 = math.exp %130 : vector<2x288xf32>
    %cst_36 = arith.constant 1.000000e+00 : f32
    %132 = vector.broadcast %cst_36 : f32 to vector<2x288xf32>
    %133 = arith.addf %132, %131 : vector<2x288xf32>
    %134 = arith.divf %132, %133 : vector<2x288xf32>
    %135 = vector.extract_strided_slice %128 {offsets = [0, 288], sizes = [2, 96], strides = [1, 1]} : vector<2x384xf32> to vector<2x96xf32>
    %136 = math.tanh %135 : vector<2x96xf32>
    %137 = vector.extract_strided_slice %134 {offsets = [0, 0], sizes = [2, 96], strides = [1, 1]} : vector<2x288xf32> to vector<2x96xf32>
    %138 = vector.extract_strided_slice %134 {offsets = [0, 96], sizes = [2, 96], strides = [1, 1]} : vector<2x288xf32> to vector<2x96xf32>
    %139 = vector.extract_strided_slice %134 {offsets = [0, 192], sizes = [2, 96], strides = [1, 1]} : vector<2x288xf32> to vector<2x96xf32>
    %140 = arith.mulf %138, %97 : vector<2x96xf32>
    %141 = arith.mulf %137, %136 : vector<2x96xf32>
    %142 = arith.addf %140, %141 : vector<2x96xf32>
    %143 = math.tanh %142 : vector<2x96xf32>
    %144 = arith.mulf %139, %143 : vector<2x96xf32>
    %145 = vector.extract_strided_slice %5 {offsets = [6, 0], sizes = [2, 384], strides = [1, 1]} : vector<16x384xf32> to vector<2x384xf32>
    %146 = arith.truncf %120 : vector<2x96xf32> to vector<2x96xbf16>
    %c16_37 = arith.constant 16 : index
    %c0_38 = arith.constant 0 : index
    %147 = vector.load %arg1[%c16_37, %c0_38] : memref<304x384xbf16, #tpu.memory_space<vmem>>, vector<96x384xbf16>
    %cst_39 = arith.constant dense<0.000000e+00> : vector<2x384xf32>
    %148 = tpu.matmul %146, %147, %cst_39 {dimension_numbers = #tpu.dot_dimension_numbers<[1], [0], [0], [1], [0, 0, 1, 1], [], []>} : vector<2x96xbf16>, vector<96x384xbf16>, vector<2x384xf32> -> vector<2x384xf32>
    %149 = arith.addf %145, %148 : vector<2x384xf32>
    %150 = vector.extract_strided_slice %149 {offsets = [0, 0], sizes = [2, 288], strides = [1, 1]} : vector<2x384xf32> to vector<2x288xf32>
    %151 = arith.negf %150 : vector<2x288xf32>
    %152 = math.exp %151 : vector<2x288xf32>
    %cst_40 = arith.constant 1.000000e+00 : f32
    %153 = vector.broadcast %cst_40 : f32 to vector<2x288xf32>
    %154 = arith.addf %153, %152 : vector<2x288xf32>
    %155 = arith.divf %153, %154 : vector<2x288xf32>
    %156 = vector.extract_strided_slice %149 {offsets = [0, 288], sizes = [2, 96], strides = [1, 1]} : vector<2x384xf32> to vector<2x96xf32>
    %157 = math.tanh %156 : vector<2x96xf32>
    %158 = vector.extract_strided_slice %155 {offsets = [0, 0], sizes = [2, 96], strides = [1, 1]} : vector<2x288xf32> to vector<2x96xf32>
    %159 = vector.extract_strided_slice %155 {offsets = [0, 96], sizes = [2, 96], strides = [1, 1]} : vector<2x288xf32> to vector<2x96xf32>
    %160 = vector.extract_strided_slice %155 {offsets = [0, 192], sizes = [2, 96], strides = [1, 1]} : vector<2x288xf32> to vector<2x96xf32>
    %161 = arith.mulf %159, %118 : vector<2x96xf32>
    %162 = arith.mulf %158, %157 : vector<2x96xf32>
    %163 = arith.addf %161, %162 : vector<2x96xf32>
    %164 = math.tanh %163 : vector<2x96xf32>
    %165 = arith.mulf %160, %164 : vector<2x96xf32>
    %166 = arith.truncf %165 : vector<2x96xf32> to vector<2x96xbf16>
    %c112_41 = arith.constant 112 : index
    %c0_42 = arith.constant 0 : index
    %167 = vector.load %arg1[%c112_41, %c0_42] : memref<304x384xbf16, #tpu.memory_space<vmem>>, vector<96x384xbf16>
    %cst_43 = arith.constant dense<0.000000e+00> : vector<2x384xf32>
    %168 = tpu.matmul %166, %167, %cst_43 {dimension_numbers = #tpu.dot_dimension_numbers<[1], [0], [0], [1], [0, 0, 1, 1], [], []>} : vector<2x96xbf16>, vector<96x384xbf16>, vector<2x384xf32> -> vector<2x384xf32>
    %169 = arith.truncf %144 : vector<2x96xf32> to vector<2x96xbf16>
    %c208_44 = arith.constant 208 : index
    %c0_45 = arith.constant 0 : index
    %170 = vector.load %arg1[%c208_44, %c0_45] : memref<304x384xbf16, #tpu.memory_space<vmem>>, vector<96x384xbf16>
    %cst_46 = arith.constant dense<0.000000e+00> : vector<2x384xf32>
    %171 = tpu.matmul %169, %170, %cst_46 {dimension_numbers = #tpu.dot_dimension_numbers<[1], [0], [0], [1], [0, 0, 1, 1], [], []>} : vector<2x96xbf16>, vector<96x384xbf16>, vector<2x384xf32> -> vector<2x384xf32>
    %172 = arith.addf %168, %171 : vector<2x384xf32>
    %173 = arith.addf %172, %8 : vector<2x384xf32>
    %174 = vector.extract_strided_slice %173 {offsets = [0, 0], sizes = [2, 288], strides = [1, 1]} : vector<2x384xf32> to vector<2x288xf32>
    %175 = arith.negf %174 : vector<2x288xf32>
    %176 = math.exp %175 : vector<2x288xf32>
    %cst_47 = arith.constant 1.000000e+00 : f32
    %177 = vector.broadcast %cst_47 : f32 to vector<2x288xf32>
    %178 = arith.addf %177, %176 : vector<2x288xf32>
    %179 = arith.divf %177, %178 : vector<2x288xf32>
    %180 = vector.extract_strided_slice %173 {offsets = [0, 288], sizes = [2, 96], strides = [1, 1]} : vector<2x384xf32> to vector<2x96xf32>
    %181 = math.tanh %180 : vector<2x96xf32>
    %182 = vector.extract_strided_slice %179 {offsets = [0, 0], sizes = [2, 96], strides = [1, 1]} : vector<2x288xf32> to vector<2x96xf32>
    %183 = vector.extract_strided_slice %179 {offsets = [0, 96], sizes = [2, 96], strides = [1, 1]} : vector<2x288xf32> to vector<2x96xf32>
    %184 = vector.extract_strided_slice %179 {offsets = [0, 192], sizes = [2, 96], strides = [1, 1]} : vector<2x288xf32> to vector<2x96xf32>
    %185 = arith.mulf %183, %142 : vector<2x96xf32>
    %186 = arith.mulf %182, %181 : vector<2x96xf32>
    %187 = arith.addf %185, %186 : vector<2x96xf32>
    %188 = math.tanh %187 : vector<2x96xf32>
    %189 = arith.mulf %184, %188 : vector<2x96xf32>
    %190 = vector.extract_strided_slice %5 {offsets = [8, 0], sizes = [2, 384], strides = [1, 1]} : vector<16x384xf32> to vector<2x384xf32>
    %191 = arith.truncf %165 : vector<2x96xf32> to vector<2x96xbf16>
    %c16_48 = arith.constant 16 : index
    %c0_49 = arith.constant 0 : index
    %192 = vector.load %arg1[%c16_48, %c0_49] : memref<304x384xbf16, #tpu.memory_space<vmem>>, vector<96x384xbf16>
    %cst_50 = arith.constant dense<0.000000e+00> : vector<2x384xf32>
    %193 = tpu.matmul %191, %192, %cst_50 {dimension_numbers = #tpu.dot_dimension_numbers<[1], [0], [0], [1], [0, 0, 1, 1], [], []>} : vector<2x96xbf16>, vector<96x384xbf16>, vector<2x384xf32> -> vector<2x384xf32>
    %194 = arith.addf %190, %193 : vector<2x384xf32>
    %195 = vector.extract_strided_slice %194 {offsets = [0, 0], sizes = [2, 288], strides = [1, 1]} : vector<2x384xf32> to vector<2x288xf32>
    %196 = arith.negf %195 : vector<2x288xf32>
    %197 = math.exp %196 : vector<2x288xf32>
    %cst_51 = arith.constant 1.000000e+00 : f32
    %198 = vector.broadcast %cst_51 : f32 to vector<2x288xf32>
    %199 = arith.addf %198, %197 : vector<2x288xf32>
    %200 = arith.divf %198, %199 : vector<2x288xf32>
    %201 = vector.extract_strided_slice %194 {offsets = [0, 288], sizes = [2, 96], strides = [1, 1]} : vector<2x384xf32> to vector<2x96xf32>
    %202 = math.tanh %201 : vector<2x96xf32>
    %203 = vector.extract_strided_slice %200 {offsets = [0, 0], sizes = [2, 96], strides = [1, 1]} : vector<2x288xf32> to vector<2x96xf32>
    %204 = vector.extract_strided_slice %200 {offsets = [0, 96], sizes = [2, 96], strides = [1, 1]} : vector<2x288xf32> to vector<2x96xf32>
    %205 = vector.extract_strided_slice %200 {offsets = [0, 192], sizes = [2, 96], strides = [1, 1]} : vector<2x288xf32> to vector<2x96xf32>
    %206 = arith.mulf %204, %163 : vector<2x96xf32>
    %207 = arith.mulf %203, %202 : vector<2x96xf32>
    %208 = arith.addf %206, %207 : vector<2x96xf32>
    %209 = math.tanh %208 : vector<2x96xf32>
    %210 = arith.mulf %205, %209 : vector<2x96xf32>
    %211 = arith.truncf %210 : vector<2x96xf32> to vector<2x96xbf16>
    %c112_52 = arith.constant 112 : index
    %c0_53 = arith.constant 0 : index
    %212 = vector.load %arg1[%c112_52, %c0_53] : memref<304x384xbf16, #tpu.memory_space<vmem>>, vector<96x384xbf16>
    %cst_54 = arith.constant dense<0.000000e+00> : vector<2x384xf32>
    %213 = tpu.matmul %211, %212, %cst_54 {dimension_numbers = #tpu.dot_dimension_numbers<[1], [0], [0], [1], [0, 0, 1, 1], [], []>} : vector<2x96xbf16>, vector<96x384xbf16>, vector<2x384xf32> -> vector<2x384xf32>
    %214 = arith.truncf %189 : vector<2x96xf32> to vector<2x96xbf16>
    %c208_55 = arith.constant 208 : index
    %c0_56 = arith.constant 0 : index
    %215 = vector.load %arg1[%c208_55, %c0_56] : memref<304x384xbf16, #tpu.memory_space<vmem>>, vector<96x384xbf16>
    %cst_57 = arith.constant dense<0.000000e+00> : vector<2x384xf32>
    %216 = tpu.matmul %214, %215, %cst_57 {dimension_numbers = #tpu.dot_dimension_numbers<[1], [0], [0], [1], [0, 0, 1, 1], [], []>} : vector<2x96xbf16>, vector<96x384xbf16>, vector<2x384xf32> -> vector<2x384xf32>
    %217 = arith.addf %213, %216 : vector<2x384xf32>
    %218 = arith.addf %217, %8 : vector<2x384xf32>
    %219 = vector.extract_strided_slice %218 {offsets = [0, 0], sizes = [2, 288], strides = [1, 1]} : vector<2x384xf32> to vector<2x288xf32>
    %220 = arith.negf %219 : vector<2x288xf32>
    %221 = math.exp %220 : vector<2x288xf32>
    %cst_58 = arith.constant 1.000000e+00 : f32
    %222 = vector.broadcast %cst_58 : f32 to vector<2x288xf32>
    %223 = arith.addf %222, %221 : vector<2x288xf32>
    %224 = arith.divf %222, %223 : vector<2x288xf32>
    %225 = vector.extract_strided_slice %218 {offsets = [0, 288], sizes = [2, 96], strides = [1, 1]} : vector<2x384xf32> to vector<2x96xf32>
    %226 = math.tanh %225 : vector<2x96xf32>
    %227 = vector.extract_strided_slice %224 {offsets = [0, 0], sizes = [2, 96], strides = [1, 1]} : vector<2x288xf32> to vector<2x96xf32>
    %228 = vector.extract_strided_slice %224 {offsets = [0, 96], sizes = [2, 96], strides = [1, 1]} : vector<2x288xf32> to vector<2x96xf32>
    %229 = vector.extract_strided_slice %224 {offsets = [0, 192], sizes = [2, 96], strides = [1, 1]} : vector<2x288xf32> to vector<2x96xf32>
    %230 = arith.mulf %228, %187 : vector<2x96xf32>
    %231 = arith.mulf %227, %226 : vector<2x96xf32>
    %232 = arith.addf %230, %231 : vector<2x96xf32>
    %233 = math.tanh %232 : vector<2x96xf32>
    %234 = arith.mulf %229, %233 : vector<2x96xf32>
    %235 = vector.extract_strided_slice %5 {offsets = [10, 0], sizes = [2, 384], strides = [1, 1]} : vector<16x384xf32> to vector<2x384xf32>
    %236 = arith.truncf %210 : vector<2x96xf32> to vector<2x96xbf16>
    %c16_59 = arith.constant 16 : index
    %c0_60 = arith.constant 0 : index
    %237 = vector.load %arg1[%c16_59, %c0_60] : memref<304x384xbf16, #tpu.memory_space<vmem>>, vector<96x384xbf16>
    %cst_61 = arith.constant dense<0.000000e+00> : vector<2x384xf32>
    %238 = tpu.matmul %236, %237, %cst_61 {dimension_numbers = #tpu.dot_dimension_numbers<[1], [0], [0], [1], [0, 0, 1, 1], [], []>} : vector<2x96xbf16>, vector<96x384xbf16>, vector<2x384xf32> -> vector<2x384xf32>
    %239 = arith.addf %235, %238 : vector<2x384xf32>
    %240 = vector.extract_strided_slice %239 {offsets = [0, 0], sizes = [2, 288], strides = [1, 1]} : vector<2x384xf32> to vector<2x288xf32>
    %241 = arith.negf %240 : vector<2x288xf32>
    %242 = math.exp %241 : vector<2x288xf32>
    %cst_62 = arith.constant 1.000000e+00 : f32
    %243 = vector.broadcast %cst_62 : f32 to vector<2x288xf32>
    %244 = arith.addf %243, %242 : vector<2x288xf32>
    %245 = arith.divf %243, %244 : vector<2x288xf32>
    %246 = vector.extract_strided_slice %239 {offsets = [0, 288], sizes = [2, 96], strides = [1, 1]} : vector<2x384xf32> to vector<2x96xf32>
    %247 = math.tanh %246 : vector<2x96xf32>
    %248 = vector.extract_strided_slice %245 {offsets = [0, 0], sizes = [2, 96], strides = [1, 1]} : vector<2x288xf32> to vector<2x96xf32>
    %249 = vector.extract_strided_slice %245 {offsets = [0, 96], sizes = [2, 96], strides = [1, 1]} : vector<2x288xf32> to vector<2x96xf32>
    %250 = vector.extract_strided_slice %245 {offsets = [0, 192], sizes = [2, 96], strides = [1, 1]} : vector<2x288xf32> to vector<2x96xf32>
    %251 = arith.mulf %249, %208 : vector<2x96xf32>
    %252 = arith.mulf %248, %247 : vector<2x96xf32>
    %253 = arith.addf %251, %252 : vector<2x96xf32>
    %254 = math.tanh %253 : vector<2x96xf32>
    %255 = arith.mulf %250, %254 : vector<2x96xf32>
    %256 = arith.truncf %255 : vector<2x96xf32> to vector<2x96xbf16>
    %c112_63 = arith.constant 112 : index
    %c0_64 = arith.constant 0 : index
    %257 = vector.load %arg1[%c112_63, %c0_64] : memref<304x384xbf16, #tpu.memory_space<vmem>>, vector<96x384xbf16>
    %cst_65 = arith.constant dense<0.000000e+00> : vector<2x384xf32>
    %258 = tpu.matmul %256, %257, %cst_65 {dimension_numbers = #tpu.dot_dimension_numbers<[1], [0], [0], [1], [0, 0, 1, 1], [], []>} : vector<2x96xbf16>, vector<96x384xbf16>, vector<2x384xf32> -> vector<2x384xf32>
    %259 = arith.truncf %234 : vector<2x96xf32> to vector<2x96xbf16>
    %c208_66 = arith.constant 208 : index
    %c0_67 = arith.constant 0 : index
    %260 = vector.load %arg1[%c208_66, %c0_67] : memref<304x384xbf16, #tpu.memory_space<vmem>>, vector<96x384xbf16>
    %cst_68 = arith.constant dense<0.000000e+00> : vector<2x384xf32>
    %261 = tpu.matmul %259, %260, %cst_68 {dimension_numbers = #tpu.dot_dimension_numbers<[1], [0], [0], [1], [0, 0, 1, 1], [], []>} : vector<2x96xbf16>, vector<96x384xbf16>, vector<2x384xf32> -> vector<2x384xf32>
    %262 = arith.addf %258, %261 : vector<2x384xf32>
    %263 = arith.addf %262, %8 : vector<2x384xf32>
    %264 = vector.extract_strided_slice %263 {offsets = [0, 0], sizes = [2, 288], strides = [1, 1]} : vector<2x384xf32> to vector<2x288xf32>
    %265 = arith.negf %264 : vector<2x288xf32>
    %266 = math.exp %265 : vector<2x288xf32>
    %cst_69 = arith.constant 1.000000e+00 : f32
    %267 = vector.broadcast %cst_69 : f32 to vector<2x288xf32>
    %268 = arith.addf %267, %266 : vector<2x288xf32>
    %269 = arith.divf %267, %268 : vector<2x288xf32>
    %270 = vector.extract_strided_slice %263 {offsets = [0, 288], sizes = [2, 96], strides = [1, 1]} : vector<2x384xf32> to vector<2x96xf32>
    %271 = math.tanh %270 : vector<2x96xf32>
    %272 = vector.extract_strided_slice %269 {offsets = [0, 0], sizes = [2, 96], strides = [1, 1]} : vector<2x288xf32> to vector<2x96xf32>
    %273 = vector.extract_strided_slice %269 {offsets = [0, 96], sizes = [2, 96], strides = [1, 1]} : vector<2x288xf32> to vector<2x96xf32>
    %274 = vector.extract_strided_slice %269 {offsets = [0, 192], sizes = [2, 96], strides = [1, 1]} : vector<2x288xf32> to vector<2x96xf32>
    %275 = arith.mulf %273, %232 : vector<2x96xf32>
    %276 = arith.mulf %272, %271 : vector<2x96xf32>
    %277 = arith.addf %275, %276 : vector<2x96xf32>
    %278 = math.tanh %277 : vector<2x96xf32>
    %279 = arith.mulf %274, %278 : vector<2x96xf32>
    %280 = vector.extract_strided_slice %5 {offsets = [12, 0], sizes = [2, 384], strides = [1, 1]} : vector<16x384xf32> to vector<2x384xf32>
    %281 = arith.truncf %255 : vector<2x96xf32> to vector<2x96xbf16>
    %c16_70 = arith.constant 16 : index
    %c0_71 = arith.constant 0 : index
    %282 = vector.load %arg1[%c16_70, %c0_71] : memref<304x384xbf16, #tpu.memory_space<vmem>>, vector<96x384xbf16>
    %cst_72 = arith.constant dense<0.000000e+00> : vector<2x384xf32>
    %283 = tpu.matmul %281, %282, %cst_72 {dimension_numbers = #tpu.dot_dimension_numbers<[1], [0], [0], [1], [0, 0, 1, 1], [], []>} : vector<2x96xbf16>, vector<96x384xbf16>, vector<2x384xf32> -> vector<2x384xf32>
    %284 = arith.addf %280, %283 : vector<2x384xf32>
    %285 = vector.extract_strided_slice %284 {offsets = [0, 0], sizes = [2, 288], strides = [1, 1]} : vector<2x384xf32> to vector<2x288xf32>
    %286 = arith.negf %285 : vector<2x288xf32>
    %287 = math.exp %286 : vector<2x288xf32>
    %cst_73 = arith.constant 1.000000e+00 : f32
    %288 = vector.broadcast %cst_73 : f32 to vector<2x288xf32>
    %289 = arith.addf %288, %287 : vector<2x288xf32>
    %290 = arith.divf %288, %289 : vector<2x288xf32>
    %291 = vector.extract_strided_slice %284 {offsets = [0, 288], sizes = [2, 96], strides = [1, 1]} : vector<2x384xf32> to vector<2x96xf32>
    %292 = math.tanh %291 : vector<2x96xf32>
    %293 = vector.extract_strided_slice %290 {offsets = [0, 0], sizes = [2, 96], strides = [1, 1]} : vector<2x288xf32> to vector<2x96xf32>
    %294 = vector.extract_strided_slice %290 {offsets = [0, 96], sizes = [2, 96], strides = [1, 1]} : vector<2x288xf32> to vector<2x96xf32>
    %295 = vector.extract_strided_slice %290 {offsets = [0, 192], sizes = [2, 96], strides = [1, 1]} : vector<2x288xf32> to vector<2x96xf32>
    %296 = arith.mulf %294, %253 : vector<2x96xf32>
    %297 = arith.mulf %293, %292 : vector<2x96xf32>
    %298 = arith.addf %296, %297 : vector<2x96xf32>
    %299 = math.tanh %298 : vector<2x96xf32>
    %300 = arith.mulf %295, %299 : vector<2x96xf32>
    %301 = arith.truncf %300 : vector<2x96xf32> to vector<2x96xbf16>
    %c112_74 = arith.constant 112 : index
    %c0_75 = arith.constant 0 : index
    %302 = vector.load %arg1[%c112_74, %c0_75] : memref<304x384xbf16, #tpu.memory_space<vmem>>, vector<96x384xbf16>
    %cst_76 = arith.constant dense<0.000000e+00> : vector<2x384xf32>
    %303 = tpu.matmul %301, %302, %cst_76 {dimension_numbers = #tpu.dot_dimension_numbers<[1], [0], [0], [1], [0, 0, 1, 1], [], []>} : vector<2x96xbf16>, vector<96x384xbf16>, vector<2x384xf32> -> vector<2x384xf32>
    %304 = arith.truncf %279 : vector<2x96xf32> to vector<2x96xbf16>
    %c208_77 = arith.constant 208 : index
    %c0_78 = arith.constant 0 : index
    %305 = vector.load %arg1[%c208_77, %c0_78] : memref<304x384xbf16, #tpu.memory_space<vmem>>, vector<96x384xbf16>
    %cst_79 = arith.constant dense<0.000000e+00> : vector<2x384xf32>
    %306 = tpu.matmul %304, %305, %cst_79 {dimension_numbers = #tpu.dot_dimension_numbers<[1], [0], [0], [1], [0, 0, 1, 1], [], []>} : vector<2x96xbf16>, vector<96x384xbf16>, vector<2x384xf32> -> vector<2x384xf32>
    %307 = arith.addf %303, %306 : vector<2x384xf32>
    %308 = arith.addf %307, %8 : vector<2x384xf32>
    %309 = vector.extract_strided_slice %308 {offsets = [0, 0], sizes = [2, 288], strides = [1, 1]} : vector<2x384xf32> to vector<2x288xf32>
    %310 = arith.negf %309 : vector<2x288xf32>
    %311 = math.exp %310 : vector<2x288xf32>
    %cst_80 = arith.constant 1.000000e+00 : f32
    %312 = vector.broadcast %cst_80 : f32 to vector<2x288xf32>
    %313 = arith.addf %312, %311 : vector<2x288xf32>
    %314 = arith.divf %312, %313 : vector<2x288xf32>
    %315 = vector.extract_strided_slice %308 {offsets = [0, 288], sizes = [2, 96], strides = [1, 1]} : vector<2x384xf32> to vector<2x96xf32>
    %316 = math.tanh %315 : vector<2x96xf32>
    %317 = vector.extract_strided_slice %314 {offsets = [0, 0], sizes = [2, 96], strides = [1, 1]} : vector<2x288xf32> to vector<2x96xf32>
    %318 = vector.extract_strided_slice %314 {offsets = [0, 96], sizes = [2, 96], strides = [1, 1]} : vector<2x288xf32> to vector<2x96xf32>
    %319 = vector.extract_strided_slice %314 {offsets = [0, 192], sizes = [2, 96], strides = [1, 1]} : vector<2x288xf32> to vector<2x96xf32>
    %320 = arith.mulf %318, %277 : vector<2x96xf32>
    %321 = arith.mulf %317, %316 : vector<2x96xf32>
    %322 = arith.addf %320, %321 : vector<2x96xf32>
    %323 = math.tanh %322 : vector<2x96xf32>
    %324 = arith.mulf %319, %323 : vector<2x96xf32>
    %325 = vector.extract_strided_slice %5 {offsets = [14, 0], sizes = [2, 384], strides = [1, 1]} : vector<16x384xf32> to vector<2x384xf32>
    %326 = arith.truncf %300 : vector<2x96xf32> to vector<2x96xbf16>
    %c16_81 = arith.constant 16 : index
    %c0_82 = arith.constant 0 : index
    %327 = vector.load %arg1[%c16_81, %c0_82] : memref<304x384xbf16, #tpu.memory_space<vmem>>, vector<96x384xbf16>
    %cst_83 = arith.constant dense<0.000000e+00> : vector<2x384xf32>
    %328 = tpu.matmul %326, %327, %cst_83 {dimension_numbers = #tpu.dot_dimension_numbers<[1], [0], [0], [1], [0, 0, 1, 1], [], []>} : vector<2x96xbf16>, vector<96x384xbf16>, vector<2x384xf32> -> vector<2x384xf32>
    %329 = arith.addf %325, %328 : vector<2x384xf32>
    %330 = vector.extract_strided_slice %329 {offsets = [0, 0], sizes = [2, 288], strides = [1, 1]} : vector<2x384xf32> to vector<2x288xf32>
    %331 = arith.negf %330 : vector<2x288xf32>
    %332 = math.exp %331 : vector<2x288xf32>
    %cst_84 = arith.constant 1.000000e+00 : f32
    %333 = vector.broadcast %cst_84 : f32 to vector<2x288xf32>
    %334 = arith.addf %333, %332 : vector<2x288xf32>
    %335 = arith.divf %333, %334 : vector<2x288xf32>
    %336 = vector.extract_strided_slice %329 {offsets = [0, 288], sizes = [2, 96], strides = [1, 1]} : vector<2x384xf32> to vector<2x96xf32>
    %337 = math.tanh %336 : vector<2x96xf32>
    %338 = vector.extract_strided_slice %335 {offsets = [0, 0], sizes = [2, 96], strides = [1, 1]} : vector<2x288xf32> to vector<2x96xf32>
    %339 = vector.extract_strided_slice %335 {offsets = [0, 96], sizes = [2, 96], strides = [1, 1]} : vector<2x288xf32> to vector<2x96xf32>
    %340 = vector.extract_strided_slice %335 {offsets = [0, 192], sizes = [2, 96], strides = [1, 1]} : vector<2x288xf32> to vector<2x96xf32>
    %341 = arith.mulf %339, %298 : vector<2x96xf32>
    %342 = arith.mulf %338, %337 : vector<2x96xf32>
    %343 = arith.addf %341, %342 : vector<2x96xf32>
    %344 = math.tanh %343 : vector<2x96xf32>
    %345 = arith.mulf %340, %344 : vector<2x96xf32>
    %346 = arith.truncf %345 : vector<2x96xf32> to vector<2x96xbf16>
    %c112_85 = arith.constant 112 : index
    %c0_86 = arith.constant 0 : index
    %347 = vector.load %arg1[%c112_85, %c0_86] : memref<304x384xbf16, #tpu.memory_space<vmem>>, vector<96x384xbf16>
    %cst_87 = arith.constant dense<0.000000e+00> : vector<2x384xf32>
    %348 = tpu.matmul %346, %347, %cst_87 {dimension_numbers = #tpu.dot_dimension_numbers<[1], [0], [0], [1], [0, 0, 1, 1], [], []>} : vector<2x96xbf16>, vector<96x384xbf16>, vector<2x384xf32> -> vector<2x384xf32>
    %349 = arith.truncf %324 : vector<2x96xf32> to vector<2x96xbf16>
    %c208_88 = arith.constant 208 : index
    %c0_89 = arith.constant 0 : index
    %350 = vector.load %arg1[%c208_88, %c0_89] : memref<304x384xbf16, #tpu.memory_space<vmem>>, vector<96x384xbf16>
    %cst_90 = arith.constant dense<0.000000e+00> : vector<2x384xf32>
    %351 = tpu.matmul %349, %350, %cst_90 {dimension_numbers = #tpu.dot_dimension_numbers<[1], [0], [0], [1], [0, 0, 1, 1], [], []>} : vector<2x96xbf16>, vector<96x384xbf16>, vector<2x384xf32> -> vector<2x384xf32>
    %352 = arith.addf %348, %351 : vector<2x384xf32>
    %353 = arith.addf %352, %8 : vector<2x384xf32>
    %354 = vector.extract_strided_slice %353 {offsets = [0, 0], sizes = [2, 288], strides = [1, 1]} : vector<2x384xf32> to vector<2x288xf32>
    %355 = arith.negf %354 : vector<2x288xf32>
    %356 = math.exp %355 : vector<2x288xf32>
    %cst_91 = arith.constant 1.000000e+00 : f32
    %357 = vector.broadcast %cst_91 : f32 to vector<2x288xf32>
    %358 = arith.addf %357, %356 : vector<2x288xf32>
    %359 = arith.divf %357, %358 : vector<2x288xf32>
    %360 = vector.extract_strided_slice %353 {offsets = [0, 288], sizes = [2, 96], strides = [1, 1]} : vector<2x384xf32> to vector<2x96xf32>
    %361 = math.tanh %360 : vector<2x96xf32>
    %362 = vector.extract_strided_slice %359 {offsets = [0, 0], sizes = [2, 96], strides = [1, 1]} : vector<2x288xf32> to vector<2x96xf32>
    %363 = vector.extract_strided_slice %359 {offsets = [0, 96], sizes = [2, 96], strides = [1, 1]} : vector<2x288xf32> to vector<2x96xf32>
    %364 = vector.extract_strided_slice %359 {offsets = [0, 192], sizes = [2, 96], strides = [1, 1]} : vector<2x288xf32> to vector<2x96xf32>
    %365 = arith.mulf %363, %322 : vector<2x96xf32>
    %366 = arith.mulf %362, %361 : vector<2x96xf32>
    %367 = arith.addf %365, %366 : vector<2x96xf32>
    %368 = math.tanh %367 : vector<2x96xf32>
    %369 = arith.mulf %364, %368 : vector<2x96xf32>
    %370 = vector.shape_cast %54 : vector<2x96xf32> to vector<2x1x96xf32>
    %371 = vector.shape_cast %99 : vector<2x96xf32> to vector<2x1x96xf32>
    %372 = vector.shape_cast %144 : vector<2x96xf32> to vector<2x1x96xf32>
    %373 = vector.shape_cast %189 : vector<2x96xf32> to vector<2x1x96xf32>
    %374 = vector.shape_cast %234 : vector<2x96xf32> to vector<2x1x96xf32>
    %375 = vector.shape_cast %279 : vector<2x96xf32> to vector<2x1x96xf32>
    %376 = vector.shape_cast %324 : vector<2x96xf32> to vector<2x1x96xf32>
    %377 = vector.shape_cast %369 : vector<2x96xf32> to vector<2x1x96xf32>
    %378 = tpu.concatenate %370, %371, %372, %373, %374, %375, %376, %377 in 1 : vector<2x1x96xf32>, vector<2x1x96xf32>, vector<2x1x96xf32>, vector<2x1x96xf32>, vector<2x1x96xf32>, vector<2x1x96xf32>, vector<2x1x96xf32>, vector<2x1x96xf32> -> vector<2x8x96xf32>
    %379 = arith.truncf %378 : vector<2x8x96xf32> to vector<2x8x96xbf16>
    %380 = vector.extract_strided_slice %379 {offsets = [0, 0, 0], sizes = [2, 8, 32], strides = [1, 1, 1]} : vector<2x8x96xbf16> to vector<2x8x32xbf16>
    "tpu.trace_start"() <{level = 10 : i32, message = "bqh,bkh->bqk"}> : () -> ()
    %cst_92 = arith.constant dense<0.000000e+00> : vector<2x8x8xf32>
    %381 = tpu.matmul %380, %380, %cst_92 {dimension_numbers = #tpu.dot_dimension_numbers<[2], [2], [1], [1], [0, 0, 0, 1, 1, 1], [0], [0]>} : vector<2x8x32xbf16>, vector<2x8x32xbf16>, vector<2x8x8xf32> -> vector<2x8x8xf32>
    "tpu.trace_stop"() : () -> ()
    %c2 = arith.constant 2 : index
    %c0_93 = arith.constant 0 : index
    %382 = vector.load %arg2[%c2, %c0_93] : memref<8x384xf32, #tpu.memory_space<vmem>>, vector<1x32xf32>
    %383 = vector.extract_strided_slice %378 {offsets = [0, 0, 0], sizes = [2, 8, 32], strides = [1, 1, 1]} : vector<2x8x96xf32> to vector<2x8x32xf32>
    %384 = vector.shape_cast %382 : vector<1x32xf32> to vector<1x1x32xf32>
    %385 = vector.broadcast %384 : vector<1x1x32xf32> to vector<2x8x32xf32>
    %386 = arith.mulf %383, %385 : vector<2x8x32xf32>
    %cst_94 = arith.constant dense<0.000000e+00> : vector<2x8xf32>
    %387 = vector.multi_reduction <add>, %386, %cst_94 [2] : vector<2x8x32xf32> to vector<2x8xf32>
    %388 = vector.extract_strided_slice %379 {offsets = [0, 0, 32], sizes = [2, 8, 32], strides = [1, 1, 1]} : vector<2x8x96xbf16> to vector<2x8x32xbf16>
    "tpu.trace_start"() <{level = 10 : i32, message = "bqh,bkh->bqk"}> : () -> ()
    %cst_95 = arith.constant dense<0.000000e+00> : vector<2x8x8xf32>
    %389 = tpu.matmul %388, %388, %cst_95 {dimension_numbers = #tpu.dot_dimension_numbers<[2], [2], [1], [1], [0, 0, 0, 1, 1, 1], [0], [0]>} : vector<2x8x32xbf16>, vector<2x8x32xbf16>, vector<2x8x8xf32> -> vector<2x8x8xf32>
    "tpu.trace_stop"() : () -> ()
    %c3 = arith.constant 3 : index
    %c0_96 = arith.constant 0 : index
    %390 = vector.load %arg2[%c3, %c0_96] : memref<8x384xf32, #tpu.memory_space<vmem>>, vector<1x32xf32>
    %391 = vector.extract_strided_slice %378 {offsets = [0, 0, 32], sizes = [2, 8, 32], strides = [1, 1, 1]} : vector<2x8x96xf32> to vector<2x8x32xf32>
    %392 = vector.shape_cast %390 : vector<1x32xf32> to vector<1x1x32xf32>
    %393 = vector.broadcast %392 : vector<1x1x32xf32> to vector<2x8x32xf32>
    %394 = arith.mulf %391, %393 : vector<2x8x32xf32>
    %cst_97 = arith.constant dense<0.000000e+00> : vector<2x8xf32>
    %395 = vector.multi_reduction <add>, %394, %cst_97 [2] : vector<2x8x32xf32> to vector<2x8xf32>
    %396 = vector.extract_strided_slice %379 {offsets = [0, 0, 64], sizes = [2, 8, 32], strides = [1, 1, 1]} : vector<2x8x96xbf16> to vector<2x8x32xbf16>
    "tpu.trace_start"() <{level = 10 : i32, message = "bqh,bkh->bqk"}> : () -> ()
    %cst_98 = arith.constant dense<0.000000e+00> : vector<2x8x8xf32>
    %397 = tpu.matmul %396, %396, %cst_98 {dimension_numbers = #tpu.dot_dimension_numbers<[2], [2], [1], [1], [0, 0, 0, 1, 1, 1], [0], [0]>} : vector<2x8x32xbf16>, vector<2x8x32xbf16>, vector<2x8x8xf32> -> vector<2x8x8xf32>
    "tpu.trace_stop"() : () -> ()
    %c4 = arith.constant 4 : index
    %c0_99 = arith.constant 0 : index
    %398 = vector.load %arg2[%c4, %c0_99] : memref<8x384xf32, #tpu.memory_space<vmem>>, vector<1x32xf32>
    %399 = vector.extract_strided_slice %378 {offsets = [0, 0, 64], sizes = [2, 8, 32], strides = [1, 1, 1]} : vector<2x8x96xf32> to vector<2x8x32xf32>
    %400 = vector.shape_cast %398 : vector<1x32xf32> to vector<1x1x32xf32>
    %401 = vector.broadcast %400 : vector<1x1x32xf32> to vector<2x8x32xf32>
    %402 = arith.mulf %399, %401 : vector<2x8x32xf32>
    %cst_100 = arith.constant dense<0.000000e+00> : vector<2x8xf32>
    %403 = vector.multi_reduction <add>, %402, %cst_100 [2] : vector<2x8x32xf32> to vector<2x8xf32>
    %404 = tpu.concatenate %381, %389, %397 in 0 : vector<2x8x8xf32>, vector<2x8x8xf32>, vector<2x8x8xf32> -> vector<6x8x8xf32>
    %cst_101 = arith.constant 0.176776692 : f32
    %405 = vector.broadcast %cst_101 : f32 to vector<6x8x8xf32>
    %406 = arith.mulf %404, %405 : vector<6x8x8xf32>
    %cst_102 = arith.constant dense<0xFF800000> : vector<6x8xf32>
    %407 = vector.multi_reduction <maximumf>, %406, %cst_102 [2] : vector<6x8x8xf32> to vector<6x8xf32>
    %408 = vector.shape_cast %407 : vector<6x8xf32> to vector<6x8x1xf32>
    %409 = vector.broadcast %408 : vector<6x8x1xf32> to vector<6x8x8xf32>
    %410 = arith.subf %406, %409 : vector<6x8x8xf32>
    %411 = math.exp %410 : vector<6x8x8xf32>
    %cst_103 = arith.constant dense<0.000000e+00> : vector<6x8xf32>
    %412 = vector.multi_reduction <add>, %411, %cst_103 [2] : vector<6x8x8xf32> to vector<6x8xf32>
    %413 = vector.shape_cast %412 : vector<6x8xf32> to vector<6x8x1xf32>
    %414 = tpu.reciprocal %413 {approx = true} : vector<6x8x1xf32> -> vector<6x8x1xf32>
    %415 = vector.broadcast %414 : vector<6x8x1xf32> to vector<6x8x8xf32>
    %416 = arith.mulf %411, %415 : vector<6x8x8xf32>
    %cst_104 = arith.constant dense<0.000000e+00> : vector<6x8xf32>
    %417 = vector.multi_reduction <add>, %416, %cst_104 [1] : vector<6x8x8xf32> to vector<6x8xf32>
    %418 = tpu.concatenate %387, %395, %403 in 0 : vector<2x8xf32>, vector<2x8xf32>, vector<2x8xf32> -> vector<6x8xf32>
    %419 = arith.mulf %417, %418 : vector<6x8xf32>
    %cst_105 = arith.constant dense<0.000000e+00> : vector<6xf32>
    %420 = vector.multi_reduction <add>, %419, %cst_105 [1] : vector<6x8xf32> to vector<6xf32>
    %421 = vector.shape_cast %420 : vector<6xf32> to vector<6x1xf32>
    %422 = vector.extract_strided_slice %421 {offsets = [0, 0], sizes = [2, 1], strides = [1, 1]} : vector<6x1xf32> to vector<2x1xf32>
    %423 = vector.extract_strided_slice %421 {offsets = [2, 0], sizes = [2, 1], strides = [1, 1]} : vector<6x1xf32> to vector<2x1xf32>
    %424 = arith.addf %422, %423 : vector<2x1xf32>
    %425 = vector.extract_strided_slice %421 {offsets = [4, 0], sizes = [2, 1], strides = [1, 1]} : vector<6x1xf32> to vector<2x1xf32>
    %426 = arith.addf %424, %425 : vector<2x1xf32>
    %c5 = arith.constant 5 : index
    %c0_106 = arith.constant 0 : index
    %427 = vector.load %arg2[%c5, %c0_106] : memref<8x384xf32, #tpu.memory_space<vmem>>, vector<1x1xf32>
    %428 = vector.broadcast %427 : vector<1x1xf32> to vector<2x1xf32>
    %429 = arith.addf %426, %428 : vector<2x1xf32>
    %c0_107 = arith.constant 0 : index
    %c0_108 = arith.constant 0 : index
    %430 = vector.load %arg3[%c0_107, %c0_108] : memref<2x1xf32, #tpu.memory_space<vmem>>, vector<2x1xf32>
    tpu.vector_store %arg3[%c0_107, %c0_108], %429 {strides = array<i32>} : memref<2x1xf32, #tpu.memory_space<vmem>>, vector<2x1xf32>,
    return
  }
}

</mosaic_0001>

<llo_original>
// kernel: lstm_att_forward.1
$region0: #{lstm_att_forward.1}
  #allocation0 [shape = 'u32[]', space=smem, size = 0x4, offset = 0x4, fixed_abs, tag = 'smem constant byte address 0x4 - core index']
  #allocation1 [shape = 'u32[144,128]{1,0:T(1,128)}', space=vmem, size = 0x12000, scoped, tag = 'internal scratch']
  %s0 = inlined_call_operand.vmem [shape: bf16[16,16], index: 0, kind: input, shape index: {}]
  %s1 = inlined_call_operand.hbm [shape: bf16[304,384], index: 1, kind: input, shape index: {}]
  %s2 = inlined_call_operand.vmem [shape: f32[8,384], index: 2, kind: input, shape index: {}]
  %s3 = inlined_call_operand.vmem [shape: f32[2,1], index: 3, kind: output, shape index: {}]
  %s4 = sld [smem:[#allocation0]]
  $region26: #{lstm_att_forward.1} parent=0
    _
  %s6 = ssub.s32 1, %s4
  %s7 = scalar_select 0, %s6, %s4
  $region1: #{lstm_att_forward.1} parent=0
    #allocation2 [shape = 'u8[233472]{0}', space=vmem, size = 0x39000, scoped, tag = 'input window, operand 1, single buffered']
    #allocation3 [shape = 's32[1]{0}', space=sflag, size = 0x4, scoped, tag = 'scoped memory for lstm_att_forward.1']
    %8 = vsyncpa [#allocation3], 0
    // Predicated region
    $region2: #{lstm_att_forward.1} parent=1 // pred_check
      _
    $region3: #{lstm_att_forward.1} parent=1 // pred_check_branch
      %10 = sbr.rel (0) target = $region5
    $region4: #{lstm_att_forward.1} parent=1 // pred_region
      _
    $region5: #{lstm_att_forward.1} parent=1 // pred_fallthru
      _
    // Predicated region
    $region6: #{lstm_att_forward.1} parent=1 // pred_check
      _
    $region7: #{lstm_att_forward.1} parent=1 // pred_check_branch
      %12 = sbr.rel (0) target = $region9
    $region8: #{lstm_att_forward.1} parent=1 // pred_region
      %s14 = ssub.s32 7296, 7296
      %15 = vsyncadd [#allocation3], %s14
      %s16 = sshll.u32 [#allocation2], 4
      %s17 = int_to_ptr.vmem [resolvable:$true] %s16
      %22 = dma.hbm_to_vmem [thread:$0]  %s1, 7296, %s17, [#allocation3], 192, 192, 12
    $region9: #{lstm_att_forward.1} parent=1 // pred_fallthru
      _
    // Predicated region
    $region10: #{lstm_att_forward.1} parent=1 // pred_check
      _
    $region11: #{lstm_att_forward.1} parent=1 // pred_check_branch
      %24 = sbr.rel (0) target = $region13
    $region12: #{lstm_att_forward.1} parent=1 // pred_region
      _
    $region13: #{lstm_att_forward.1} parent=1 // pred_fallthru
      _
    // Predicated region
    $region14: #{lstm_att_forward.1} parent=1 // pred_check
      _
    $region15: #{lstm_att_forward.1} parent=1 // pred_check_branch
      %26 = sbr.rel (0) target = $region17
    $region16: #{lstm_att_forward.1} parent=1 // pred_region
      %27 = dma.done [#allocation3], 7296
    $region17: #{lstm_att_forward.1} parent=1 // pred_fallthru
      _
    %v29 = vld [vmem:[%s0] sm:$0xf]
    %v30 = vld [vmem:[%s0 + $0x4] sm:$0xf]
    %v31 = vld [vmem:[#allocation2] sm:$0xff]
    %v32 = vld [vmem:[#allocation2 + $0x8] sm:$0xf]
    %v33 = vld [vmem:[#allocation2 + $0xc] sm:$0xff]
    %v34 = vld [vmem:[#allocation2 + $0x14] sm:$0xf]
    %v35 = vld [vmem:[%s2] ss:$8 sm:$0x7]
    %v37 = vlaneseq
    %v38 = vshrl.u32 %v37, 7
    %v39 = vsub.s32 0, %v38
    %v40 = vrot.slane %v35, %v39
    %v41 = vlaneseq
    %v42 = vshrl.u32 %v41, 7
    %v43 = vsub.s32 1, %v42
    %v44 = vrot.slane %v35, %v43
    %v45 = vlaneseq
    %v46 = vshrl.u32 %v45, 7
    %v47 = vsub.s32 2, %v46
    %v48 = vrot.slane %v35, %v47
    %v54 = vunpack.c.l.b16 %v29
    %v55 = vunpack.c.l.b16 %v30
    %v56 = vpack.c.b16 %v55, %v54
    %v61 = vunpack.c.l.b16 %v31
    %v62 = vunpack.c.h.b16 %v31
    %v63 = vunpack.c.l.b16 %v32
    %v64 = vunpack.c.l.b16 %v33
    %v65 = vunpack.c.h.b16 %v33
    %v66 = vunpack.c.l.b16 %v34
    %v67 = vpack.c.b16 %v64, %v61
    %v68 = vpack.c.b16 %v65, %v62
    %v69 = vpack.c.b16 %v66, %v63
    %vm73 = vcmask 130048
    %v75 = vsel %vm73, %v56, 0
    %77 = vmatprep.subr.bf16.mxu0 0
    %78 = vmatpush1.bf16.msra.mxu0 0
    %79 = vmatprep.subr.bf16.mxu0 0
    %80 = vmatpush1.bf16.msra.mxu0 0
    %81 = vmatprep.subr.bf16.mxu0 0
    %82 = vmatpush1.bf16.msra.mxu0 0
    %83 = vmatprep.subr.bf16.mxu0 0
    %84 = vmatpush1.bf16.msra.mxu0 0
    %85 = vmatprep.subr.bf16.mxu0 0
    %86 = vmatpush1.bf16.msra.mxu0 0
    %87 = vmatprep.subr.bf16.mxu0 0
    %88 = vmatpush1.bf16.msra.mxu0 0
    %89 = vmatprep.subr.bf16.mxu0 0
    %90 = vmatpush1.bf16.msra.mxu0 0
    %91 = vmatprep.subr.bf16.mxu0 %v68
    %92 = vmatpush1.bf16.msra.mxu0 %v67
    %93 = vmatprep.subr.bf16.mxu0 0
    %94 = vmatpush2.bf16.msra.mxu0 0
    %95 = vmatprep.subr.bf16.mxu0 0
    %96 = vmatpush2.bf16.msra.mxu0 0
    %97 = vmatprep.subr.bf16.mxu0 0
    %98 = vmatpush2.bf16.msra.mxu0 0
    %99 = vmatprep.subr.bf16.mxu0 0
    %100 = vmatpush2.bf16.msra.mxu0 0
    %101 = vmatprep.subr.bf16.mxu0 0
    %102 = vmatpush2.bf16.msra.mxu0 0
    %103 = vmatprep.subr.bf16.mxu0 0
    %104 = vmatpush2.bf16.msra.mxu0 0
    %105 = vmatprep.subr.bf16.mxu0 0
    %106 = vmatpush2.bf16.msra.mxu0 0
    %107 = vmatprep.subr.bf16.mxu0 0
    %108 = vmatpush2.bf16.msra.mxu0 0
    %109 = vmatprep.mubr.bf16.mxu0 0
    %110 = vmatmul.mubr.bf16.gmra.mxu0 %v75
    %v111 = vpop.f32.mrf.mxu0
    %v112 = vadd.f32 %v40, %v111
    %v113 = vpop.f32.mrf.mxu0
    %v114 = vadd.f32 %v44, %v113
    %v115 = vpop.f32.mrf.mxu0
    %v116 = vadd.f32 %v40, %v115
    %v117 = vpop.f32.mrf.mxu0
    %v118 = vadd.f32 %v44, %v117
    %119 = vdwg.mxu0
    %120 = vmatprep.subr.bf16.mxu0 0
    %121 = vmatpush1.bf16.msra.mxu0 0
    %122 = vmatprep.subr.bf16.mxu0 0
    %123 = vmatpush1.bf16.msra.mxu0 0
    %124 = vmatprep.subr.bf16.mxu0 0
    %125 = vmatpush1.bf16.msra.mxu0 0
    %126 = vmatprep.subr.bf16.mxu0 0
    %127 = vmatpush1.bf16.msra.mxu0 0
    %128 = vmatprep.subr.bf16.mxu0 0
    %129 = vmatpush1.bf16.msra.mxu0 0
    %130 = vmatprep.subr.bf16.mxu0 0
    %131 = vmatpush1.bf16.msra.mxu0 0
    %132 = vmatprep.subr.bf16.mxu0 0
    %133 = vmatpush1.bf16.msra.mxu0 0
    %134 = vmatprep.subr.bf16.mxu0 0
    %135 = vmatpush1.bf16.msra.mxu0 %v69
    %136 = vmatprep.subr.bf16.mxu0 0
    %137 = vmatpush2.bf16.msra.mxu0 0
    %138 = vmatprep.subr.bf16.mxu0 0
    %139 = vmatpush2.bf16.msra.mxu0 0
    %140 = vmatprep.subr.bf16.mxu0 0
    %141 = vmatpush2.bf16.msra.mxu0 0
    %142 = vmatprep.subr.bf16.mxu0 0
    %143 = vmatpush2.bf16.msra.mxu0 0
    %144 = vmatprep.subr.bf16.mxu0 0
    %145 = vmatpush2.bf16.msra.mxu0 0
    %146 = vmatprep.subr.bf16.mxu0 0
    %147 = vmatpush2.bf16.msra.mxu0 0
    %148 = vmatprep.subr.bf16.mxu0 0
    %149 = vmatpush2.bf16.msra.mxu0 0
    %150 = vmatprep.subr.bf16.mxu0 0
    %151 = vmatpush2.bf16.msra.mxu0 0
    %152 = vmatprep.mubr.bf16.mxu0 0
    %153 = vmatmul.mubr.bf16.gmra.mxu0 %v75
    %v154 = vpop.f32.mrf.mxu0
    %v155 = vadd.f32 %v48, %v154
    %v156 = vpop.f32.mrf.mxu0
    %v157 = vpop.f32.mrf.mxu0
    %v158 = vadd.f32 %v48, %v157
    %v159 = vpop.f32.mrf.mxu0
    %160 = vdwg.mxu0
    %s161 = scalar_lea.vmem %s2, 1
    %v162 = vld [vmem:[%s161] ss:$8 sm:$0x7]
    %v164 = vlaneseq
    %v165 = vshrl.u32 %v164, 7
    %v166 = vsub.s32 0, %v165
    %v167 = vrot.slane %v162, %v166
    %v168 = vlaneseq
    %v169 = vshrl.u32 %v168, 7
    %v170 = vsub.s32 1, %v169
    %v171 = vrot.slane %v162, %v170
    %v172 = vlaneseq
    %v173 = vshrl.u32 %v172, 7
    %v174 = vsub.s32 2, %v173
    %v175 = vrot.slane %v162, %v174
    %v179 = vld [vmem:[#allocation2 + $0x18] sm:$0xff]
    %v180 = vld [vmem:[#allocation2 + $0x20] sm:$0xf]
    %v181 = vld [vmem:[#allocation2 + $0x24] sm:$0xff]
    %v182 = vld [vmem:[#allocation2 + $0x2c] sm:$0xf]
    %v183 = vld [vmem:[#allocation2 + $0x30] sm:$0xff]
    %v184 = vld [vmem:[#allocation2 + $0x38] sm:$0xf]
    %v185 = vld [vmem:[#allocation2 + $0x3c] sm:$0xff]
    %v186 = vld [vmem:[#allocation2 + $0x44] sm:$0xf]
    %v187 = vld [vmem:[#allocation2 + $0x48] sm:$0xff]
    %v188 = vld [vmem:[#allocation2 + $0x50] sm:$0xf]
    %v189 = vld [vmem:[#allocation2 + $0x54] sm:$0xff]
    %v190 = vld [vmem:[#allocation2 + $0x5c] sm:$0xf]
    %v191 = vld [vmem:[#allocation2 + $0x60] sm:$0xff]
    %v192 = vld [vmem:[#allocation2 + $0x68] sm:$0xf]
    %v193 = vld [vmem:[#allocation2 + $0x6c] sm:$0xff]
    %v194 = vld [vmem:[#allocation2 + $0x74] sm:$0xf]
    %v195 = vld [vmem:[#allocation2 + $0x78] sm:$0xff]
    %v196 = vld [vmem:[#allocation2 + $0x80] sm:$0xf]
    %v197 = vld [vmem:[#allocation2 + $0x84] sm:$0xff]
    %v198 = vld [vmem:[#allocation2 + $0x8c] sm:$0xf]
    %v199 = vld [vmem:[#allocation2 + $0x90] sm:$0xff]
    %v200 = vld [vmem:[#allocation2 + $0x98] sm:$0xf]
    %v201 = vld [vmem:[#allocation2 + $0x9c] sm:$0xff]
    %v202 = vld [vmem:[#allocation2 + $0xa4] sm:$0xf]
    %v227 = vunpack.c.l.b16 %v179
    %v228 = vunpack.c.h.b16 %v179
    %v229 = vunpack.c.l.b16 %v180
    %v230 = vunpack.c.l.b16 %v181
    %v231 = vunpack.c.h.b16 %v181
    %v232 = vunpack.c.l.b16 %v182
    %v233 = vunpack.c.l.b16 %v183
    %v234 = vunpack.c.h.b16 %v183
    %v235 = vunpack.c.l.b16 %v184
    %v236 = vunpack.c.l.b16 %v185
    %v237 = vunpack.c.h.b16 %v185
    %v238 = vunpack.c.l.b16 %v186
    %v239 = vunpack.c.l.b16 %v187
    %v240 = vunpack.c.h.b16 %v187
    %v241 = vunpack.c.l.b16 %v188
    %v242 = vunpack.c.l.b16 %v189
    %v243 = vunpack.c.h.b16 %v189
    %v244 = vunpack.c.l.b16 %v190
    %v245 = vunpack.c.l.b16 %v191
    %v246 = vunpack.c.h.b16 %v191
    %v247 = vunpack.c.l.b16 %v192
    %v248 = vunpack.c.l.b16 %v193
    %v249 = vunpack.c.h.b16 %v193
    %v250 = vunpack.c.l.b16 %v194
    %v251 = vunpack.c.l.b16 %v195
    %v252 = vunpack.c.h.b16 %v195
    %v253 = vunpack.c.l.b16 %v196
    %v254 = vunpack.c.l.b16 %v197
    %v255 = vunpack.c.h.b16 %v197
    %v256 = vunpack.c.l.b16 %v198
    %v257 = vunpack.c.l.b16 %v199
    %v258 = vunpack.c.h.b16 %v199
    %v259 = vunpack.c.l.b16 %v200
    %v260 = vunpack.c.l.b16 %v201
    %v261 = vunpack.c.h.b16 %v201
    %v262 = vunpack.c.l.b16 %v202
    %v263 = vpack.c.b16 %v230, %v227
    %v264 = vpack.c.b16 %v231, %v228
    %v265 = vpack.c.b16 %v232, %v229
    %v266 = vpack.c.b16 %v236, %v233
    %v267 = vpack.c.b16 %v237, %v234
    %v268 = vpack.c.b16 %v238, %v235
    %v269 = vpack.c.b16 %v242, %v239
    %v270 = vpack.c.b16 %v243, %v240
    %v271 = vpack.c.b16 %v244, %v241
    %v272 = vpack.c.b16 %v248, %v245
    %v273 = vpack.c.b16 %v249, %v246
    %v274 = vpack.c.b16 %v250, %v247
    %v275 = vpack.c.b16 %v254, %v251
    %v276 = vpack.c.b16 %v255, %v252
    %v277 = vpack.c.b16 %v256, %v253
    %v278 = vpack.c.b16 %v260, %v257
    %v279 = vpack.c.b16 %v261, %v258
    %v280 = vpack.c.b16 %v262, %v259
    %vm299 = vcmask 785408
    %v301 = vsel %vm299, 0, 0
    %303 = vmatprep.subr.bf16.mxu0 0
    %304 = vmatpush1.bf16.msra.mxu0 0
    %305 = vmatprep.subr.bf16.mxu0 0
    %306 = vmatpush1.bf16.msra.mxu0 0
    %307 = vmatprep.subr.bf16.mxu0 %v279
    %308 = vmatpush1.bf16.msra.mxu0 %v278
    %309 = vmatprep.subr.bf16.mxu0 %v276
    %310 = vmatpush1.bf16.msra.mxu0 %v275
    %311 = vmatprep.subr.bf16.mxu0 %v273
    %312 = vmatpush1.bf16.msra.mxu0 %v272
    %313 = vmatprep.subr.bf16.mxu0 %v270
    %314 = vmatpush1.bf16.msra.mxu0 %v269
    %315 = vmatprep.subr.bf16.mxu0 %v267
    %316 = vmatpush1.bf16.msra.mxu0 %v266
    %317 = vmatprep.subr.bf16.mxu0 %v264
    %318 = vmatpush1.bf16.msra.mxu0 %v263
    %319 = vmatprep.subr.bf16.mxu0 0
    %320 = vmatpush2.bf16.msra.mxu0 0
    %321 = vmatprep.subr.bf16.mxu0 0
    %322 = vmatpush2.bf16.msra.mxu0 0
    %323 = vmatprep.subr.bf16.mxu0 0
    %324 = vmatpush2.bf16.msra.mxu0 0
    %325 = vmatprep.subr.bf16.mxu0 0
    %326 = vmatpush2.bf16.msra.mxu0 0
    %327 = vmatprep.subr.bf16.mxu0 0
    %328 = vmatpush2.bf16.msra.mxu0 0
    %329 = vmatprep.subr.bf16.mxu0 0
    %330 = vmatpush2.bf16.msra.mxu0 0
    %331 = vmatprep.subr.bf16.mxu0 0
    %332 = vmatpush2.bf16.msra.mxu0 0
    %333 = vmatprep.subr.bf16.mxu0 0
    %334 = vmatpush2.bf16.msra.mxu0 0
    %335 = vmatprep.mubr.bf16.mxu0 0
    %336 = vmatmul.mubr.bf16.gmra.mxu0 %v301
    %v337 = vpop.f32.mrf.mxu0
    %v338 = vadd.f32 0.0, %v337
    %v339 = vpop.f32.mrf.mxu0
    %v340 = vadd.f32 0.0, %v339
    %v341 = vpop.f32.mrf.mxu0
    %v342 = vpop.f32.mrf.mxu0
    %343 = vdwg.mxu0
    %344 = vmatprep.subr.bf16.mxu0 0
    %345 = vmatpush1.bf16.msra.mxu0 0
    %346 = vmatprep.subr.bf16.mxu0 0
    %347 = vmatpush1.bf16.msra.mxu0 0
    %348 = vmatprep.subr.bf16.mxu0 0
    %349 = vmatpush1.bf16.msra.mxu0 %v280
    %350 = vmatprep.subr.bf16.mxu0 0
    %351 = vmatpush1.bf16.msra.mxu0 %v277
    %352 = vmatprep.subr.bf16.mxu0 0
    %353 = vmatpush1.bf16.msra.mxu0 %v274
    %354 = vmatprep.subr.bf16.mxu0 0
    %355 = vmatpush1.bf16.msra.mxu0 %v271
    %356 = vmatprep.subr.bf16.mxu0 0
    %357 = vmatpush1.bf16.msra.mxu0 %v268
    %358 = vmatprep.subr.bf16.mxu0 0
    %359 = vmatpush1.bf16.msra.mxu0 %v265
    %360 = vmatprep.subr.bf16.mxu0 0
    %361 = vmatpush2.bf16.msra.mxu0 0
    %362 = vmatprep.subr.bf16.mxu0 0
    %363 = vmatpush2.bf16.msra.mxu0 0
    %364 = vmatprep.subr.bf16.mxu0 0
    %365 = vmatpush2.bf16.msra.mxu0 0
    %366 = vmatprep.subr.bf16.mxu0 0
    %367 = vmatpush2.bf16.msra.mxu0 0
    %368 = vmatprep.subr.bf16.mxu0 0
    %369 = vmatpush2.bf16.msra.mxu0 0
    %370 = vmatprep.subr.bf16.mxu0 0
    %371 = vmatpush2.bf16.msra.mxu0 0
    %372 = vmatprep.subr.bf16.mxu0 0
    %373 = vmatpush2.bf16.msra.mxu0 0
    %374 = vmatprep.subr.bf16.mxu0 0
    %375 = vmatpush2.bf16.msra.mxu0 0
    %376 = vmatprep.mubr.bf16.mxu0 0
    %377 = vmatmul.mubr.bf16.gmra.mxu0 %v301
    %v378 = vpop.f32.mrf.mxu0
    %v379 = vadd.f32 0.0, %v378
    %v380 = vpop.f32.mrf.mxu0
    %v381 = vpop.f32.mrf.mxu0
    %v382 = vpop.f32.mrf.mxu0
    %383 = vdwg.mxu0
    %v384 = vadd.f32 %v112, %v338
    %v385 = vadd.f32 %v114, %v340
    %v386 = vadd.f32 %v155, %v379
    %v387 = vxor.u32 %v384, 2147483648
    %v388 = vxor.u32 %v385, 2147483648
    %v389 = vxor.u32 %v386, 2147483648
    %v390 = vmul.f32 %v387, 1.442695
    %v391 = vpow.pop %v390
    %v392 = vmul.f32 %v388, 1.442695
    %v393 = vpow.pop %v392
    %v394 = vmul.f32 %v389, 1.442695
    %v395 = vpow.pop %v394
    %v396 = vadd.f32 %v391, 1.0
    %v397 = vadd.f32 %v393, 1.0
    %v398 = vadd.f32 %v395, 1.0
    %v399 = vrcp.pop %v396
    %v400 = vmul.f32 1.0, %v399
    %v401 = vrcp.pop %v397
    %v402 = vmul.f32 1.0, %v401
    %v403 = vrcp.pop %v398
    %v404 = vmul.f32 1.0, %v403
    %v405 = vtanh.pop %v386
    %v406 = vmul.f32 %v400, 0.0
    %v407 = vmul.f32 %v402, 0.0
    %409 = vrot.lane.b32.xlu0 %v405, 96
    %v410 = vpop.permute.xlu0 %409
    %v412 = vmul.f32 %v400, %v410
    %414 = vrot.lane.b32.xlu0 %v412, 96
    %v415 = vpop.permute.xlu0 %414
    %v417 = vadd.f32 %v406, %v415
    %v418 = vadd.f32 %v407, %v415
    %v419 = vtanh.pop %v417
    %v420 = vtanh.pop %v418
    %423 = vrot.lane.b32.xlu0 %v419, 96
    %v424 = vpop.permute.xlu0 %423
    %425 = vrot.lane.b32.xlu0 %v420, 96
    %v426 = vpop.permute.xlu0 %425
    %v427 = vsel %vm299, %v424, %v426
    %v430 = vmul.f32 %v402, %v427
    %v431 = vmul.f32 %v404, %v426
    %v432 = vpack.c.bf16 %v430, %v430
    %v433 = vpack.c.bf16 %v431, %v431
    %v434 = vld [vmem:[#allocation2 + $0xa8] sm:$0xff]
    %v435 = vld [vmem:[#allocation2 + $0xb0] sm:$0xf]
    %v436 = vld [vmem:[#allocation2 + $0xb4] sm:$0xff]
    %v437 = vld [vmem:[#allocation2 + $0xbc] sm:$0xf]
    %v438 = vld [vmem:[#allocation2 + $0xc0] sm:$0xff]
    %v439 = vld [vmem:[#allocation2 + $0xc8] sm:$0xf]
    %v440 = vld [vmem:[#allocation2 + $0xcc] sm:$0xff]
    %v441 = vld [vmem:[#allocation2 + $0xd4] sm:$0xf]
    %v442 = vld [vmem:[#allocation2 + $0xd8] sm:$0xff]
    %v443 = vld [vmem:[#allocation2 + $0xe0] sm:$0xf]
    %v444 = vld [vmem:[#allocation2 + $0xe4] sm:$0xff]
    %v445 = vld [vmem:[#allocation2 + $0xec] sm:$0xf]
    %v446 = vld [vmem:[#allocation2 + $0xf0] sm:$0xff]
    %v447 = vld [vmem:[#allocation2 + $0xf8] sm:$0xf]
    %v448 = vld [vmem:[#allocation2 + $0xfc] sm:$0xff]
    %v449 = vld [vmem:[#allocation2 + $0x104] sm:$0xf]
    %v450 = vld [vmem:[#allocation2 + $0x108] sm:$0xff]
    %v451 = vld [vmem:[#allocation2 + $0x110] sm:$0xf]
    %v452 = vld [vmem:[#allocation2 + $0x114] sm:$0xff]
    %v453 = vld [vmem:[#allocation2 + $0x11c] sm:$0xf]
    %v454 = vld [vmem:[#allocation2 + $0x120] sm:$0xff]
    %v455 = vld [vmem:[#allocation2 + $0x128] sm:$0xf]
    %v456 = vld [vmem:[#allocation2 + $0x12c] sm:$0xff]
    %v457 = vld [vmem:[#allocation2 + $0x134] sm:$0xf]
    %v458 = vld [vmem:[#allocation2 + $0x138] sm:$0xff]
    %v459 = vld [vmem:[#allocation2 + $0x140] sm:$0xf]
    %v460 = vld [vmem:[#allocation2 + $0x144] sm:$0xff]
    %v461 = vld [vmem:[#allocation2 + $0x14c] sm:$0xf]
    %v462 = vld [vmem:[#allocation2 + $0x150] sm:$0xff]
    %v463 = vld [vmem:[#allocation2 + $0x158] sm:$0xf]
    %v464 = vld [vmem:[#allocation2 + $0x15c] sm:$0xff]
    %v465 = vld [vmem:[#allocation2 + $0x164] sm:$0xf]
    %v466 = vld [vmem:[#allocation2 + $0x168] sm:$0xff]
    %v467 = vld [vmem:[#allocation2 + $0x170] sm:$0xf]
    %v468 = vld [vmem:[#allocation2 + $0x174] sm:$0xff]
    %v469 = vld [vmem:[#allocation2 + $0x17c] sm:$0xf]
    %v470 = vld [vmem:[#allocation2 + $0x180] sm:$0xff]
    %v471 = vld [vmem:[#allocation2 + $0x188] sm:$0xf]
    %v472 = vld [vmem:[#allocation2 + $0x18c] sm:$0xff]
    %v473 = vld [vmem:[#allocation2 + $0x194] sm:$0xf]
    %v474 = vld [vmem:[#allocation2 + $0x198] sm:$0xff]
    %v475 = vld [vmem:[#allocation2 + $0x1a0] sm:$0xf]
    %v476 = vld [vmem:[#allocation2 + $0x1a4] sm:$0xff]
    %v477 = vld [vmem:[#allocation2 + $0x1ac] sm:$0xf]
    %v478 = vld [vmem:[#allocation2 + $0x1b0] sm:$0xff]
    %v479 = vld [vmem:[#allocation2 + $0x1b8] sm:$0xf]
    %v480 = vld [vmem:[#allocation2 + $0x1bc] sm:$0xff]
    %v481 = vld [vmem:[#allocation2 + $0x1c4] sm:$0xf]
    %v506 = vunpack.c.l.b16 %v458
    %v507 = vunpack.c.h.b16 %v458
    %v508 = vunpack.c.l.b16 %v459
    %v509 = vunpack.c.l.b16 %v460
    %v510 = vunpack.c.h.b16 %v460
    %v511 = vunpack.c.l.b16 %v461
    %v512 = vunpack.c.l.b16 %v462
    %v513 = vunpack.c.h.b16 %v462
    %v514 = vunpack.c.l.b16 %v463
    %v515 = vunpack.c.l.b16 %v464
    %v516 = vunpack.c.h.b16 %v464
    %v517 = vunpack.c.l.b16 %v465
    %v518 = vunpack.c.l.b16 %v466
    %v519 = vunpack.c.h.b16 %v466
    %v520 = vunpack.c.l.b16 %v467
    %v521 = vunpack.c.l.b16 %v468
    %v522 = vunpack.c.h.b16 %v468
    %v523 = vunpack.c.l.b16 %v469
    %v524 = vunpack.c.l.b16 %v470
    %v525 = vunpack.c.h.b16 %v470
    %v526 = vunpack.c.l.b16 %v471
    %v527 = vunpack.c.l.b16 %v472
    %v528 = vunpack.c.h.b16 %v472
    %v529 = vunpack.c.l.b16 %v473
    %v530 = vunpack.c.l.b16 %v474
    %v531 = vunpack.c.h.b16 %v474
    %v532 = vunpack.c.l.b16 %v475
    %v533 = vunpack.c.l.b16 %v476
    %v534 = vunpack.c.h.b16 %v476
    %v535 = vunpack.c.l.b16 %v477
    %v536 = vunpack.c.l.b16 %v478
    %v537 = vunpack.c.h.b16 %v478
    %v538 = vunpack.c.l.b16 %v479
    %v539 = vunpack.c.l.b16 %v480
    %v540 = vunpack.c.h.b16 %v480
    %v541 = vunpack.c.l.b16 %v481
    %v542 = vpack.c.b16 %v509, %v506
    %v543 = vpack.c.b16 %v510, %v507
    %v544 = vpack.c.b16 %v511, %v508
    %v545 = vpack.c.b16 %v515, %v512
    %v546 = vpack.c.b16 %v516, %v513
    %v547 = vpack.c.b16 %v517, %v514
    %v548 = vpack.c.b16 %v521, %v518
    %v549 = vpack.c.b16 %v522, %v519
    %v550 = vpack.c.b16 %v523, %v520
    %v551 = vpack.c.b16 %v527, %v524
    %v552 = vpack.c.b16 %v528, %v525
    %v553 = vpack.c.b16 %v529, %v526
    %v554 = vpack.c.b16 %v533, %v530
    %v555 = vpack.c.b16 %v534, %v531
    %v556 = vpack.c.b16 %v535, %v532
    %v557 = vpack.c.b16 %v539, %v536
    %v558 = vpack.c.b16 %v540, %v537
    %v559 = vpack.c.b16 %v541, %v538
    %578 = vmatprep.subr.bf16.mxu0 0
    %579 = vmatpush1.bf16.msra.mxu0 0
    %580 = vmatprep.subr.bf16.mxu0 0
    %581 = vmatpush1.bf16.msra.mxu0 0
    %582 = vmatprep.subr.bf16.mxu0 %v558
    %583 = vmatpush1.bf16.msra.mxu0 %v557
    %584 = vmatprep.subr.bf16.mxu0 %v555
    %585 = vmatpush1.bf16.msra.mxu0 %v554
    %586 = vmatprep.subr.bf16.mxu0 %v552
    %587 = vmatpush1.bf16.msra.mxu0 %v551
    %588 = vmatprep.subr.bf16.mxu0 %v549
    %589 = vmatpush1.bf16.msra.mxu0 %v548
    %590 = vmatprep.subr.bf16.mxu0 %v546
    %591 = vmatpush1.bf16.msra.mxu0 %v545
    %592 = vmatprep.subr.bf16.mxu0 %v543
    %593 = vmatpush1.bf16.msra.mxu0 %v542
    %594 = vmatprep.subr.bf16.mxu0 0
    %595 = vmatpush2.bf16.msra.mxu0 0
    %596 = vmatprep.subr.bf16.mxu0 0
    %597 = vmatpush2.bf16.msra.mxu0 0
    %598 = vmatprep.subr.bf16.mxu0 0
    %599 = vmatpush2.bf16.msra.mxu0 0
    %600 = vmatprep.subr.bf16.mxu0 0
    %601 = vmatpush2.bf16.msra.mxu0 0
    %602 = vmatprep.subr.bf16.mxu0 0
    %603 = vmatpush2.bf16.msra.mxu0 0
    %604 = vmatprep.subr.bf16.mxu0 0
    %605 = vmatpush2.bf16.msra.mxu0 0
    %606 = vmatprep.subr.bf16.mxu0 0
    %607 = vmatpush2.bf16.msra.mxu0 0
    %608 = vmatprep.subr.bf16.mxu0 0
    %609 = vmatpush2.bf16.msra.mxu0 0
    %610 = vmatprep.mubr.bf16.mxu0 0
    %611 = vmatmul.mubr.bf16.gmra.mxu0 %v301
    %v612 = vpop.f32.mrf.mxu0
    %v613 = vadd.f32 0.0, %v612
    %v614 = vpop.f32.mrf.mxu0
    %v615 = vadd.f32 0.0, %v614
    %v616 = vpop.f32.mrf.mxu0
    %v617 = vpop.f32.mrf.mxu0
    %618 = vdwg.mxu0
    %619 = vmatprep.subr.bf16.mxu0 0
    %620 = vmatpush1.bf16.msra.mxu0 0
    %621 = vmatprep.subr.bf16.mxu0 0
    %622 = vmatpush1.bf16.msra.mxu0 0
    %623 = vmatprep.subr.bf16.mxu0 0
    %624 = vmatpush1.bf16.msra.mxu0 %v559
    %625 = vmatprep.subr.bf16.mxu0 0
    %626 = vmatpush1.bf16.msra.mxu0 %v556
    %627 = vmatprep.subr.bf16.mxu0 0
    %628 = vmatpush1.bf16.msra.mxu0 %v553
    %629 = vmatprep.subr.bf16.mxu0 0
    %630 = vmatpush1.bf16.msra.mxu0 %v550
    %631 = vmatprep.subr.bf16.mxu0 0
    %632 = vmatpush1.bf16.msra.mxu0 %v547
    %633 = vmatprep.subr.bf16.mxu0 0
    %634 = vmatpush1.bf16.msra.mxu0 %v544
    %635 = vmatprep.subr.bf16.mxu0 0
    %636 = vmatpush2.bf16.msra.mxu0 0
    %637 = vmatprep.subr.bf16.mxu0 0
    %638 = vmatpush2.bf16.msra.mxu0 0
    %639 = vmatprep.subr.bf16.mxu0 0
    %640 = vmatpush2.bf16.msra.mxu0 0
    %641 = vmatprep.subr.bf16.mxu0 0
    %642 = vmatpush2.bf16.msra.mxu0 0
    %643 = vmatprep.subr.bf16.mxu0 0
    %644 = vmatpush2.bf16.msra.mxu0 0
    %645 = vmatprep.subr.bf16.mxu0 0
    %646 = vmatpush2.bf16.msra.mxu0 0
    %647 = vmatprep.subr.bf16.mxu0 0
    %648 = vmatpush2.bf16.msra.mxu0 0
    %649 = vmatprep.subr.bf16.mxu0 0
    %650 = vmatpush2.bf16.msra.mxu0 0
    %651 = vmatprep.mubr.bf16.mxu0 0
    %652 = vmatmul.mubr.bf16.gmra.mxu0 %v301
    %v653 = vpop.f32.mrf.mxu0
    %v654 = vadd.f32 0.0, %v653
    %v655 = vpop.f32.mrf.mxu0
    %v656 = vpop.f32.mrf.mxu0
    %v657 = vpop.f32.mrf.mxu0
    %658 = vdwg.mxu0
    %661 = vrot.lane.b32.xlu0 %v432, 64
    %v662 = vpop.permute.xlu0 %661
    %663 = vrot.lane.b32.xlu0 %v433, 64
    %v664 = vpop.permute.xlu0 %663
    %vm665 = vcmask 523264
    %v666 = vsel %vm665, %v662, %v664
    %v691 = vunpack.c.l.b16 %v434
    %v692 = vunpack.c.h.b16 %v434
    %v693 = vunpack.c.l.b16 %v435
    %v694 = vunpack.c.l.b16 %v436
    %v695 = vunpack.c.h.b16 %v436
    %v696 = vunpack.c.l.b16 %v437
    %v697 = vunpack.c.l.b16 %v438
    %v698 = vunpack.c.h.b16 %v438
    %v699 = vunpack.c.l.b16 %v439
    %v700 = vunpack.c.l.b16 %v440
    %v701 = vunpack.c.h.b16 %v440
    %v702 = vunpack.c.l.b16 %v441
    %v703 = vunpack.c.l.b16 %v442
    %v704 = vunpack.c.h.b16 %v442
    %v705 = vunpack.c.l.b16 %v443
    %v706 = vunpack.c.l.b16 %v444
    %v707 = vunpack.c.h.b16 %v444
    %v708 = vunpack.c.l.b16 %v445
    %v709 = vunpack.c.l.b16 %v446
    %v710 = vunpack.c.h.b16 %v446
    %v711 = vunpack.c.l.b16 %v447
    %v712 = vunpack.c.l.b16 %v448
    %v713 = vunpack.c.h.b16 %v448
    %v714 = vunpack.c.l.b16 %v449
    %v715 = vunpack.c.l.b16 %v450
    %v716 = vunpack.c.h.b16 %v450
    %v717 = vunpack.c.l.b16 %v451
    %v718 = vunpack.c.l.b16 %v452
    %v719 = vunpack.c.h.b16 %v452
    %v720 = vunpack.c.l.b16 %v453
    %v721 = vunpack.c.l.b16 %v454
    %v722 = vunpack.c.h.b16 %v454
    %v723 = vunpack.c.l.b16 %v455
    %v724 = vunpack.c.l.b16 %v456
    %v725 = vunpack.c.h.b16 %v456
    %v726 = vunpack.c.l.b16 %v457
    %v727 = vpack.c.b16 %v694, %v691
    %v728 = vpack.c.b16 %v695, %v692
    %v729 = vpack.c.b16 %v696, %v693
    %v730 = vpack.c.b16 %v700, %v697
    %v731 = vpack.c.b16 %v701, %v698
    %v732 = vpack.c.b16 %v702, %v699
    %v733 = vpack.c.b16 %v706, %v703
    %v734 = vpack.c.b16 %v707, %v704
    %v735 = vpack.c.b16 %v708, %v705
    %v736 = vpack.c.b16 %v712, %v709
    %v737 = vpack.c.b16 %v713, %v710
    %v738 = vpack.c.b16 %v714, %v711
    %v739 = vpack.c.b16 %v718, %v715
    %v740 = vpack.c.b16 %v719, %v716
    %v741 = vpack.c.b16 %v720, %v717
    %v742 = vpack.c.b16 %v724, %v721
    %v743 = vpack.c.b16 %v725, %v722
    %v744 = vpack.c.b16 %v726, %v723
    %v764 = vsel %vm299, %v666, 0
    %766 = vmatprep.subr.bf16.mxu0 0
    %767 = vmatpush1.bf16.msra.mxu0 0
    %768 = vmatprep.subr.bf16.mxu0 0
    %769 = vmatpush1.bf16.msra.mxu0 0
    %770 = vmatprep.subr.bf16.mxu0 %v743
    %771 = vmatpush1.bf16.msra.mxu0 %v742
    %772 = vmatprep.subr.bf16.mxu0 %v740
    %773 = vmatpush1.bf16.msra.mxu0 %v739
    %774 = vmatprep.subr.bf16.mxu0 %v737
    %775 = vmatpush1.bf16.msra.mxu0 %v736
    %776 = vmatprep.subr.bf16.mxu0 %v734
    %777 = vmatpush1.bf16.msra.mxu0 %v733
    %778 = vmatprep.subr.bf16.mxu0 %v731
    %779 = vmatpush1.bf16.msra.mxu0 %v730
    %780 = vmatprep.subr.bf16.mxu0 %v728
    %781 = vmatpush1.bf16.msra.mxu0 %v727
    %782 = vmatprep.subr.bf16.mxu0 0
    %783 = vmatpush2.bf16.msra.mxu0 0
    %784 = vmatprep.subr.bf16.mxu0 0
    %785 = vmatpush2.bf16.msra.mxu0 0
    %786 = vmatprep.subr.bf16.mxu0 0
    %787 = vmatpush2.bf16.msra.mxu0 0
    %788 = vmatprep.subr.bf16.mxu0 0
    %789 = vmatpush2.bf16.msra.mxu0 0
    %790 = vmatprep.subr.bf16.mxu0 0
    %791 = vmatpush2.bf16.msra.mxu0 0
    %792 = vmatprep.subr.bf16.mxu0 0
    %793 = vmatpush2.bf16.msra.mxu0 0
    %794 = vmatprep.subr.bf16.mxu0 0
    %795 = vmatpush2.bf16.msra.mxu0 0
    %796 = vmatprep.subr.bf16.mxu0 0
    %797 = vmatpush2.bf16.msra.mxu0 0
    %798 = vmatprep.mubr.bf16.mxu0 0
    %799 = vmatmul.mubr.bf16.gmra.mxu0 %v764
    %v800 = vpop.f32.mrf.mxu0
    %v801 = vadd.f32 %v613, %v800
    %v802 = vpop.f32.mrf.mxu0
    %v803 = vadd.f32 %v615, %v802
    %v804 = vpop.f32.mrf.mxu0
    %v805 = vpop.f32.mrf.mxu0
    %806 = vdwg.mxu0
    %807 = vmatprep.subr.bf16.mxu0 0
    %808 = vmatpush1.bf16.msra.mxu0 0
    %809 = vmatprep.subr.bf16.mxu0 0
    %810 = vmatpush1.bf16.msra.mxu0 0
    %811 = vmatprep.subr.bf16.mxu0 0
    %812 = vmatpush1.bf16.msra.mxu0 %v744
    %813 = vmatprep.subr.bf16.mxu0 0
    %814 = vmatpush1.bf16.msra.mxu0 %v741
    %815 = vmatprep.subr.bf16.mxu0 0
    %816 = vmatpush1.bf16.msra.mxu0 %v738
    %817 = vmatprep.subr.bf16.mxu0 0
    %818 = vmatpush1.bf16.msra.mxu0 %v735
    %819 = vmatprep.subr.bf16.mxu0 0
    %820 = vmatpush1.bf16.msra.mxu0 %v732
    %821 = vmatprep.subr.bf16.mxu0 0
    %822 = vmatpush1.bf16.msra.mxu0 %v729
    %823 = vmatprep.subr.bf16.mxu0 0
    %824 = vmatpush2.bf16.msra.mxu0 0
    %825 = vmatprep.subr.bf16.mxu0 0
    %826 = vmatpush2.bf16.msra.mxu0 0
    %827 = vmatprep.subr.bf16.mxu0 0
    %828 = vmatpush2.bf16.msra.mxu0 0
    %829 = vmatprep.subr.bf16.mxu0 0
    %830 = vmatpush2.bf16.msra.mxu0 0
    %831 = vmatprep.subr.bf16.mxu0 0
    %832 = vmatpush2.bf16.msra.mxu0 0
    %833 = vmatprep.subr.bf16.mxu0 0
    %834 = vmatpush2.bf16.msra.mxu0 0
    %835 = vmatprep.subr.bf16.mxu0 0
    %836 = vmatpush2.bf16.msra.mxu0 0
    %837 = vmatprep.subr.bf16.mxu0 0
    %838 = vmatpush2.bf16.msra.mxu0 0
    %839 = vmatprep.mubr.bf16.mxu0 0
    %840 = vmatmul.mubr.bf16.gmra.mxu0 %v764
    %v841 = vpop.f32.mrf.mxu0
    %v842 = vadd.f32 %v654, %v841
    %v843 = vpop.f32.mrf.mxu0
    %v844 = vpop.f32.mrf.mxu0
    %v845 = vpop.f32.mrf.mxu0
    %846 = vdwg.mxu0
    %v847 = vadd.f32 %v801, %v167
    %v848 = vadd.f32 %v803, %v171
    %v849 = vadd.f32 %v842, %v175
    %v850 = vxor.u32 %v847, 2147483648
    %v851 = vxor.u32 %v848, 2147483648
    %v852 = vxor.u32 %v849, 2147483648
    %v853 = vmul.f32 %v850, 1.442695
    %v854 = vpow.pop %v853
    %v855 = vmul.f32 %v851, 1.442695
    %v856 = vpow.pop %v855
    %v857 = vmul.f32 %v852, 1.442695
    %v858 = vpow.pop %v857
    %v859 = vadd.f32 %v854, 1.0
    %v860 = vadd.f32 %v856, 1.0
    %v861 = vadd.f32 %v858, 1.0
    %v862 = vrcp.pop %v859
    %v863 = vmul.f32 1.0, %v862
    %v864 = vrcp.pop %v860
    %v865 = vmul.f32 1.0, %v864
    %v866 = vrcp.pop %v861
    %v867 = vmul.f32 1.0, %v866
    %v868 = vtanh.pop %v849
    %v869 = vmul.f32 %v863, 0.0
    %v870 = vmul.f32 %v865, 0.0
    %872 = vrot.lane.b32.xlu0 %v868, 96
    %v873 = vpop.permute.xlu0 %872
    %v875 = vmul.f32 %v863, %v873
    %877 = vrot.lane.b32.xlu0 %v875, 96
    %v878 = vpop.permute.xlu0 %877
    %v880 = vadd.f32 %v869, %v878
    %v881 = vadd.f32 %v870, %v878
    %v882 = vtanh.pop %v880
    %v883 = vtanh.pop %v881
    %886 = vrot.lane.b32.xlu0 %v882, 96
    %v887 = vpop.permute.xlu0 %886
    %888 = vrot.lane.b32.xlu0 %v883, 96
    %v889 = vpop.permute.xlu0 %888
    %v890 = vsel %vm299, %v887, %v889
    %v893 = vmul.f32 %v865, %v890
    %v894 = vmul.f32 %v867, %v889
    %895 = vmatprep.subr.bf16.mxu0 0
    %896 = vmatpush1.bf16.msra.mxu0 0
    %897 = vmatprep.subr.bf16.mxu0 0
    %898 = vmatpush1.bf16.msra.mxu0 0
    %899 = vmatprep.subr.bf16.mxu0 %v279
    %900 = vmatpush1.bf16.msra.mxu0 %v278
    %901 = vmatprep.subr.bf16.mxu0 %v276
    %902 = vmatpush1.bf16.msra.mxu0 %v275
    %903 = vmatprep.subr.bf16.mxu0 %v273
    %904 = vmatpush1.bf16.msra.mxu0 %v272
    %905 = vmatprep.subr.bf16.mxu0 %v270
    %906 = vmatpush1.bf16.msra.mxu0 %v269
    %907 = vmatprep.subr.bf16.mxu0 %v267
    %908 = vmatpush1.bf16.msra.mxu0 %v266
    %909 = vmatprep.subr.bf16.mxu0 %v264
    %910 = vmatpush1.bf16.msra.mxu0 %v263
    %911 = vmatprep.subr.bf16.mxu0 0
    %912 = vmatpush2.bf16.msra.mxu0 0
    %913 = vmatprep.subr.bf16.mxu0 0
    %914 = vmatpush2.bf16.msra.mxu0 0
    %915 = vmatprep.subr.bf16.mxu0 0
    %916 = vmatpush2.bf16.msra.mxu0 0
    %917 = vmatprep.subr.bf16.mxu0 0
    %918 = vmatpush2.bf16.msra.mxu0 0
    %919 = vmatprep.subr.bf16.mxu0 0
    %920 = vmatpush2.bf16.msra.mxu0 0
    %921 = vmatprep.subr.bf16.mxu0 0
    %922 = vmatpush2.bf16.msra.mxu0 0
    %923 = vmatprep.subr.bf16.mxu0 0
    %924 = vmatpush2.bf16.msra.mxu0 0
    %925 = vmatprep.subr.bf16.mxu0 0
    %926 = vmatpush2.bf16.msra.mxu0 0
    %927 = vmatprep.mubr.bf16.mxu0 0
    %928 = vmatmul.mubr.bf16.gmra.mxu0 %v764
    %v929 = vpop.f32.mrf.mxu0
    %v930 = vadd.f32 0.0, %v929
    %v931 = vpop.f32.mrf.mxu0
    %v932 = vadd.f32 0.0, %v931
    %v933 = vpop.f32.mrf.mxu0
    %v934 = vpop.f32.mrf.mxu0
    %935 = vdwg.mxu0
    %936 = vmatprep.subr.bf16.mxu0 0
    %937 = vmatpush1.bf16.msra.mxu0 0
    %938 = vmatprep.subr.bf16.mxu0 0
    %939 = vmatpush1.bf16.msra.mxu0 0
    %940 = vmatprep.subr.bf16.mxu0 0
    %941 = vmatpush1.bf16.msra.mxu0 %v280
    %942 = vmatprep.subr.bf16.mxu0 0
    %943 = vmatpush1.bf16.msra.mxu0 %v277
    %944 = vmatprep.subr.bf16.mxu0 0
    %945 = vmatpush1.bf16.msra.mxu0 %v274
    %946 = vmatprep.subr.bf16.mxu0 0
    %947 = vmatpush1.bf16.msra.mxu0 %v271
    %948 = vmatprep.subr.bf16.mxu0 0
    %949 = vmatpush1.bf16.msra.mxu0 %v268
    %950 = vmatprep.subr.bf16.mxu0 0
    %951 = vmatpush1.bf16.msra.mxu0 %v265
    %952 = vmatprep.subr.bf16.mxu0 0
    %953 = vmatpush2.bf16.msra.mxu0 0
    %954 = vmatprep.subr.bf16.mxu0 0
    %955 = vmatpush2.bf16.msra.mxu0 0
    %956 = vmatprep.subr.bf16.mxu0 0
    %957 = vmatpush2.bf16.msra.mxu0 0
    %958 = vmatprep.subr.bf16.mxu0 0
    %959 = vmatpush2.bf16.msra.mxu0 0
    %960 = vmatprep.subr.bf16.mxu0 0
    %961 = vmatpush2.bf16.msra.mxu0 0
    %962 = vmatprep.subr.bf16.mxu0 0
    %963 = vmatpush2.bf16.msra.mxu0 0
    %964 = vmatprep.subr.bf16.mxu0 0
    %965 = vmatpush2.bf16.msra.mxu0 0
    %966 = vmatprep.subr.bf16.mxu0 0
    %967 = vmatpush2.bf16.msra.mxu0 0
    %968 = vmatprep.mubr.bf16.mxu0 0
    %969 = vmatmul.mubr.bf16.gmra.mxu0 %v764
    %v970 = vpop.f32.mrf.mxu0
    %v971 = vadd.f32 0.0, %v970
    %v972 = vpop.f32.mrf.mxu0
    %v973 = vpop.f32.mrf.mxu0
    %v974 = vpop.f32.mrf.mxu0
    %975 = vdwg.mxu0
    %v979 = vrot.slane %v930, 6
    %v980 = vrot.slane %v932, 6
    %v981 = vrot.slane %v971, 6
    %v985 = vadd.f32 %v112, %v979
    %v986 = vadd.f32 %v114, %v980
    %v987 = vadd.f32 %v155, %v981
    %v988 = vxor.u32 %v985, 2147483648
    %v989 = vxor.u32 %v986, 2147483648
    %v990 = vxor.u32 %v987, 2147483648
    %v991 = vmul.f32 %v988, 1.442695
    %v992 = vpow.pop %v991
    %v993 = vmul.f32 %v989, 1.442695
    %v994 = vpow.pop %v993
    %v995 = vmul.f32 %v990, 1.442695
    %v996 = vpow.pop %v995
    %v997 = vadd.f32 %v992, 1.0
    %v998 = vadd.f32 %v994, 1.0
    %v999 = vadd.f32 %v996, 1.0
    %v1000 = vrcp.pop %v997
    %v1001 = vmul.f32 1.0, %v1000
    %v1002 = vrcp.pop %v998
    %v1003 = vmul.f32 1.0, %v1002
    %v1004 = vrcp.pop %v999
    %v1005 = vmul.f32 1.0, %v1004
    %v1006 = vtanh.pop %v987
    %v1009 = vrot.slane %v417, 6
    %v1010 = vrot.slane %v418, 6
    %v1013 = vmul.f32 %v1001, %v1009
    %v1014 = vmul.f32 %v1003, %v1010
    %1016 = vrot.lane.b32.xlu0 %v1006, 96
    %v1017 = vpop.permute.xlu0 %1016
    %v1019 = vmul.f32 %v1001, %v1017
    %1021 = vrot.lane.b32.xlu0 %v1019, 96
    %v1022 = vpop.permute.xlu0 %1021
    %v1024 = vadd.f32 %v1013, %v1022
    %v1025 = vadd.f32 %v1014, %v1022
    %v1026 = vtanh.pop %v1024
    %v1027 = vtanh.pop %v1025
    %1030 = vrot.lane.b32.xlu0 %v1026, 96
    %v1031 = vpop.permute.xlu0 %1030
    %1032 = vrot.lane.b32.xlu0 %v1027, 96
    %v1033 = vpop.permute.xlu0 %1032
    %v1034 = vsel %vm299, %v1031, %v1033
    %v1037 = vmul.f32 %v1003, %v1034
    %v1038 = vmul.f32 %v1005, %v1033
    %v1039 = vpack.c.bf16 %v1037, %v1037
    %v1040 = vpack.c.bf16 %v1038, %v1038
    %v1041 = vpack.c.bf16 %v893, %v893
    %v1042 = vpack.c.bf16 %v894, %v894
    %1045 = vrot.lane.b32.xlu0 %v1041, 64
    %v1046 = vpop.permute.xlu0 %1045
    %1047 = vrot.lane.b32.xlu0 %v1042, 64
    %v1048 = vpop.permute.xlu0 %1047
    %v1049 = vsel %vm665, %v1046, %v1048
    %v1051 = vsel %vm299, %v1049, 0
    %1053 = vmatprep.subr.bf16.mxu0 0
    %1054 = vmatpush1.bf16.msra.mxu0 0
    %1055 = vmatprep.subr.bf16.mxu0 0
    %1056 = vmatpush1.bf16.msra.mxu0 0
    %1057 = vmatprep.subr.bf16.mxu0 %v558
    %1058 = vmatpush1.bf16.msra.mxu0 %v557
    %1059 = vmatprep.subr.bf16.mxu0 %v555
    %1060 = vmatpush1.bf16.msra.mxu0 %v554
    %1061 = vmatprep.subr.bf16.mxu0 %v552
    %1062 = vmatpush1.bf16.msra.mxu0 %v551
    %1063 = vmatprep.subr.bf16.mxu0 %v549
    %1064 = vmatpush1.bf16.msra.mxu0 %v548
    %1065 = vmatprep.subr.bf16.mxu0 %v546
    %1066 = vmatpush1.bf16.msra.mxu0 %v545
    %1067 = vmatprep.subr.bf16.mxu0 %v543
    %1068 = vmatpush1.bf16.msra.mxu0 %v542
    %1069 = vmatprep.subr.bf16.mxu0 0
    %1070 = vmatpush2.bf16.msra.mxu0 0
    %1071 = vmatprep.subr.bf16.mxu0 0
    %1072 = vmatpush2.bf16.msra.mxu0 0
    %1073 = vmatprep.subr.bf16.mxu0 0
    %1074 = vmatpush2.bf16.msra.mxu0 0
    %1075 = vmatprep.subr.bf16.mxu0 0
    %1076 = vmatpush2.bf16.msra.mxu0 0
    %1077 = vmatprep.subr.bf16.mxu0 0
    %1078 = vmatpush2.bf16.msra.mxu0 0
    %1079 = vmatprep.subr.bf16.mxu0 0
    %1080 = vmatpush2.bf16.msra.mxu0 0
    %1081 = vmatprep.subr.bf16.mxu0 0
    %1082 = vmatpush2.bf16.msra.mxu0 0
    %1083 = vmatprep.subr.bf16.mxu0 0
    %1084 = vmatpush2.bf16.msra.mxu0 0
    %1085 = vmatprep.mubr.bf16.mxu0 0
    %1086 = vmatmul.mubr.bf16.gmra.mxu0 %v1051
    %v1087 = vpop.f32.mrf.mxu0
    %v1088 = vadd.f32 0.0, %v1087
    %v1089 = vpop.f32.mrf.mxu0
    %v1090 = vadd.f32 0.0, %v1089
    %v1091 = vpop.f32.mrf.mxu0
    %v1092 = vpop.f32.mrf.mxu0
    %1093 = vdwg.mxu0
    %1094 = vmatprep.subr.bf16.mxu0 0
    %1095 = vmatpush1.bf16.msra.mxu0 0
    %1096 = vmatprep.subr.bf16.mxu0 0
    %1097 = vmatpush1.bf16.msra.mxu0 0
    %1098 = vmatprep.subr.bf16.mxu0 0
    %1099 = vmatpush1.bf16.msra.mxu0 %v559
    %1100 = vmatprep.subr.bf16.mxu0 0
    %1101 = vmatpush1.bf16.msra.mxu0 %v556
    %1102 = vmatprep.subr.bf16.mxu0 0
    %1103 = vmatpush1.bf16.msra.mxu0 %v553
    %1104 = vmatprep.subr.bf16.mxu0 0
    %1105 = vmatpush1.bf16.msra.mxu0 %v550
    %1106 = vmatprep.subr.bf16.mxu0 0
    %1107 = vmatpush1.bf16.msra.mxu0 %v547
    %1108 = vmatprep.subr.bf16.mxu0 0
    %1109 = vmatpush1.bf16.msra.mxu0 %v544
    %1110 = vmatprep.subr.bf16.mxu0 0
    %1111 = vmatpush2.bf16.msra.mxu0 0
    %1112 = vmatprep.subr.bf16.mxu0 0
    %1113 = vmatpush2.bf16.msra.mxu0 0
    %1114 = vmatprep.subr.bf16.mxu0 0
    %1115 = vmatpush2.bf16.msra.mxu0 0
    %1116 = vmatprep.subr.bf16.mxu0 0
    %1117 = vmatpush2.bf16.msra.mxu0 0
    %1118 = vmatprep.subr.bf16.mxu0 0
    %1119 = vmatpush2.bf16.msra.mxu0 0
    %1120 = vmatprep.subr.bf16.mxu0 0
    %1121 = vmatpush2.bf16.msra.mxu0 0
    %1122 = vmatprep.subr.bf16.mxu0 0
    %1123 = vmatpush2.bf16.msra.mxu0 0
    %1124 = vmatprep.subr.bf16.mxu0 0
    %1125 = vmatpush2.bf16.msra.mxu0 0
    %1126 = vmatprep.mubr.bf16.mxu0 0
    %1127 = vmatmul.mubr.bf16.gmra.mxu0 %v1051
    %v1128 = vpop.f32.mrf.mxu0
    %v1129 = vadd.f32 0.0, %v1128
    %v1130 = vpop.f32.mrf.mxu0
    %v1131 = vpop.f32.mrf.mxu0
    %v1132 = vpop.f32.mrf.mxu0
    %1133 = vdwg.mxu0
    %v1136 = vrot.slane %v1039, 1
    %v1137 = vrot.slane %v1040, 1
    %1138 = vrot.lane.b32.xlu0 %v1136, 64
    %v1139 = vpop.permute.xlu0 %1138
    %1140 = vrot.lane.b32.xlu0 %v1137, 64
    %v1141 = vpop.permute.xlu0 %1140
    %v1142 = vsel %vm665, %v1139, %v1141
    %v1144 = vsel %vm299, %v1142, 0
    %1146 = vmatprep.subr.bf16.mxu0 0
    %1147 = vmatpush1.bf16.msra.mxu0 0
    %1148 = vmatprep.subr.bf16.mxu0 0
    %1149 = vmatpush1.bf16.msra.mxu0 0
    %1150 = vmatprep.subr.bf16.mxu0 %v743
    %1151 = vmatpush1.bf16.msra.mxu0 %v742
    %1152 = vmatprep.subr.bf16.mxu0 %v740
    %1153 = vmatpush1.bf16.msra.mxu0 %v739
    %1154 = vmatprep.subr.bf16.mxu0 %v737
    %1155 = vmatpush1.bf16.msra.mxu0 %v736
    %1156 = vmatprep.subr.bf16.mxu0 %v734
    %1157 = vmatpush1.bf16.msra.mxu0 %v733
    %1158 = vmatprep.subr.bf16.mxu0 %v731
    %1159 = vmatpush1.bf16.msra.mxu0 %v730
    %1160 = vmatprep.subr.bf16.mxu0 %v728
    %1161 = vmatpush1.bf16.msra.mxu0 %v727
    %1162 = vmatprep.subr.bf16.mxu0 0
    %1163 = vmatpush2.bf16.msra.mxu0 0
    %1164 = vmatprep.subr.bf16.mxu0 0
    %1165 = vmatpush2.bf16.msra.mxu0 0
    %1166 = vmatprep.subr.bf16.mxu0 0
    %1167 = vmatpush2.bf16.msra.mxu0 0
    %1168 = vmatprep.subr.bf16.mxu0 0
    %1169 = vmatpush2.bf16.msra.mxu0 0
    %1170 = vmatprep.subr.bf16.mxu0 0
    %1171 = vmatpush2.bf16.msra.mxu0 0
    %1172 = vmatprep.subr.bf16.mxu0 0
    %1173 = vmatpush2.bf16.msra.mxu0 0
    %1174 = vmatprep.subr.bf16.mxu0 0
    %1175 = vmatpush2.bf16.msra.mxu0 0
    %1176 = vmatprep.subr.bf16.mxu0 0
    %1177 = vmatpush2.bf16.msra.mxu0 0
    %1178 = vmatprep.mubr.bf16.mxu0 0
    %1179 = vmatmul.mubr.bf16.gmra.mxu0 %v1144
    %v1180 = vpop.f32.mrf.mxu0
    %v1181 = vadd.f32 %v1088, %v1180
    %v1182 = vpop.f32.mrf.mxu0
    %v1183 = vadd.f32 %v1090, %v1182
    %v1184 = vpop.f32.mrf.mxu0
    %v1185 = vpop.f32.mrf.mxu0
    %1186 = vdwg.mxu0
    %1187 = vmatprep.subr.bf16.mxu0 0
    %1188 = vmatpush1.bf16.msra.mxu0 0
    %1189 = vmatprep.subr.bf16.mxu0 0
    %1190 = vmatpush1.bf16.msra.mxu0 0
    %1191 = vmatprep.subr.bf16.mxu0 0
    %1192 = vmatpush1.bf16.msra.mxu0 %v744
    %1193 = vmatprep.subr.bf16.mxu0 0
    %1194 = vmatpush1.bf16.msra.mxu0 %v741
    %1195 = vmatprep.subr.bf16.mxu0 0
    %1196 = vmatpush1.bf16.msra.mxu0 %v738
    %1197 = vmatprep.subr.bf16.mxu0 0
    %1198 = vmatpush1.bf16.msra.mxu0 %v735
    %1199 = vmatprep.subr.bf16.mxu0 0
    %1200 = vmatpush1.bf16.msra.mxu0 %v732
    %1201 = vmatprep.subr.bf16.mxu0 0
    %1202 = vmatpush1.bf16.msra.mxu0 %v729
    %1203 = vmatprep.subr.bf16.mxu0 0
    %1204 = vmatpush2.bf16.msra.mxu0 0
    %1205 = vmatprep.subr.bf16.mxu0 0
    %1206 = vmatpush2.bf16.msra.mxu0 0
    %1207 = vmatprep.subr.bf16.mxu0 0
    %1208 = vmatpush2.bf16.msra.mxu0 0
    %1209 = vmatprep.subr.bf16.mxu0 0
    %1210 = vmatpush2.bf16.msra.mxu0 0
    %1211 = vmatprep.subr.bf16.mxu0 0
    %1212 = vmatpush2.bf16.msra.mxu0 0
    %1213 = vmatprep.subr.bf16.mxu0 0
    %1214 = vmatpush2.bf16.msra.mxu0 0
    %1215 = vmatprep.subr.bf16.mxu0 0
    %1216 = vmatpush2.bf16.msra.mxu0 0
    %1217 = vmatprep.subr.bf16.mxu0 0
    %1218 = vmatpush2.bf16.msra.mxu0 0
    %1219 = vmatprep.mubr.bf16.mxu0 0
    %1220 = vmatmul.mubr.bf16.gmra.mxu0 %v1144
    %v1221 = vpop.f32.mrf.mxu0
    %v1222 = vadd.f32 %v1129, %v1221
    %v1223 = vpop.f32.mrf.mxu0
    %v1224 = vpop.f32.mrf.mxu0
    %v1225 = vpop.f32.mrf.mxu0
    %1226 = vdwg.mxu0
    %v1227 = vadd.f32 %v1181, %v167
    %v1228 = vadd.f32 %v1183, %v171
    %v1229 = vadd.f32 %v1222, %v175
    %v1230 = vxor.u32 %v1227, 2147483648
    %v1231 = vxor.u32 %v1228, 2147483648
    %v1232 = vxor.u32 %v1229, 2147483648
    %v1233 = vmul.f32 %v1230, 1.442695
    %v1234 = vpow.pop %v1233
    %v1235 = vmul.f32 %v1231, 1.442695
    %v1236 = vpow.pop %v1235
    %v1237 = vmul.f32 %v1232, 1.442695
    %v1238 = vpow.pop %v1237
    %v1239 = vadd.f32 %v1234, 1.0
    %v1240 = vadd.f32 %v1236, 1.0
    %v1241 = vadd.f32 %v1238, 1.0
    %v1242 = vrcp.pop %v1239
    %v1243 = vmul.f32 1.0, %v1242
    %v1244 = vrcp.pop %v1240
    %v1245 = vmul.f32 1.0, %v1244
    %v1246 = vrcp.pop %v1241
    %v1247 = vmul.f32 1.0, %v1246
    %v1248 = vtanh.pop %v1229
    %v1249 = vmul.f32 %v1243, %v880
    %v1250 = vmul.f32 %v1245, %v881
    %1252 = vrot.lane.b32.xlu0 %v1248, 96
    %v1253 = vpop.permute.xlu0 %1252
    %v1255 = vmul.f32 %v1243, %v1253
    %1257 = vrot.lane.b32.xlu0 %v1255, 96
    %v1258 = vpop.permute.xlu0 %1257
    %v1260 = vadd.f32 %v1249, %v1258
    %v1261 = vadd.f32 %v1250, %v1258
    %v1262 = vtanh.pop %v1260
    %v1263 = vtanh.pop %v1261
    %1266 = vrot.lane.b32.xlu0 %v1262, 96
    %v1267 = vpop.permute.xlu0 %1266
    %1268 = vrot.lane.b32.xlu0 %v1263, 96
    %v1269 = vpop.permute.xlu0 %1268
    %v1270 = vsel %vm299, %v1267, %v1269
    %v1273 = vmul.f32 %v1245, %v1270
    %v1274 = vmul.f32 %v1247, %v1269
    %1275 = vmatprep.subr.bf16.mxu0 0
    %1276 = vmatpush1.bf16.msra.mxu0 0
    %1277 = vmatprep.subr.bf16.mxu0 0
    %1278 = vmatpush1.bf16.msra.mxu0 0
    %1279 = vmatprep.subr.bf16.mxu0 %v279
    %1280 = vmatpush1.bf16.msra.mxu0 %v278
    %1281 = vmatprep.subr.bf16.mxu0 %v276
    %1282 = vmatpush1.bf16.msra.mxu0 %v275
    %1283 = vmatprep.subr.bf16.mxu0 %v273
    %1284 = vmatpush1.bf16.msra.mxu0 %v272
    %1285 = vmatprep.subr.bf16.mxu0 %v270
    %1286 = vmatpush1.bf16.msra.mxu0 %v269
    %1287 = vmatprep.subr.bf16.mxu0 %v267
    %1288 = vmatpush1.bf16.msra.mxu0 %v266
    %1289 = vmatprep.subr.bf16.mxu0 %v264
    %1290 = vmatpush1.bf16.msra.mxu0 %v263
    %1291 = vmatprep.subr.bf16.mxu0 0
    %1292 = vmatpush2.bf16.msra.mxu0 0
    %1293 = vmatprep.subr.bf16.mxu0 0
    %1294 = vmatpush2.bf16.msra.mxu0 0
    %1295 = vmatprep.subr.bf16.mxu0 0
    %1296 = vmatpush2.bf16.msra.mxu0 0
    %1297 = vmatprep.subr.bf16.mxu0 0
    %1298 = vmatpush2.bf16.msra.mxu0 0
    %1299 = vmatprep.subr.bf16.mxu0 0
    %1300 = vmatpush2.bf16.msra.mxu0 0
    %1301 = vmatprep.subr.bf16.mxu0 0
    %1302 = vmatpush2.bf16.msra.mxu0 0
    %1303 = vmatprep.subr.bf16.mxu0 0
    %1304 = vmatpush2.bf16.msra.mxu0 0
    %1305 = vmatprep.subr.bf16.mxu0 0
    %1306 = vmatpush2.bf16.msra.mxu0 0
    %1307 = vmatprep.mubr.bf16.mxu0 0
    %1308 = vmatmul.mubr.bf16.gmra.mxu0 %v1144
    %v1309 = vpop.f32.mrf.mxu0
    %v1310 = vadd.f32 0.0, %v1309
    %v1311 = vpop.f32.mrf.mxu0
    %v1312 = vadd.f32 0.0, %v1311
    %v1313 = vpop.f32.mrf.mxu0
    %v1314 = vpop.f32.mrf.mxu0
    %1315 = vdwg.mxu0
    %1316 = vmatprep.subr.bf16.mxu0 0
    %1317 = vmatpush1.bf16.msra.mxu0 0
    %1318 = vmatprep.subr.bf16.mxu0 0
    %1319 = vmatpush1.bf16.msra.mxu0 0
    %1320 = vmatprep.subr.bf16.mxu0 0
    %1321 = vmatpush1.bf16.msra.mxu0 %v280
    %1322 = vmatprep.subr.bf16.mxu0 0
    %1323 = vmatpush1.bf16.msra.mxu0 %v277
    %1324 = vmatprep.subr.bf16.mxu0 0
    %1325 = vmatpush1.bf16.msra.mxu0 %v274
    %1326 = vmatprep.subr.bf16.mxu0 0
    %1327 = vmatpush1.bf16.msra.mxu0 %v271
    %1328 = vmatprep.subr.bf16.mxu0 0
    %1329 = vmatpush1.bf16.msra.mxu0 %v268
    %1330 = vmatprep.subr.bf16.mxu0 0
    %1331 = vmatpush1.bf16.msra.mxu0 %v265
    %1332 = vmatprep.subr.bf16.mxu0 0
    %1333 = vmatpush2.bf16.msra.mxu0 0
    %1334 = vmatprep.subr.bf16.mxu0 0
    %1335 = vmatpush2.bf16.msra.mxu0 0
    %1336 = vmatprep.subr.bf16.mxu0 0
    %1337 = vmatpush2.bf16.msra.mxu0 0
    %1338 = vmatprep.subr.bf16.mxu0 0
    %1339 = vmatpush2.bf16.msra.mxu0 0
    %1340 = vmatprep.subr.bf16.mxu0 0
    %1341 = vmatpush2.bf16.msra.mxu0 0
    %1342 = vmatprep.subr.bf16.mxu0 0
    %1343 = vmatpush2.bf16.msra.mxu0 0
    %1344 = vmatprep.subr.bf16.mxu0 0
    %1345 = vmatpush2.bf16.msra.mxu0 0
    %1346 = vmatprep.subr.bf16.mxu0 0
    %1347 = vmatpush2.bf16.msra.mxu0 0
    %1348 = vmatprep.mubr.bf16.mxu0 0
    %1349 = vmatmul.mubr.bf16.gmra.mxu0 %v1144
    %v1350 = vpop.f32.mrf.mxu0
    %v1351 = vadd.f32 0.0, %v1350
    %v1352 = vpop.f32.mrf.mxu0
    %v1353 = vpop.f32.mrf.mxu0
    %v1354 = vpop.f32.mrf.mxu0
    %1355 = vdwg.mxu0
    %v1359 = vrot.slane %v1310, 4
    %v1360 = vrot.slane %v1312, 4
    %v1361 = vrot.slane %v1351, 4
    %v1365 = vadd.f32 %v112, %v1359
    %v1366 = vadd.f32 %v114, %v1360
    %v1367 = vadd.f32 %v155, %v1361
    %v1368 = vxor.u32 %v1365, 2147483648
    %v1369 = vxor.u32 %v1366, 2147483648
    %v1370 = vxor.u32 %v1367, 2147483648
    %v1371 = vmul.f32 %v1368, 1.442695
    %v1372 = vpow.pop %v1371
    %v1373 = vmul.f32 %v1369, 1.442695
    %v1374 = vpow.pop %v1373
    %v1375 = vmul.f32 %v1370, 1.442695
    %v1376 = vpow.pop %v1375
    %v1377 = vadd.f32 %v1372, 1.0
    %v1378 = vadd.f32 %v1374, 1.0
    %v1379 = vadd.f32 %v1376, 1.0
    %v1380 = vrcp.pop %v1377
    %v1381 = vmul.f32 1.0, %v1380
    %v1382 = vrcp.pop %v1378
    %v1383 = vmul.f32 1.0, %v1382
    %v1384 = vrcp.pop %v1379
    %v1385 = vmul.f32 1.0, %v1384
    %v1386 = vtanh.pop %v1367
    %v1389 = vrot.slane %v1024, 6
    %v1390 = vrot.slane %v1025, 6
    %v1393 = vmul.f32 %v1381, %v1389
    %v1394 = vmul.f32 %v1383, %v1390
    %1396 = vrot.lane.b32.xlu0 %v1386, 96
    %v1397 = vpop.permute.xlu0 %1396
    %v1399 = vmul.f32 %v1381, %v1397
    %1401 = vrot.lane.b32.xlu0 %v1399, 96
    %v1402 = vpop.permute.xlu0 %1401
    %v1404 = vadd.f32 %v1393, %v1402
    %v1405 = vadd.f32 %v1394, %v1402
    %v1406 = vtanh.pop %v1404
    %v1407 = vtanh.pop %v1405
    %1410 = vrot.lane.b32.xlu0 %v1406, 96
    %v1411 = vpop.permute.xlu0 %1410
    %1412 = vrot.lane.b32.xlu0 %v1407, 96
    %v1413 = vpop.permute.xlu0 %1412
    %v1414 = vsel %vm299, %v1411, %v1413
    %v1417 = vmul.f32 %v1383, %v1414
    %v1418 = vmul.f32 %v1385, %v1413
    %v1419 = vpack.c.bf16 %v1417, %v1417
    %v1420 = vpack.c.bf16 %v1418, %v1418
    %v1421 = vpack.c.bf16 %v1273, %v1273
    %v1422 = vpack.c.bf16 %v1274, %v1274
    %1425 = vrot.lane.b32.xlu0 %v1421, 64
    %v1426 = vpop.permute.xlu0 %1425
    %1427 = vrot.lane.b32.xlu0 %v1422, 64
    %v1428 = vpop.permute.xlu0 %1427
    %v1429 = vsel %vm665, %v1426, %v1428
    %v1431 = vsel %vm299, %v1429, 0
    %1433 = vmatprep.subr.bf16.mxu0 0
    %1434 = vmatpush1.bf16.msra.mxu0 0
    %1435 = vmatprep.subr.bf16.mxu0 0
    %1436 = vmatpush1.bf16.msra.mxu0 0
    %1437 = vmatprep.subr.bf16.mxu0 %v558
    %1438 = vmatpush1.bf16.msra.mxu0 %v557
    %1439 = vmatprep.subr.bf16.mxu0 %v555
    %1440 = vmatpush1.bf16.msra.mxu0 %v554
    %1441 = vmatprep.subr.bf16.mxu0 %v552
    %1442 = vmatpush1.bf16.msra.mxu0 %v551
    %1443 = vmatprep.subr.bf16.mxu0 %v549
    %1444 = vmatpush1.bf16.msra.mxu0 %v548
    %1445 = vmatprep.subr.bf16.mxu0 %v546
    %1446 = vmatpush1.bf16.msra.mxu0 %v545
    %1447 = vmatprep.subr.bf16.mxu0 %v543
    %1448 = vmatpush1.bf16.msra.mxu0 %v542
    %1449 = vmatprep.subr.bf16.mxu0 0
    %1450 = vmatpush2.bf16.msra.mxu0 0
    %1451 = vmatprep.subr.bf16.mxu0 0
    %1452 = vmatpush2.bf16.msra.mxu0 0
    %1453 = vmatprep.subr.bf16.mxu0 0
    %1454 = vmatpush2.bf16.msra.mxu0 0
    %1455 = vmatprep.subr.bf16.mxu0 0
    %1456 = vmatpush2.bf16.msra.mxu0 0
    %1457 = vmatprep.subr.bf16.mxu0 0
    %1458 = vmatpush2.bf16.msra.mxu0 0
    %1459 = vmatprep.subr.bf16.mxu0 0
    %1460 = vmatpush2.bf16.msra.mxu0 0
    %1461 = vmatprep.subr.bf16.mxu0 0
    %1462 = vmatpush2.bf16.msra.mxu0 0
    %1463 = vmatprep.subr.bf16.mxu0 0
    %1464 = vmatpush2.bf16.msra.mxu0 0
    %1465 = vmatprep.mubr.bf16.mxu0 0
    %1466 = vmatmul.mubr.bf16.gmra.mxu0 %v1431
    %v1467 = vpop.f32.mrf.mxu0
    %v1468 = vadd.f32 0.0, %v1467
    %v1469 = vpop.f32.mrf.mxu0
    %v1470 = vadd.f32 0.0, %v1469
    %v1471 = vpop.f32.mrf.mxu0
    %v1472 = vpop.f32.mrf.mxu0
    %1473 = vdwg.mxu0
    %1474 = vmatprep.subr.bf16.mxu0 0
    %1475 = vmatpush1.bf16.msra.mxu0 0
    %1476 = vmatprep.subr.bf16.mxu0 0
    %1477 = vmatpush1.bf16.msra.mxu0 0
    %1478 = vmatprep.subr.bf16.mxu0 0
    %1479 = vmatpush1.bf16.msra.mxu0 %v559
    %1480 = vmatprep.subr.bf16.mxu0 0
    %1481 = vmatpush1.bf16.msra.mxu0 %v556
    %1482 = vmatprep.subr.bf16.mxu0 0
    %1483 = vmatpush1.bf16.msra.mxu0 %v553
    %1484 = vmatprep.subr.bf16.mxu0 0
    %1485 = vmatpush1.bf16.msra.mxu0 %v550
    %1486 = vmatprep.subr.bf16.mxu0 0
    %1487 = vmatpush1.bf16.msra.mxu0 %v547
    %1488 = vmatprep.subr.bf16.mxu0 0
    %1489 = vmatpush1.bf16.msra.mxu0 %v544
    %1490 = vmatprep.subr.bf16.mxu0 0
    %1491 = vmatpush2.bf16.msra.mxu0 0
    %1492 = vmatprep.subr.bf16.mxu0 0
    %1493 = vmatpush2.bf16.msra.mxu0 0
    %1494 = vmatprep.subr.bf16.mxu0 0
    %1495 = vmatpush2.bf16.msra.mxu0 0
    %1496 = vmatprep.subr.bf16.mxu0 0
    %1497 = vmatpush2.bf16.msra.mxu0 0
    %1498 = vmatprep.subr.bf16.mxu0 0
    %1499 = vmatpush2.bf16.msra.mxu0 0
    %1500 = vmatprep.subr.bf16.mxu0 0
    %1501 = vmatpush2.bf16.msra.mxu0 0
    %1502 = vmatprep.subr.bf16.mxu0 0
    %1503 = vmatpush2.bf16.msra.mxu0 0
    %1504 = vmatprep.subr.bf16.mxu0 0
    %1505 = vmatpush2.bf16.msra.mxu0 0
    %1506 = vmatprep.mubr.bf16.mxu0 0
    %1507 = vmatmul.mubr.bf16.gmra.mxu0 %v1431
    %v1508 = vpop.f32.mrf.mxu0
    %v1509 = vadd.f32 0.0, %v1508
    %v1510 = vpop.f32.mrf.mxu0
    %v1511 = vpop.f32.mrf.mxu0
    %v1512 = vpop.f32.mrf.mxu0
    %1513 = vdwg.mxu0
    %v1516 = vrot.slane %v1419, 2
    %v1517 = vrot.slane %v1420, 2
    %1518 = vrot.lane.b32.xlu0 %v1516, 64
    %v1519 = vpop.permute.xlu0 %1518
    %1520 = vrot.lane.b32.xlu0 %v1517, 64
    %v1521 = vpop.permute.xlu0 %1520
    %v1522 = vsel %vm665, %v1519, %v1521
    %v1524 = vsel %vm299, %v1522, 0
    %1526 = vmatprep.subr.bf16.mxu0 0
    %1527 = vmatpush1.bf16.msra.mxu0 0
    %1528 = vmatprep.subr.bf16.mxu0 0
    %1529 = vmatpush1.bf16.msra.mxu0 0
    %1530 = vmatprep.subr.bf16.mxu0 %v743
    %1531 = vmatpush1.bf16.msra.mxu0 %v742
    %1532 = vmatprep.subr.bf16.mxu0 %v740
    %1533 = vmatpush1.bf16.msra.mxu0 %v739
    %1534 = vmatprep.subr.bf16.mxu0 %v737
    %1535 = vmatpush1.bf16.msra.mxu0 %v736
    %1536 = vmatprep.subr.bf16.mxu0 %v734
    %1537 = vmatpush1.bf16.msra.mxu0 %v733
    %1538 = vmatprep.subr.bf16.mxu0 %v731
    %1539 = vmatpush1.bf16.msra.mxu0 %v730
    %1540 = vmatprep.subr.bf16.mxu0 %v728
    %1541 = vmatpush1.bf16.msra.mxu0 %v727
    %1542 = vmatprep.subr.bf16.mxu0 0
    %1543 = vmatpush2.bf16.msra.mxu0 0
    %1544 = vmatprep.subr.bf16.mxu0 0
    %1545 = vmatpush2.bf16.msra.mxu0 0
    %1546 = vmatprep.subr.bf16.mxu0 0
    %1547 = vmatpush2.bf16.msra.mxu0 0
    %1548 = vmatprep.subr.bf16.mxu0 0
    %1549 = vmatpush2.bf16.msra.mxu0 0
    %1550 = vmatprep.subr.bf16.mxu0 0
    %1551 = vmatpush2.bf16.msra.mxu0 0
    %1552 = vmatprep.subr.bf16.mxu0 0
    %1553 = vmatpush2.bf16.msra.mxu0 0
    %1554 = vmatprep.subr.bf16.mxu0 0
    %1555 = vmatpush2.bf16.msra.mxu0 0
    %1556 = vmatprep.subr.bf16.mxu0 0
    %1557 = vmatpush2.bf16.msra.mxu0 0
    %1558 = vmatprep.mubr.bf16.mxu0 0
    %1559 = vmatmul.mubr.bf16.gmra.mxu0 %v1524
    %v1560 = vpop.f32.mrf.mxu0
    %v1561 = vadd.f32 %v1468, %v1560
    %v1562 = vpop.f32.mrf.mxu0
    %v1563 = vadd.f32 %v1470, %v1562
    %v1564 = vpop.f32.mrf.mxu0
    %v1565 = vpop.f32.mrf.mxu0
    %1566 = vdwg.mxu0
    %1567 = vmatprep.subr.bf16.mxu0 0
    %1568 = vmatpush1.bf16.msra.mxu0 0
    %1569 = vmatprep.subr.bf16.mxu0 0
    %1570 = vmatpush1.bf16.msra.mxu0 0
    %1571 = vmatprep.subr.bf16.mxu0 0
    %1572 = vmatpush1.bf16.msra.mxu0 %v744
    %1573 = vmatprep.subr.bf16.mxu0 0
    %1574 = vmatpush1.bf16.msra.mxu0 %v741
    %1575 = vmatprep.subr.bf16.mxu0 0
    %1576 = vmatpush1.bf16.msra.mxu0 %v738
    %1577 = vmatprep.subr.bf16.mxu0 0
    %1578 = vmatpush1.bf16.msra.mxu0 %v735
    %1579 = vmatprep.subr.bf16.mxu0 0
    %1580 = vmatpush1.bf16.msra.mxu0 %v732
    %1581 = vmatprep.subr.bf16.mxu0 0
    %1582 = vmatpush1.bf16.msra.mxu0 %v729
    %1583 = vmatprep.subr.bf16.mxu0 0
    %1584 = vmatpush2.bf16.msra.mxu0 0
    %1585 = vmatprep.subr.bf16.mxu0 0
    %1586 = vmatpush2.bf16.msra.mxu0 0
    %1587 = vmatprep.subr.bf16.mxu0 0
    %1588 = vmatpush2.bf16.msra.mxu0 0
    %1589 = vmatprep.subr.bf16.mxu0 0
    %1590 = vmatpush2.bf16.msra.mxu0 0
    %1591 = vmatprep.subr.bf16.mxu0 0
    %1592 = vmatpush2.bf16.msra.mxu0 0
    %1593 = vmatprep.subr.bf16.mxu0 0
    %1594 = vmatpush2.bf16.msra.mxu0 0
    %1595 = vmatprep.subr.bf16.mxu0 0
    %1596 = vmatpush2.bf16.msra.mxu0 0
    %1597 = vmatprep.subr.bf16.mxu0 0
    %1598 = vmatpush2.bf16.msra.mxu0 0
    %1599 = vmatprep.mubr.bf16.mxu0 0
    %1600 = vmatmul.mubr.bf16.gmra.mxu0 %v1524
    %v1601 = vpop.f32.mrf.mxu0
    %v1602 = vadd.f32 %v1509, %v1601
    %v1603 = vpop.f32.mrf.mxu0
    %v1604 = vpop.f32.mrf.mxu0
    %v1605 = vpop.f32.mrf.mxu0
    %1606 = vdwg.mxu0
    %v1607 = vadd.f32 %v1561, %v167
    %v1608 = vadd.f32 %v1563, %v171
    %v1609 = vadd.f32 %v1602, %v175
    %v1610 = vxor.u32 %v1607, 2147483648
    %v1611 = vxor.u32 %v1608, 2147483648
    %v1612 = vxor.u32 %v1609, 2147483648
    %v1613 = vmul.f32 %v1610, 1.442695
    %v1614 = vpow.pop %v1613
    %v1615 = vmul.f32 %v1611, 1.442695
    %v1616 = vpow.pop %v1615
    %v1617 = vmul.f32 %v1612, 1.442695
    %v1618 = vpow.pop %v1617
    %v1619 = vadd.f32 %v1614, 1.0
    %v1620 = vadd.f32 %v1616, 1.0
    %v1621 = vadd.f32 %v1618, 1.0
    %v1622 = vrcp.pop %v1619
    %v1623 = vmul.f32 1.0, %v1622
    %v1624 = vrcp.pop %v1620
    %v1625 = vmul.f32 1.0, %v1624
    %v1626 = vrcp.pop %v1621
    %v1627 = vmul.f32 1.0, %v1626
    %v1628 = vtanh.pop %v1609
    %v1629 = vmul.f32 %v1623, %v1260
    %v1630 = vmul.f32 %v1625, %v1261
    %1632 = vrot.lane.b32.xlu0 %v1628, 96
    %v1633 = vpop.permute.xlu0 %1632
    %v1635 = vmul.f32 %v1623, %v1633
    %1637 = vrot.lane.b32.xlu0 %v1635, 96
    %v1638 = vpop.permute.xlu0 %1637
    %v1640 = vadd.f32 %v1629, %v1638
    %v1641 = vadd.f32 %v1630, %v1638
    %v1642 = vtanh.pop %v1640
    %v1643 = vtanh.pop %v1641
    %1646 = vrot.lane.b32.xlu0 %v1642, 96
    %v1647 = vpop.permute.xlu0 %1646
    %1648 = vrot.lane.b32.xlu0 %v1643, 96
    %v1649 = vpop.permute.xlu0 %1648
    %v1650 = vsel %vm299, %v1647, %v1649
    %v1653 = vmul.f32 %v1625, %v1650
    %v1654 = vmul.f32 %v1627, %v1649
    %1655 = vmatprep.subr.bf16.mxu0 0
    %1656 = vmatpush1.bf16.msra.mxu0 0
    %1657 = vmatprep.subr.bf16.mxu0 0
    %1658 = vmatpush1.bf16.msra.mxu0 0
    %1659 = vmatprep.subr.bf16.mxu0 %v279
    %1660 = vmatpush1.bf16.msra.mxu0 %v278
    %1661 = vmatprep.subr.bf16.mxu0 %v276
    %1662 = vmatpush1.bf16.msra.mxu0 %v275
    %1663 = vmatprep.subr.bf16.mxu0 %v273
    %1664 = vmatpush1.bf16.msra.mxu0 %v272
    %1665 = vmatprep.subr.bf16.mxu0 %v270
    %1666 = vmatpush1.bf16.msra.mxu0 %v269
    %1667 = vmatprep.subr.bf16.mxu0 %v267
    %1668 = vmatpush1.bf16.msra.mxu0 %v266
    %1669 = vmatprep.subr.bf16.mxu0 %v264
    %1670 = vmatpush1.bf16.msra.mxu0 %v263
    %1671 = vmatprep.subr.bf16.mxu0 0
    %1672 = vmatpush2.bf16.msra.mxu0 0
    %1673 = vmatprep.subr.bf16.mxu0 0
    %1674 = vmatpush2.bf16.msra.mxu0 0
    %1675 = vmatprep.subr.bf16.mxu0 0
    %1676 = vmatpush2.bf16.msra.mxu0 0
    %1677 = vmatprep.subr.bf16.mxu0 0
    %1678 = vmatpush2.bf16.msra.mxu0 0
    %1679 = vmatprep.subr.bf16.mxu0 0
    %1680 = vmatpush2.bf16.msra.mxu0 0
    %1681 = vmatprep.subr.bf16.mxu0 0
    %1682 = vmatpush2.bf16.msra.mxu0 0
    %1683 = vmatprep.subr.bf16.mxu0 0
    %1684 = vmatpush2.bf16.msra.mxu0 0
    %1685 = vmatprep.subr.bf16.mxu0 0
    %1686 = vmatpush2.bf16.msra.mxu0 0
    %1687 = vmatprep.mubr.bf16.mxu0 0
    %1688 = vmatmul.mubr.bf16.gmra.mxu0 %v1524
    %v1689 = vpop.f32.mrf.mxu0
    %v1690 = vadd.f32 0.0, %v1689
    %v1691 = vpop.f32.mrf.mxu0
    %v1692 = vadd.f32 0.0, %v1691
    %v1693 = vpop.f32.mrf.mxu0
    %v1694 = vpop.f32.mrf.mxu0
    %1695 = vdwg.mxu0
    %1696 = vmatprep.subr.bf16.mxu0 0
    %1697 = vmatpush1.bf16.msra.mxu0 0
    %1698 = vmatprep.subr.bf16.mxu0 0
    %1699 = vmatpush1.bf16.msra.mxu0 0
    %1700 = vmatprep.subr.bf16.mxu0 0
    %1701 = vmatpush1.bf16.msra.mxu0 %v280
    %1702 = vmatprep.subr.bf16.mxu0 0
    %1703 = vmatpush1.bf16.msra.mxu0 %v277
    %1704 = vmatprep.subr.bf16.mxu0 0
    %1705 = vmatpush1.bf16.msra.mxu0 %v274
    %1706 = vmatprep.subr.bf16.mxu0 0
    %1707 = vmatpush1.bf16.msra.mxu0 %v271
    %1708 = vmatprep.subr.bf16.mxu0 0
    %1709 = vmatpush1.bf16.msra.mxu0 %v268
    %1710 = vmatprep.subr.bf16.mxu0 0
    %1711 = vmatpush1.bf16.msra.mxu0 %v265
    %1712 = vmatprep.subr.bf16.mxu0 0
    %1713 = vmatpush2.bf16.msra.mxu0 0
    %1714 = vmatprep.subr.bf16.mxu0 0
    %1715 = vmatpush2.bf16.msra.mxu0 0
    %1716 = vmatprep.subr.bf16.mxu0 0
    %1717 = vmatpush2.bf16.msra.mxu0 0
    %1718 = vmatprep.subr.bf16.mxu0 0
    %1719 = vmatpush2.bf16.msra.mxu0 0
    %1720 = vmatprep.subr.bf16.mxu0 0
    %1721 = vmatpush2.bf16.msra.mxu0 0
    %1722 = vmatprep.subr.bf16.mxu0 0
    %1723 = vmatpush2.bf16.msra.mxu0 0
    %1724 = vmatprep.subr.bf16.mxu0 0
    %1725 = vmatpush2.bf16.msra.mxu0 0
    %1726 = vmatprep.subr.bf16.mxu0 0
    %1727 = vmatpush2.bf16.msra.mxu0 0
    %1728 = vmatprep.mubr.bf16.mxu0 0
    %1729 = vmatmul.mubr.bf16.gmra.mxu0 %v1524
    %v1730 = vpop.f32.mrf.mxu0
    %v1731 = vadd.f32 0.0, %v1730
    %v1732 = vpop.f32.mrf.mxu0
    %v1733 = vpop.f32.mrf.mxu0
    %v1734 = vpop.f32.mrf.mxu0
    %1735 = vdwg.mxu0
    %v1739 = vrot.slane %v1690, 2
    %v1740 = vrot.slane %v1692, 2
    %v1741 = vrot.slane %v1731, 2
    %v1745 = vadd.f32 %v112, %v1739
    %v1746 = vadd.f32 %v114, %v1740
    %v1747 = vadd.f32 %v155, %v1741
    %v1748 = vxor.u32 %v1745, 2147483648
    %v1749 = vxor.u32 %v1746, 2147483648
    %v1750 = vxor.u32 %v1747, 2147483648
    %v1751 = vmul.f32 %v1748, 1.442695
    %v1752 = vpow.pop %v1751
    %v1753 = vmul.f32 %v1749, 1.442695
    %v1754 = vpow.pop %v1753
    %v1755 = vmul.f32 %v1750, 1.442695
    %v1756 = vpow.pop %v1755
    %v1757 = vadd.f32 %v1752, 1.0
    %v1758 = vadd.f32 %v1754, 1.0
    %v1759 = vadd.f32 %v1756, 1.0
    %v1760 = vrcp.pop %v1757
    %v1761 = vmul.f32 1.0, %v1760
    %v1762 = vrcp.pop %v1758
    %v1763 = vmul.f32 1.0, %v1762
    %v1764 = vrcp.pop %v1759
    %v1765 = vmul.f32 1.0, %v1764
    %v1766 = vtanh.pop %v1747
    %v1769 = vrot.slane %v1404, 6
    %v1770 = vrot.slane %v1405, 6
    %v1773 = vmul.f32 %v1761, %v1769
    %v1774 = vmul.f32 %v1763, %v1770
    %1776 = vrot.lane.b32.xlu0 %v1766, 96
    %v1777 = vpop.permute.xlu0 %1776
    %v1779 = vmul.f32 %v1761, %v1777
    %1781 = vrot.lane.b32.xlu0 %v1779, 96
    %v1782 = vpop.permute.xlu0 %1781
    %v1784 = vadd.f32 %v1773, %v1782
    %v1785 = vadd.f32 %v1774, %v1782
    %v1786 = vtanh.pop %v1784
    %v1787 = vtanh.pop %v1785
    %1790 = vrot.lane.b32.xlu0 %v1786, 96
    %v1791 = vpop.permute.xlu0 %1790
    %1792 = vrot.lane.b32.xlu0 %v1787, 96
    %v1793 = vpop.permute.xlu0 %1792
    %v1794 = vsel %vm299, %v1791, %v1793
    %v1797 = vmul.f32 %v1763, %v1794
    %v1798 = vmul.f32 %v1765, %v1793
    %v1799 = vpack.c.bf16 %v1797, %v1797
    %v1800 = vpack.c.bf16 %v1798, %v1798
    %v1801 = vpack.c.bf16 %v1653, %v1653
    %v1802 = vpack.c.bf16 %v1654, %v1654
    %1805 = vrot.lane.b32.xlu0 %v1801, 64
    %v1806 = vpop.permute.xlu0 %1805
    %1807 = vrot.lane.b32.xlu0 %v1802, 64
    %v1808 = vpop.permute.xlu0 %1807
    %v1809 = vsel %vm665, %v1806, %v1808
    %v1811 = vsel %vm299, %v1809, 0
    %1813 = vmatprep.subr.bf16.mxu0 0
    %1814 = vmatpush1.bf16.msra.mxu0 0
    %1815 = vmatprep.subr.bf16.mxu0 0
    %1816 = vmatpush1.bf16.msra.mxu0 0
    %1817 = vmatprep.subr.bf16.mxu0 %v558
    %1818 = vmatpush1.bf16.msra.mxu0 %v557
    %1819 = vmatprep.subr.bf16.mxu0 %v555
    %1820 = vmatpush1.bf16.msra.mxu0 %v554
    %1821 = vmatprep.subr.bf16.mxu0 %v552
    %1822 = vmatpush1.bf16.msra.mxu0 %v551
    %1823 = vmatprep.subr.bf16.mxu0 %v549
    %1824 = vmatpush1.bf16.msra.mxu0 %v548
    %1825 = vmatprep.subr.bf16.mxu0 %v546
    %1826 = vmatpush1.bf16.msra.mxu0 %v545
    %1827 = vmatprep.subr.bf16.mxu0 %v543
    %1828 = vmatpush1.bf16.msra.mxu0 %v542
    %1829 = vmatprep.subr.bf16.mxu0 0
    %1830 = vmatpush2.bf16.msra.mxu0 0
    %1831 = vmatprep.subr.bf16.mxu0 0
    %1832 = vmatpush2.bf16.msra.mxu0 0
    %1833 = vmatprep.subr.bf16.mxu0 0
    %1834 = vmatpush2.bf16.msra.mxu0 0
    %1835 = vmatprep.subr.bf16.mxu0 0
    %1836 = vmatpush2.bf16.msra.mxu0 0
    %1837 = vmatprep.subr.bf16.mxu0 0
    %1838 = vmatpush2.bf16.msra.mxu0 0
    %1839 = vmatprep.subr.bf16.mxu0 0
    %1840 = vmatpush2.bf16.msra.mxu0 0
    %1841 = vmatprep.subr.bf16.mxu0 0
    %1842 = vmatpush2.bf16.msra.mxu0 0
    %1843 = vmatprep.subr.bf16.mxu0 0
    %1844 = vmatpush2.bf16.msra.mxu0 0
    %1845 = vmatprep.mubr.bf16.mxu0 0
    %1846 = vmatmul.mubr.bf16.gmra.mxu0 %v1811
    %v1847 = vpop.f32.mrf.mxu0
    %v1848 = vadd.f32 0.0, %v1847
    %v1849 = vpop.f32.mrf.mxu0
    %v1850 = vadd.f32 0.0, %v1849
    %v1851 = vpop.f32.mrf.mxu0
    %v1852 = vpop.f32.mrf.mxu0
    %1853 = vdwg.mxu0
    %1854 = vmatprep.subr.bf16.mxu0 0
    %1855 = vmatpush1.bf16.msra.mxu0 0
    %1856 = vmatprep.subr.bf16.mxu0 0
    %1857 = vmatpush1.bf16.msra.mxu0 0
    %1858 = vmatprep.subr.bf16.mxu0 0
    %1859 = vmatpush1.bf16.msra.mxu0 %v559
    %1860 = vmatprep.subr.bf16.mxu0 0
    %1861 = vmatpush1.bf16.msra.mxu0 %v556
    %1862 = vmatprep.subr.bf16.mxu0 0
    %1863 = vmatpush1.bf16.msra.mxu0 %v553
    %1864 = vmatprep.subr.bf16.mxu0 0
    %1865 = vmatpush1.bf16.msra.mxu0 %v550
    %1866 = vmatprep.subr.bf16.mxu0 0
    %1867 = vmatpush1.bf16.msra.mxu0 %v547
    %1868 = vmatprep.subr.bf16.mxu0 0
    %1869 = vmatpush1.bf16.msra.mxu0 %v544
    %1870 = vmatprep.subr.bf16.mxu0 0
    %1871 = vmatpush2.bf16.msra.mxu0 0
    %1872 = vmatprep.subr.bf16.mxu0 0
    %1873 = vmatpush2.bf16.msra.mxu0 0
    %1874 = vmatprep.subr.bf16.mxu0 0
    %1875 = vmatpush2.bf16.msra.mxu0 0
    %1876 = vmatprep.subr.bf16.mxu0 0
    %1877 = vmatpush2.bf16.msra.mxu0 0
    %1878 = vmatprep.subr.bf16.mxu0 0
    %1879 = vmatpush2.bf16.msra.mxu0 0
    %1880 = vmatprep.subr.bf16.mxu0 0
    %1881 = vmatpush2.bf16.msra.mxu0 0
    %1882 = vmatprep.subr.bf16.mxu0 0
    %1883 = vmatpush2.bf16.msra.mxu0 0
    %1884 = vmatprep.subr.bf16.mxu0 0
    %1885 = vmatpush2.bf16.msra.mxu0 0
    %1886 = vmatprep.mubr.bf16.mxu0 0
    %1887 = vmatmul.mubr.bf16.gmra.mxu0 %v1811
    %v1888 = vpop.f32.mrf.mxu0
    %v1889 = vadd.f32 0.0, %v1888
    %v1890 = vpop.f32.mrf.mxu0
    %v1891 = vpop.f32.mrf.mxu0
    %v1892 = vpop.f32.mrf.mxu0
    %1893 = vdwg.mxu0
    %v1896 = vrot.slane %v1799, 3
    %v1897 = vrot.slane %v1800, 3
    %1898 = vrot.lane.b32.xlu0 %v1896, 64
    %v1899 = vpop.permute.xlu0 %1898
    %1900 = vrot.lane.b32.xlu0 %v1897, 64
    %v1901 = vpop.permute.xlu0 %1900
    %v1902 = vsel %vm665, %v1899, %v1901
    %v1904 = vsel %vm299, %v1902, 0
    %1906 = vmatprep.subr.bf16.mxu0 0
    %1907 = vmatpush1.bf16.msra.mxu0 0
    %1908 = vmatprep.subr.bf16.mxu0 0
    %1909 = vmatpush1.bf16.msra.mxu0 0
    %1910 = vmatprep.subr.bf16.mxu0 %v743
    %1911 = vmatpush1.bf16.msra.mxu0 %v742
    %1912 = vmatprep.subr.bf16.mxu0 %v740
    %1913 = vmatpush1.bf16.msra.mxu0 %v739
    %1914 = vmatprep.subr.bf16.mxu0 %v737
    %1915 = vmatpush1.bf16.msra.mxu0 %v736
    %1916 = vmatprep.subr.bf16.mxu0 %v734
    %1917 = vmatpush1.bf16.msra.mxu0 %v733
    %1918 = vmatprep.subr.bf16.mxu0 %v731
    %1919 = vmatpush1.bf16.msra.mxu0 %v730
    %1920 = vmatprep.subr.bf16.mxu0 %v728
    %1921 = vmatpush1.bf16.msra.mxu0 %v727
    %1922 = vmatprep.subr.bf16.mxu0 0
    %1923 = vmatpush2.bf16.msra.mxu0 0
    %1924 = vmatprep.subr.bf16.mxu0 0
    %1925 = vmatpush2.bf16.msra.mxu0 0
    %1926 = vmatprep.subr.bf16.mxu0 0
    %1927 = vmatpush2.bf16.msra.mxu0 0
    %1928 = vmatprep.subr.bf16.mxu0 0
    %1929 = vmatpush2.bf16.msra.mxu0 0
    %1930 = vmatprep.subr.bf16.mxu0 0
    %1931 = vmatpush2.bf16.msra.mxu0 0
    %1932 = vmatprep.subr.bf16.mxu0 0
    %1933 = vmatpush2.bf16.msra.mxu0 0
    %1934 = vmatprep.subr.bf16.mxu0 0
    %1935 = vmatpush2.bf16.msra.mxu0 0
    %1936 = vmatprep.subr.bf16.mxu0 0
    %1937 = vmatpush2.bf16.msra.mxu0 0
    %1938 = vmatprep.mubr.bf16.mxu0 0
    %1939 = vmatmul.mubr.bf16.gmra.mxu0 %v1904
    %v1940 = vpop.f32.mrf.mxu0
    %v1941 = vadd.f32 %v1848, %v1940
    %v1942 = vpop.f32.mrf.mxu0
    %v1943 = vadd.f32 %v1850, %v1942
    %v1944 = vpop.f32.mrf.mxu0
    %v1945 = vpop.f32.mrf.mxu0
    %1946 = vdwg.mxu0
    %1947 = vmatprep.subr.bf16.mxu0 0
    %1948 = vmatpush1.bf16.msra.mxu0 0
    %1949 = vmatprep.subr.bf16.mxu0 0
    %1950 = vmatpush1.bf16.msra.mxu0 0
    %1951 = vmatprep.subr.bf16.mxu0 0
    %1952 = vmatpush1.bf16.msra.mxu0 %v744
    %1953 = vmatprep.subr.bf16.mxu0 0
    %1954 = vmatpush1.bf16.msra.mxu0 %v741
    %1955 = vmatprep.subr.bf16.mxu0 0
    %1956 = vmatpush1.bf16.msra.mxu0 %v738
    %1957 = vmatprep.subr.bf16.mxu0 0
    %1958 = vmatpush1.bf16.msra.mxu0 %v735
    %1959 = vmatprep.subr.bf16.mxu0 0
    %1960 = vmatpush1.bf16.msra.mxu0 %v732
    %1961 = vmatprep.subr.bf16.mxu0 0
    %1962 = vmatpush1.bf16.msra.mxu0 %v729
    %1963 = vmatprep.subr.bf16.mxu0 0
    %1964 = vmatpush2.bf16.msra.mxu0 0
    %1965 = vmatprep.subr.bf16.mxu0 0
    %1966 = vmatpush2.bf16.msra.mxu0 0
    %1967 = vmatprep.subr.bf16.mxu0 0
    %1968 = vmatpush2.bf16.msra.mxu0 0
    %1969 = vmatprep.subr.bf16.mxu0 0
    %1970 = vmatpush2.bf16.msra.mxu0 0
    %1971 = vmatprep.subr.bf16.mxu0 0
    %1972 = vmatpush2.bf16.msra.mxu0 0
    %1973 = vmatprep.subr.bf16.mxu0 0
    %1974 = vmatpush2.bf16.msra.mxu0 0
    %1975 = vmatprep.subr.bf16.mxu0 0
    %1976 = vmatpush2.bf16.msra.mxu0 0
    %1977 = vmatprep.subr.bf16.mxu0 0
    %1978 = vmatpush2.bf16.msra.mxu0 0
    %1979 = vmatprep.mubr.bf16.mxu0 0
    %1980 = vmatmul.mubr.bf16.gmra.mxu0 %v1904
    %v1981 = vpop.f32.mrf.mxu0
    %v1982 = vadd.f32 %v1889, %v1981
    %v1983 = vpop.f32.mrf.mxu0
    %v1984 = vpop.f32.mrf.mxu0
    %v1985 = vpop.f32.mrf.mxu0
    %1986 = vdwg.mxu0
    %v1987 = vadd.f32 %v1941, %v167
    %v1988 = vadd.f32 %v1943, %v171
    %v1989 = vadd.f32 %v1982, %v175
    %v1990 = vxor.u32 %v1987, 2147483648
    %v1991 = vxor.u32 %v1988, 2147483648
    %v1992 = vxor.u32 %v1989, 2147483648
    %v1993 = vmul.f32 %v1990, 1.442695
    %v1994 = vpow.pop %v1993
    %v1995 = vmul.f32 %v1991, 1.442695
    %v1996 = vpow.pop %v1995
    %v1997 = vmul.f32 %v1992, 1.442695
    %v1998 = vpow.pop %v1997
    %v1999 = vadd.f32 %v1994, 1.0
    %v2000 = vadd.f32 %v1996, 1.0
    %v2001 = vadd.f32 %v1998, 1.0
    %v2002 = vrcp.pop %v1999
    %v2003 = vmul.f32 1.0, %v2002
    %v2004 = vrcp.pop %v2000
    %v2005 = vmul.f32 1.0, %v2004
    %v2006 = vrcp.pop %v2001
    %v2007 = vmul.f32 1.0, %v2006
    %v2008 = vtanh.pop %v1989
    %v2009 = vmul.f32 %v2003, %v1640
    %v2010 = vmul.f32 %v2005, %v1641
    %2012 = vrot.lane.b32.xlu0 %v2008, 96
    %v2013 = vpop.permute.xlu0 %2012
    %v2015 = vmul.f32 %v2003, %v2013
    %2017 = vrot.lane.b32.xlu0 %v2015, 96
    %v2018 = vpop.permute.xlu0 %2017
    %v2020 = vadd.f32 %v2009, %v2018
    %v2021 = vadd.f32 %v2010, %v2018
    %v2022 = vtanh.pop %v2020
    %v2023 = vtanh.pop %v2021
    %2026 = vrot.lane.b32.xlu0 %v2022, 96
    %v2027 = vpop.permute.xlu0 %2026
    %2028 = vrot.lane.b32.xlu0 %v2023, 96
    %v2029 = vpop.permute.xlu0 %2028
    %v2030 = vsel %vm299, %v2027, %v2029
    %v2033 = vmul.f32 %v2005, %v2030
    %v2034 = vmul.f32 %v2007, %v2029
    %2035 = vmatprep.subr.bf16.mxu0 0
    %2036 = vmatpush1.bf16.msra.mxu0 0
    %2037 = vmatprep.subr.bf16.mxu0 0
    %2038 = vmatpush1.bf16.msra.mxu0 0
    %2039 = vmatprep.subr.bf16.mxu0 %v279
    %2040 = vmatpush1.bf16.msra.mxu0 %v278
    %2041 = vmatprep.subr.bf16.mxu0 %v276
    %2042 = vmatpush1.bf16.msra.mxu0 %v275
    %2043 = vmatprep.subr.bf16.mxu0 %v273
    %2044 = vmatpush1.bf16.msra.mxu0 %v272
    %2045 = vmatprep.subr.bf16.mxu0 %v270
    %2046 = vmatpush1.bf16.msra.mxu0 %v269
    %2047 = vmatprep.subr.bf16.mxu0 %v267
    %2048 = vmatpush1.bf16.msra.mxu0 %v266
    %2049 = vmatprep.subr.bf16.mxu0 %v264
    %2050 = vmatpush1.bf16.msra.mxu0 %v263
    %2051 = vmatprep.subr.bf16.mxu0 0
    %2052 = vmatpush2.bf16.msra.mxu0 0
    %2053 = vmatprep.subr.bf16.mxu0 0
    %2054 = vmatpush2.bf16.msra.mxu0 0
    %2055 = vmatprep.subr.bf16.mxu0 0
    %2056 = vmatpush2.bf16.msra.mxu0 0
    %2057 = vmatprep.subr.bf16.mxu0 0
    %2058 = vmatpush2.bf16.msra.mxu0 0
    %2059 = vmatprep.subr.bf16.mxu0 0
    %2060 = vmatpush2.bf16.msra.mxu0 0
    %2061 = vmatprep.subr.bf16.mxu0 0
    %2062 = vmatpush2.bf16.msra.mxu0 0
    %2063 = vmatprep.subr.bf16.mxu0 0
    %2064 = vmatpush2.bf16.msra.mxu0 0
    %2065 = vmatprep.subr.bf16.mxu0 0
    %2066 = vmatpush2.bf16.msra.mxu0 0
    %2067 = vmatprep.mubr.bf16.mxu0 0
    %2068 = vmatmul.mubr.bf16.gmra.mxu0 %v1904
    %v2069 = vpop.f32.mrf.mxu0
    %v2070 = vadd.f32 0.0, %v2069
    %v2071 = vpop.f32.mrf.mxu0
    %v2072 = vadd.f32 0.0, %v2071
    %v2073 = vpop.f32.mrf.mxu0
    %v2074 = vpop.f32.mrf.mxu0
    %2075 = vdwg.mxu0
    %2076 = vmatprep.subr.bf16.mxu0 0
    %2077 = vmatpush1.bf16.msra.mxu0 0
    %2078 = vmatprep.subr.bf16.mxu0 0
    %2079 = vmatpush1.bf16.msra.mxu0 0
    %2080 = vmatprep.subr.bf16.mxu0 0
    %2081 = vmatpush1.bf16.msra.mxu0 %v280
    %2082 = vmatprep.subr.bf16.mxu0 0
    %2083 = vmatpush1.bf16.msra.mxu0 %v277
    %2084 = vmatprep.subr.bf16.mxu0 0
    %2085 = vmatpush1.bf16.msra.mxu0 %v274
    %2086 = vmatprep.subr.bf16.mxu0 0
    %2087 = vmatpush1.bf16.msra.mxu0 %v271
    %2088 = vmatprep.subr.bf16.mxu0 0
    %2089 = vmatpush1.bf16.msra.mxu0 %v268
    %2090 = vmatprep.subr.bf16.mxu0 0
    %2091 = vmatpush1.bf16.msra.mxu0 %v265
    %2092 = vmatprep.subr.bf16.mxu0 0
    %2093 = vmatpush2.bf16.msra.mxu0 0
    %2094 = vmatprep.subr.bf16.mxu0 0
    %2095 = vmatpush2.bf16.msra.mxu0 0
    %2096 = vmatprep.subr.bf16.mxu0 0
    %2097 = vmatpush2.bf16.msra.mxu0 0
    %2098 = vmatprep.subr.bf16.mxu0 0
    %2099 = vmatpush2.bf16.msra.mxu0 0
    %2100 = vmatprep.subr.bf16.mxu0 0
    %2101 = vmatpush2.bf16.msra.mxu0 0
    %2102 = vmatprep.subr.bf16.mxu0 0
    %2103 = vmatpush2.bf16.msra.mxu0 0
    %2104 = vmatprep.subr.bf16.mxu0 0
    %2105 = vmatpush2.bf16.msra.mxu0 0
    %2106 = vmatprep.subr.bf16.mxu0 0
    %2107 = vmatpush2.bf16.msra.mxu0 0
    %2108 = vmatprep.mubr.bf16.mxu0 0
    %2109 = vmatmul.mubr.bf16.gmra.mxu0 %v1904
    %v2110 = vpop.f32.mrf.mxu0
    %v2111 = vadd.f32 0.0, %v2110
    %v2112 = vpop.f32.mrf.mxu0
    %v2113 = vpop.f32.mrf.mxu0
    %v2114 = vpop.f32.mrf.mxu0
    %2115 = vdwg.mxu0
    %v2116 = vadd.f32 %v116, %v2070
    %v2117 = vadd.f32 %v118, %v2072
    %v2118 = vadd.f32 %v158, %v2111
    %v2119 = vxor.u32 %v2116, 2147483648
    %v2120 = vxor.u32 %v2117, 2147483648
    %v2121 = vxor.u32 %v2118, 2147483648
    %v2122 = vmul.f32 %v2119, 1.442695
    %v2123 = vpow.pop %v2122
    %v2124 = vmul.f32 %v2120, 1.442695
    %v2125 = vpow.pop %v2124
    %v2126 = vmul.f32 %v2121, 1.442695
    %v2127 = vpow.pop %v2126
    %v2128 = vadd.f32 %v2123, 1.0
    %v2129 = vadd.f32 %v2125, 1.0
    %v2130 = vadd.f32 %v2127, 1.0
    %v2131 = vrcp.pop %v2128
    %v2132 = vmul.f32 1.0, %v2131
    %v2133 = vrcp.pop %v2129
    %v2134 = vmul.f32 1.0, %v2133
    %v2135 = vrcp.pop %v2130
    %v2136 = vmul.f32 1.0, %v2135
    %v2137 = vtanh.pop %v2118
    %v2140 = vrot.slane %v1784, 6
    %v2141 = vrot.slane %v1785, 6
    %v2144 = vmul.f32 %v2132, %v2140
    %v2145 = vmul.f32 %v2134, %v2141
    %2147 = vrot.lane.b32.xlu0 %v2137, 96
    %v2148 = vpop.permute.xlu0 %2147
    %v2150 = vmul.f32 %v2132, %v2148
    %2152 = vrot.lane.b32.xlu0 %v2150, 96
    %v2153 = vpop.permute.xlu0 %2152
    %v2155 = vadd.f32 %v2144, %v2153
    %v2156 = vadd.f32 %v2145, %v2153
    %v2157 = vtanh.pop %v2155
    %v2158 = vtanh.pop %v2156
    %2161 = vrot.lane.b32.xlu0 %v2157, 96
    %v2162 = vpop.permute.xlu0 %2161
    %2163 = vrot.lane.b32.xlu0 %v2158, 96
    %v2164 = vpop.permute.xlu0 %2163
    %v2165 = vsel %vm299, %v2162, %v2164
    %v2168 = vmul.f32 %v2134, %v2165
    %v2169 = vmul.f32 %v2136, %v2164
    %v2170 = vpack.c.bf16 %v2168, %v2168
    %v2171 = vpack.c.bf16 %v2169, %v2169
    %v2172 = vpack.c.bf16 %v2033, %v2033
    %v2173 = vpack.c.bf16 %v2034, %v2034
    %2176 = vrot.lane.b32.xlu0 %v2172, 64
    %v2177 = vpop.permute.xlu0 %2176
    %2178 = vrot.lane.b32.xlu0 %v2173, 64
    %v2179 = vpop.permute.xlu0 %2178
    %v2180 = vsel %vm665, %v2177, %v2179
    %v2182 = vsel %vm299, %v2180, 0
    %2184 = vmatprep.subr.bf16.mxu0 0
    %2185 = vmatpush1.bf16.msra.mxu0 0
    %2186 = vmatprep.subr.bf16.mxu0 0
    %2187 = vmatpush1.bf16.msra.mxu0 0
    %2188 = vmatprep.subr.bf16.mxu0 %v558
    %2189 = vmatpush1.bf16.msra.mxu0 %v557
    %2190 = vmatprep.subr.bf16.mxu0 %v555
    %2191 = vmatpush1.bf16.msra.mxu0 %v554
    %2192 = vmatprep.subr.bf16.mxu0 %v552
    %2193 = vmatpush1.bf16.msra.mxu0 %v551
    %2194 = vmatprep.subr.bf16.mxu0 %v549
    %2195 = vmatpush1.bf16.msra.mxu0 %v548
    %2196 = vmatprep.subr.bf16.mxu0 %v546
    %2197 = vmatpush1.bf16.msra.mxu0 %v545
    %2198 = vmatprep.subr.bf16.mxu0 %v543
    %2199 = vmatpush1.bf16.msra.mxu0 %v542
    %2200 = vmatprep.subr.bf16.mxu0 0
    %2201 = vmatpush2.bf16.msra.mxu0 0
    %2202 = vmatprep.subr.bf16.mxu0 0
    %2203 = vmatpush2.bf16.msra.mxu0 0
    %2204 = vmatprep.subr.bf16.mxu0 0
    %2205 = vmatpush2.bf16.msra.mxu0 0
    %2206 = vmatprep.subr.bf16.mxu0 0
    %2207 = vmatpush2.bf16.msra.mxu0 0
    %2208 = vmatprep.subr.bf16.mxu0 0
    %2209 = vmatpush2.bf16.msra.mxu0 0
    %2210 = vmatprep.subr.bf16.mxu0 0
    %2211 = vmatpush2.bf16.msra.mxu0 0
    %2212 = vmatprep.subr.bf16.mxu0 0
    %2213 = vmatpush2.bf16.msra.mxu0 0
    %2214 = vmatprep.subr.bf16.mxu0 0
    %2215 = vmatpush2.bf16.msra.mxu0 0
    %2216 = vmatprep.mubr.bf16.mxu0 0
    %2217 = vmatmul.mubr.bf16.gmra.mxu0 %v2182
    %v2218 = vpop.f32.mrf.mxu0
    %v2219 = vadd.f32 0.0, %v2218
    %v2220 = vpop.f32.mrf.mxu0
    %v2221 = vadd.f32 0.0, %v2220
    %v2222 = vpop.f32.mrf.mxu0
    %v2223 = vpop.f32.mrf.mxu0
    %2224 = vdwg.mxu0
    %2225 = vmatprep.subr.bf16.mxu0 0
    %2226 = vmatpush1.bf16.msra.mxu0 0
    %2227 = vmatprep.subr.bf16.mxu0 0
    %2228 = vmatpush1.bf16.msra.mxu0 0
    %2229 = vmatprep.subr.bf16.mxu0 0
    %2230 = vmatpush1.bf16.msra.mxu0 %v559
    %2231 = vmatprep.subr.bf16.mxu0 0
    %2232 = vmatpush1.bf16.msra.mxu0 %v556
    %2233 = vmatprep.subr.bf16.mxu0 0
    %2234 = vmatpush1.bf16.msra.mxu0 %v553
    %2235 = vmatprep.subr.bf16.mxu0 0
    %2236 = vmatpush1.bf16.msra.mxu0 %v550
    %2237 = vmatprep.subr.bf16.mxu0 0
    %2238 = vmatpush1.bf16.msra.mxu0 %v547
    %2239 = vmatprep.subr.bf16.mxu0 0
    %2240 = vmatpush1.bf16.msra.mxu0 %v544
    %2241 = vmatprep.subr.bf16.mxu0 0
    %2242 = vmatpush2.bf16.msra.mxu0 0
    %2243 = vmatprep.subr.bf16.mxu0 0
    %2244 = vmatpush2.bf16.msra.mxu0 0
    %2245 = vmatprep.subr.bf16.mxu0 0
    %2246 = vmatpush2.bf16.msra.mxu0 0
    %2247 = vmatprep.subr.bf16.mxu0 0
    %2248 = vmatpush2.bf16.msra.mxu0 0
    %2249 = vmatprep.subr.bf16.mxu0 0
    %2250 = vmatpush2.bf16.msra.mxu0 0
    %2251 = vmatprep.subr.bf16.mxu0 0
    %2252 = vmatpush2.bf16.msra.mxu0 0
    %2253 = vmatprep.subr.bf16.mxu0 0
    %2254 = vmatpush2.bf16.msra.mxu0 0
    %2255 = vmatprep.subr.bf16.mxu0 0
    %2256 = vmatpush2.bf16.msra.mxu0 0
    %2257 = vmatprep.mubr.bf16.mxu0 0
    %2258 = vmatmul.mubr.bf16.gmra.mxu0 %v2182
    %v2259 = vpop.f32.mrf.mxu0
    %v2260 = vadd.f32 0.0, %v2259
    %v2261 = vpop.f32.mrf.mxu0
    %v2262 = vpop.f32.mrf.mxu0
    %v2263 = vpop.f32.mrf.mxu0
    %2264 = vdwg.mxu0
    %2267 = vrot.lane.b32.xlu0 %v2170, 64
    %v2268 = vpop.permute.xlu0 %2267
    %2269 = vrot.lane.b32.xlu0 %v2171, 64
    %v2270 = vpop.permute.xlu0 %2269
    %v2271 = vsel %vm665, %v2268, %v2270
    %v2273 = vsel %vm299, %v2271, 0
    %2275 = vmatprep.subr.bf16.mxu0 0
    %2276 = vmatpush1.bf16.msra.mxu0 0
    %2277 = vmatprep.subr.bf16.mxu0 0
    %2278 = vmatpush1.bf16.msra.mxu0 0
    %2279 = vmatprep.subr.bf16.mxu0 %v743
    %2280 = vmatpush1.bf16.msra.mxu0 %v742
    %2281 = vmatprep.subr.bf16.mxu0 %v740
    %2282 = vmatpush1.bf16.msra.mxu0 %v739
    %2283 = vmatprep.subr.bf16.mxu0 %v737
    %2284 = vmatpush1.bf16.msra.mxu0 %v736
    %2285 = vmatprep.subr.bf16.mxu0 %v734
    %2286 = vmatpush1.bf16.msra.mxu0 %v733
    %2287 = vmatprep.subr.bf16.mxu0 %v731
    %2288 = vmatpush1.bf16.msra.mxu0 %v730
    %2289 = vmatprep.subr.bf16.mxu0 %v728
    %2290 = vmatpush1.bf16.msra.mxu0 %v727
    %2291 = vmatprep.subr.bf16.mxu0 0
    %2292 = vmatpush2.bf16.msra.mxu0 0
    %2293 = vmatprep.subr.bf16.mxu0 0
    %2294 = vmatpush2.bf16.msra.mxu0 0
    %2295 = vmatprep.subr.bf16.mxu0 0
    %2296 = vmatpush2.bf16.msra.mxu0 0
    %2297 = vmatprep.subr.bf16.mxu0 0
    %2298 = vmatpush2.bf16.msra.mxu0 0
    %2299 = vmatprep.subr.bf16.mxu0 0
    %2300 = vmatpush2.bf16.msra.mxu0 0
    %2301 = vmatprep.subr.bf16.mxu0 0
    %2302 = vmatpush2.bf16.msra.mxu0 0
    %2303 = vmatprep.subr.bf16.mxu0 0
    %2304 = vmatpush2.bf16.msra.mxu0 0
    %2305 = vmatprep.subr.bf16.mxu0 0
    %2306 = vmatpush2.bf16.msra.mxu0 0
    %2307 = vmatprep.mubr.bf16.mxu0 0
    %2308 = vmatmul.mubr.bf16.gmra.mxu0 %v2273
    %v2309 = vpop.f32.mrf.mxu0
    %v2310 = vadd.f32 %v2219, %v2309
    %v2311 = vpop.f32.mrf.mxu0
    %v2312 = vadd.f32 %v2221, %v2311
    %v2313 = vpop.f32.mrf.mxu0
    %v2314 = vpop.f32.mrf.mxu0
    %2315 = vdwg.mxu0
    %2316 = vmatprep.subr.bf16.mxu0 0
    %2317 = vmatpush1.bf16.msra.mxu0 0
    %2318 = vmatprep.subr.bf16.mxu0 0
    %2319 = vmatpush1.bf16.msra.mxu0 0
    %2320 = vmatprep.subr.bf16.mxu0 0
    %2321 = vmatpush1.bf16.msra.mxu0 %v744
    %2322 = vmatprep.subr.bf16.mxu0 0
    %2323 = vmatpush1.bf16.msra.mxu0 %v741
    %2324 = vmatprep.subr.bf16.mxu0 0
    %2325 = vmatpush1.bf16.msra.mxu0 %v738
    %2326 = vmatprep.subr.bf16.mxu0 0
    %2327 = vmatpush1.bf16.msra.mxu0 %v735
    %2328 = vmatprep.subr.bf16.mxu0 0
    %2329 = vmatpush1.bf16.msra.mxu0 %v732
    %2330 = vmatprep.subr.bf16.mxu0 0
    %2331 = vmatpush1.bf16.msra.mxu0 %v729
    %2332 = vmatprep.subr.bf16.mxu0 0
    %2333 = vmatpush2.bf16.msra.mxu0 0
    %2334 = vmatprep.subr.bf16.mxu0 0
    %2335 = vmatpush2.bf16.msra.mxu0 0
    %2336 = vmatprep.subr.bf16.mxu0 0
    %2337 = vmatpush2.bf16.msra.mxu0 0
    %2338 = vmatprep.subr.bf16.mxu0 0
    %2339 = vmatpush2.bf16.msra.mxu0 0
    %2340 = vmatprep.subr.bf16.mxu0 0
    %2341 = vmatpush2.bf16.msra.mxu0 0
    %2342 = vmatprep.subr.bf16.mxu0 0
    %2343 = vmatpush2.bf16.msra.mxu0 0
    %2344 = vmatprep.subr.bf16.mxu0 0
    %2345 = vmatpush2.bf16.msra.mxu0 0
    %2346 = vmatprep.subr.bf16.mxu0 0
    %2347 = vmatpush2.bf16.msra.mxu0 0
    %2348 = vmatprep.mubr.bf16.mxu0 0
    %2349 = vmatmul.mubr.bf16.gmra.mxu0 %v2273
    %v2350 = vpop.f32.mrf.mxu0
    %v2351 = vadd.f32 %v2260, %v2350
    %v2352 = vpop.f32.mrf.mxu0
    %v2353 = vpop.f32.mrf.mxu0
    %v2354 = vpop.f32.mrf.mxu0
    %2355 = vdwg.mxu0
    %v2356 = vadd.f32 %v2310, %v167
    %v2357 = vadd.f32 %v2312, %v171
    %v2358 = vadd.f32 %v2351, %v175
    %v2359 = vxor.u32 %v2356, 2147483648
    %v2360 = vxor.u32 %v2357, 2147483648
    %v2361 = vxor.u32 %v2358, 2147483648
    %v2362 = vmul.f32 %v2359, 1.442695
    %v2363 = vpow.pop %v2362
    %v2364 = vmul.f32 %v2360, 1.442695
    %v2365 = vpow.pop %v2364
    %v2366 = vmul.f32 %v2361, 1.442695
    %v2367 = vpow.pop %v2366
    %v2368 = vadd.f32 %v2363, 1.0
    %v2369 = vadd.f32 %v2365, 1.0
    %v2370 = vadd.f32 %v2367, 1.0
    %v2371 = vrcp.pop %v2368
    %v2372 = vmul.f32 1.0, %v2371
    %v2373 = vrcp.pop %v2369
    %v2374 = vmul.f32 1.0, %v2373
    %v2375 = vrcp.pop %v2370
    %v2376 = vmul.f32 1.0, %v2375
    %v2377 = vtanh.pop %v2358
    %v2378 = vmul.f32 %v2372, %v2020
    %v2379 = vmul.f32 %v2374, %v2021
    %2381 = vrot.lane.b32.xlu0 %v2377, 96
    %v2382 = vpop.permute.xlu0 %2381
    %v2384 = vmul.f32 %v2372, %v2382
    %2386 = vrot.lane.b32.xlu0 %v2384, 96
    %v2387 = vpop.permute.xlu0 %2386
    %v2389 = vadd.f32 %v2378, %v2387
    %v2390 = vadd.f32 %v2379, %v2387
    %v2391 = vtanh.pop %v2389
    %v2392 = vtanh.pop %v2390
    %2395 = vrot.lane.b32.xlu0 %v2391, 96
    %v2396 = vpop.permute.xlu0 %2395
    %2397 = vrot.lane.b32.xlu0 %v2392, 96
    %v2398 = vpop.permute.xlu0 %2397
    %v2399 = vsel %vm299, %v2396, %v2398
    %v2402 = vmul.f32 %v2374, %v2399
    %v2403 = vmul.f32 %v2376, %v2398
    %2404 = vmatprep.subr.bf16.mxu0 0
    %2405 = vmatpush1.bf16.msra.mxu0 0
    %2406 = vmatprep.subr.bf16.mxu0 0
    %2407 = vmatpush1.bf16.msra.mxu0 0
    %2408 = vmatprep.subr.bf16.mxu0 %v279
    %2409 = vmatpush1.bf16.msra.mxu0 %v278
    %2410 = vmatprep.subr.bf16.mxu0 %v276
    %2411 = vmatpush1.bf16.msra.mxu0 %v275
    %2412 = vmatprep.subr.bf16.mxu0 %v273
    %2413 = vmatpush1.bf16.msra.mxu0 %v272
    %2414 = vmatprep.subr.bf16.mxu0 %v270
    %2415 = vmatpush1.bf16.msra.mxu0 %v269
    %2416 = vmatprep.subr.bf16.mxu0 %v267
    %2417 = vmatpush1.bf16.msra.mxu0 %v266
    %2418 = vmatprep.subr.bf16.mxu0 %v264
    %2419 = vmatpush1.bf16.msra.mxu0 %v263
    %2420 = vmatprep.subr.bf16.mxu0 0
    %2421 = vmatpush2.bf16.msra.mxu0 0
    %2422 = vmatprep.subr.bf16.mxu0 0
    %2423 = vmatpush2.bf16.msra.mxu0 0
    %2424 = vmatprep.subr.bf16.mxu0 0
    %2425 = vmatpush2.bf16.msra.mxu0 0
    %2426 = vmatprep.subr.bf16.mxu0 0
    %2427 = vmatpush2.bf16.msra.mxu0 0
    %2428 = vmatprep.subr.bf16.mxu0 0
    %2429 = vmatpush2.bf16.msra.mxu0 0
    %2430 = vmatprep.subr.bf16.mxu0 0
    %2431 = vmatpush2.bf16.msra.mxu0 0
    %2432 = vmatprep.subr.bf16.mxu0 0
    %2433 = vmatpush2.bf16.msra.mxu0 0
    %2434 = vmatprep.subr.bf16.mxu0 0
    %2435 = vmatpush2.bf16.msra.mxu0 0
    %2436 = vmatprep.mubr.bf16.mxu0 0
    %2437 = vmatmul.mubr.bf16.gmra.mxu0 %v2273
    %v2438 = vpop.f32.mrf.mxu0
    %v2439 = vadd.f32 0.0, %v2438
    %v2440 = vpop.f32.mrf.mxu0
    %v2441 = vadd.f32 0.0, %v2440
    %v2442 = vpop.f32.mrf.mxu0
    %v2443 = vpop.f32.mrf.mxu0
    %2444 = vdwg.mxu0
    %2445 = vmatprep.subr.bf16.mxu0 0
    %2446 = vmatpush1.bf16.msra.mxu0 0
    %2447 = vmatprep.subr.bf16.mxu0 0
    %2448 = vmatpush1.bf16.msra.mxu0 0
    %2449 = vmatprep.subr.bf16.mxu0 0
    %2450 = vmatpush1.bf16.msra.mxu0 %v280
    %2451 = vmatprep.subr.bf16.mxu0 0
    %2452 = vmatpush1.bf16.msra.mxu0 %v277
    %2453 = vmatprep.subr.bf16.mxu0 0
    %2454 = vmatpush1.bf16.msra.mxu0 %v274
    %2455 = vmatprep.subr.bf16.mxu0 0
    %2456 = vmatpush1.bf16.msra.mxu0 %v271
    %2457 = vmatprep.subr.bf16.mxu0 0
    %2458 = vmatpush1.bf16.msra.mxu0 %v268
    %2459 = vmatprep.subr.bf16.mxu0 0
    %2460 = vmatpush1.bf16.msra.mxu0 %v265
    %2461 = vmatprep.subr.bf16.mxu0 0
    %2462 = vmatpush2.bf16.msra.mxu0 0
    %2463 = vmatprep.subr.bf16.mxu0 0
    %2464 = vmatpush2.bf16.msra.mxu0 0
    %2465 = vmatprep.subr.bf16.mxu0 0
    %2466 = vmatpush2.bf16.msra.mxu0 0
    %2467 = vmatprep.subr.bf16.mxu0 0
    %2468 = vmatpush2.bf16.msra.mxu0 0
    %2469 = vmatprep.subr.bf16.mxu0 0
    %2470 = vmatpush2.bf16.msra.mxu0 0
    %2471 = vmatprep.subr.bf16.mxu0 0
    %2472 = vmatpush2.bf16.msra.mxu0 0
    %2473 = vmatprep.subr.bf16.mxu0 0
    %2474 = vmatpush2.bf16.msra.mxu0 0
    %2475 = vmatprep.subr.bf16.mxu0 0
    %2476 = vmatpush2.bf16.msra.mxu0 0
    %2477 = vmatprep.mubr.bf16.mxu0 0
    %2478 = vmatmul.mubr.bf16.gmra.mxu0 %v2273
    %v2479 = vpop.f32.mrf.mxu0
    %v2480 = vadd.f32 0.0, %v2479
    %v2481 = vpop.f32.mrf.mxu0
    %v2482 = vpop.f32.mrf.mxu0
    %v2483 = vpop.f32.mrf.mxu0
    %2484 = vdwg.mxu0
    %v2488 = vrot.slane %v2439, 6
    %v2489 = vrot.slane %v2441, 6
    %v2490 = vrot.slane %v2480, 6
    %v2494 = vadd.f32 %v116, %v2488
    %v2495 = vadd.f32 %v118, %v2489
    %v2496 = vadd.f32 %v158, %v2490
    %v2497 = vxor.u32 %v2494, 2147483648
    %v2498 = vxor.u32 %v2495, 2147483648
    %v2499 = vxor.u32 %v2496, 2147483648
    %v2500 = vmul.f32 %v2497, 1.442695
    %v2501 = vpow.pop %v2500
    %v2502 = vmul.f32 %v2498, 1.442695
    %v2503 = vpow.pop %v2502
    %v2504 = vmul.f32 %v2499, 1.442695
    %v2505 = vpow.pop %v2504
    %v2506 = vadd.f32 %v2501, 1.0
    %v2507 = vadd.f32 %v2503, 1.0
    %v2508 = vadd.f32 %v2505, 1.0
    %v2509 = vrcp.pop %v2506
    %v2510 = vmul.f32 1.0, %v2509
    %v2511 = vrcp.pop %v2507
    %v2512 = vmul.f32 1.0, %v2511
    %v2513 = vrcp.pop %v2508
    %v2514 = vmul.f32 1.0, %v2513
    %v2515 = vtanh.pop %v2496
    %v2518 = vrot.slane %v2155, 6
    %v2519 = vrot.slane %v2156, 6
    %v2522 = vmul.f32 %v2510, %v2518
    %v2523 = vmul.f32 %v2512, %v2519
    %2525 = vrot.lane.b32.xlu0 %v2515, 96
    %v2526 = vpop.permute.xlu0 %2525
    %v2528 = vmul.f32 %v2510, %v2526
    %2530 = vrot.lane.b32.xlu0 %v2528, 96
    %v2531 = vpop.permute.xlu0 %2530
    %v2533 = vadd.f32 %v2522, %v2531
    %v2534 = vadd.f32 %v2523, %v2531
    %v2535 = vtanh.pop %v2533
    %v2536 = vtanh.pop %v2534
    %2539 = vrot.lane.b32.xlu0 %v2535, 96
    %v2540 = vpop.permute.xlu0 %2539
    %2541 = vrot.lane.b32.xlu0 %v2536, 96
    %v2542 = vpop.permute.xlu0 %2541
    %v2543 = vsel %vm299, %v2540, %v2542
    %v2546 = vmul.f32 %v2512, %v2543
    %v2547 = vmul.f32 %v2514, %v2542
    %v2548 = vpack.c.bf16 %v2546, %v2546
    %v2549 = vpack.c.bf16 %v2547, %v2547
    %v2550 = vpack.c.bf16 %v2402, %v2402
    %v2551 = vpack.c.bf16 %v2403, %v2403
    %2554 = vrot.lane.b32.xlu0 %v2550, 64
    %v2555 = vpop.permute.xlu0 %2554
    %2556 = vrot.lane.b32.xlu0 %v2551, 64
    %v2557 = vpop.permute.xlu0 %2556
    %v2558 = vsel %vm665, %v2555, %v2557
    %v2560 = vsel %vm299, %v2558, 0
    %2562 = vmatprep.subr.bf16.mxu0 0
    %2563 = vmatpush1.bf16.msra.mxu0 0
    %2564 = vmatprep.subr.bf16.mxu0 0
    %2565 = vmatpush1.bf16.msra.mxu0 0
    %2566 = vmatprep.subr.bf16.mxu0 %v558
    %2567 = vmatpush1.bf16.msra.mxu0 %v557
    %2568 = vmatprep.subr.bf16.mxu0 %v555
    %2569 = vmatpush1.bf16.msra.mxu0 %v554
    %2570 = vmatprep.subr.bf16.mxu0 %v552
    %2571 = vmatpush1.bf16.msra.mxu0 %v551
    %2572 = vmatprep.subr.bf16.mxu0 %v549
    %2573 = vmatpush1.bf16.msra.mxu0 %v548
    %2574 = vmatprep.subr.bf16.mxu0 %v546
    %2575 = vmatpush1.bf16.msra.mxu0 %v545
    %2576 = vmatprep.subr.bf16.mxu0 %v543
    %2577 = vmatpush1.bf16.msra.mxu0 %v542
    %2578 = vmatprep.subr.bf16.mxu0 0
    %2579 = vmatpush2.bf16.msra.mxu0 0
    %2580 = vmatprep.subr.bf16.mxu0 0
    %2581 = vmatpush2.bf16.msra.mxu0 0
    %2582 = vmatprep.subr.bf16.mxu0 0
    %2583 = vmatpush2.bf16.msra.mxu0 0
    %2584 = vmatprep.subr.bf16.mxu0 0
    %2585 = vmatpush2.bf16.msra.mxu0 0
    %2586 = vmatprep.subr.bf16.mxu0 0
    %2587 = vmatpush2.bf16.msra.mxu0 0
    %2588 = vmatprep.subr.bf16.mxu0 0
    %2589 = vmatpush2.bf16.msra.mxu0 0
    %2590 = vmatprep.subr.bf16.mxu0 0
    %2591 = vmatpush2.bf16.msra.mxu0 0
    %2592 = vmatprep.subr.bf16.mxu0 0
    %2593 = vmatpush2.bf16.msra.mxu0 0
    %2594 = vmatprep.mubr.bf16.mxu0 0
    %2595 = vmatmul.mubr.bf16.gmra.mxu0 %v2560
    %v2596 = vpop.f32.mrf.mxu0
    %v2597 = vadd.f32 0.0, %v2596
    %v2598 = vpop.f32.mrf.mxu0
    %v2599 = vadd.f32 0.0, %v2598
    %v2600 = vpop.f32.mrf.mxu0
    %v2601 = vpop.f32.mrf.mxu0
    %2602 = vdwg.mxu0
    %2603 = vmatprep.subr.bf16.mxu0 0
    %2604 = vmatpush1.bf16.msra.mxu0 0
    %2605 = vmatprep.subr.bf16.mxu0 0
    %2606 = vmatpush1.bf16.msra.mxu0 0
    %2607 = vmatprep.subr.bf16.mxu0 0
    %2608 = vmatpush1.bf16.msra.mxu0 %v559
    %2609 = vmatprep.subr.bf16.mxu0 0
    %2610 = vmatpush1.bf16.msra.mxu0 %v556
    %2611 = vmatprep.subr.bf16.mxu0 0
    %2612 = vmatpush1.bf16.msra.mxu0 %v553
    %2613 = vmatprep.subr.bf16.mxu0 0
    %2614 = vmatpush1.bf16.msra.mxu0 %v550
    %2615 = vmatprep.subr.bf16.mxu0 0
    %2616 = vmatpush1.bf16.msra.mxu0 %v547
    %2617 = vmatprep.subr.bf16.mxu0 0
    %2618 = vmatpush1.bf16.msra.mxu0 %v544
    %2619 = vmatprep.subr.bf16.mxu0 0
    %2620 = vmatpush2.bf16.msra.mxu0 0
    %2621 = vmatprep.subr.bf16.mxu0 0
    %2622 = vmatpush2.bf16.msra.mxu0 0
    %2623 = vmatprep.subr.bf16.mxu0 0
    %2624 = vmatpush2.bf16.msra.mxu0 0
    %2625 = vmatprep.subr.bf16.mxu0 0
    %2626 = vmatpush2.bf16.msra.mxu0 0
    %2627 = vmatprep.subr.bf16.mxu0 0
    %2628 = vmatpush2.bf16.msra.mxu0 0
    %2629 = vmatprep.subr.bf16.mxu0 0
    %2630 = vmatpush2.bf16.msra.mxu0 0
    %2631 = vmatprep.subr.bf16.mxu0 0
    %2632 = vmatpush2.bf16.msra.mxu0 0
    %2633 = vmatprep.subr.bf16.mxu0 0
    %2634 = vmatpush2.bf16.msra.mxu0 0
    %2635 = vmatprep.mubr.bf16.mxu0 0
    %2636 = vmatmul.mubr.bf16.gmra.mxu0 %v2560
    %v2637 = vpop.f32.mrf.mxu0
    %v2638 = vadd.f32 0.0, %v2637
    %v2639 = vpop.f32.mrf.mxu0
    %v2640 = vpop.f32.mrf.mxu0
    %v2641 = vpop.f32.mrf.mxu0
    %2642 = vdwg.mxu0
    %v2645 = vrot.slane %v2548, 1
    %v2646 = vrot.slane %v2549, 1
    %2647 = vrot.lane.b32.xlu0 %v2645, 64
    %v2648 = vpop.permute.xlu0 %2647
    %2649 = vrot.lane.b32.xlu0 %v2646, 64
    %v2650 = vpop.permute.xlu0 %2649
    %v2651 = vsel %vm665, %v2648, %v2650
    %v2653 = vsel %vm299, %v2651, 0
    %2655 = vmatprep.subr.bf16.mxu0 0
    %2656 = vmatpush1.bf16.msra.mxu0 0
    %2657 = vmatprep.subr.bf16.mxu0 0
    %2658 = vmatpush1.bf16.msra.mxu0 0
    %2659 = vmatprep.subr.bf16.mxu0 %v743
    %2660 = vmatpush1.bf16.msra.mxu0 %v742
    %2661 = vmatprep.subr.bf16.mxu0 %v740
    %2662 = vmatpush1.bf16.msra.mxu0 %v739
    %2663 = vmatprep.subr.bf16.mxu0 %v737
    %2664 = vmatpush1.bf16.msra.mxu0 %v736
    %2665 = vmatprep.subr.bf16.mxu0 %v734
    %2666 = vmatpush1.bf16.msra.mxu0 %v733
    %2667 = vmatprep.subr.bf16.mxu0 %v731
    %2668 = vmatpush1.bf16.msra.mxu0 %v730
    %2669 = vmatprep.subr.bf16.mxu0 %v728
    %2670 = vmatpush1.bf16.msra.mxu0 %v727
    %2671 = vmatprep.subr.bf16.mxu0 0
    %2672 = vmatpush2.bf16.msra.mxu0 0
    %2673 = vmatprep.subr.bf16.mxu0 0
    %2674 = vmatpush2.bf16.msra.mxu0 0
    %2675 = vmatprep.subr.bf16.mxu0 0
    %2676 = vmatpush2.bf16.msra.mxu0 0
    %2677 = vmatprep.subr.bf16.mxu0 0
    %2678 = vmatpush2.bf16.msra.mxu0 0
    %2679 = vmatprep.subr.bf16.mxu0 0
    %2680 = vmatpush2.bf16.msra.mxu0 0
    %2681 = vmatprep.subr.bf16.mxu0 0
    %2682 = vmatpush2.bf16.msra.mxu0 0
    %2683 = vmatprep.subr.bf16.mxu0 0
    %2684 = vmatpush2.bf16.msra.mxu0 0
    %2685 = vmatprep.subr.bf16.mxu0 0
    %2686 = vmatpush2.bf16.msra.mxu0 0
    %2687 = vmatprep.mubr.bf16.mxu0 0
    %2688 = vmatmul.mubr.bf16.gmra.mxu0 %v2653
    %v2689 = vpop.f32.mrf.mxu0
    %v2690 = vadd.f32 %v2597, %v2689
    %v2691 = vpop.f32.mrf.mxu0
    %v2692 = vadd.f32 %v2599, %v2691
    %v2693 = vpop.f32.mrf.mxu0
    %v2694 = vpop.f32.mrf.mxu0
    %2695 = vdwg.mxu0
    %2696 = vmatprep.subr.bf16.mxu0 0
    %2697 = vmatpush1.bf16.msra.mxu0 0
    %2698 = vmatprep.subr.bf16.mxu0 0
    %2699 = vmatpush1.bf16.msra.mxu0 0
    %2700 = vmatprep.subr.bf16.mxu0 0
    %2701 = vmatpush1.bf16.msra.mxu0 %v744
    %2702 = vmatprep.subr.bf16.mxu0 0
    %2703 = vmatpush1.bf16.msra.mxu0 %v741
    %2704 = vmatprep.subr.bf16.mxu0 0
    %2705 = vmatpush1.bf16.msra.mxu0 %v738
    %2706 = vmatprep.subr.bf16.mxu0 0
    %2707 = vmatpush1.bf16.msra.mxu0 %v735
    %2708 = vmatprep.subr.bf16.mxu0 0
    %2709 = vmatpush1.bf16.msra.mxu0 %v732
    %2710 = vmatprep.subr.bf16.mxu0 0
    %2711 = vmatpush1.bf16.msra.mxu0 %v729
    %2712 = vmatprep.subr.bf16.mxu0 0
    %2713 = vmatpush2.bf16.msra.mxu0 0
    %2714 = vmatprep.subr.bf16.mxu0 0
    %2715 = vmatpush2.bf16.msra.mxu0 0
    %2716 = vmatprep.subr.bf16.mxu0 0
    %2717 = vmatpush2.bf16.msra.mxu0 0
    %2718 = vmatprep.subr.bf16.mxu0 0
    %2719 = vmatpush2.bf16.msra.mxu0 0
    %2720 = vmatprep.subr.bf16.mxu0 0
    %2721 = vmatpush2.bf16.msra.mxu0 0
    %2722 = vmatprep.subr.bf16.mxu0 0
    %2723 = vmatpush2.bf16.msra.mxu0 0
    %2724 = vmatprep.subr.bf16.mxu0 0
    %2725 = vmatpush2.bf16.msra.mxu0 0
    %2726 = vmatprep.subr.bf16.mxu0 0
    %2727 = vmatpush2.bf16.msra.mxu0 0
    %2728 = vmatprep.mubr.bf16.mxu0 0
    %2729 = vmatmul.mubr.bf16.gmra.mxu0 %v2653
    %v2730 = vpop.f32.mrf.mxu0
    %v2731 = vadd.f32 %v2638, %v2730
    %v2732 = vpop.f32.mrf.mxu0
    %v2733 = vpop.f32.mrf.mxu0
    %v2734 = vpop.f32.mrf.mxu0
    %2735 = vdwg.mxu0
    %v2736 = vadd.f32 %v2690, %v167
    %v2737 = vadd.f32 %v2692, %v171
    %v2738 = vadd.f32 %v2731, %v175
    %v2739 = vxor.u32 %v2736, 2147483648
    %v2740 = vxor.u32 %v2737, 2147483648
    %v2741 = vxor.u32 %v2738, 2147483648
    %v2742 = vmul.f32 %v2739, 1.442695
    %v2743 = vpow.pop %v2742
    %v2744 = vmul.f32 %v2740, 1.442695
    %v2745 = vpow.pop %v2744
    %v2746 = vmul.f32 %v2741, 1.442695
    %v2747 = vpow.pop %v2746
    %v2748 = vadd.f32 %v2743, 1.0
    %v2749 = vadd.f32 %v2745, 1.0
    %v2750 = vadd.f32 %v2747, 1.0
    %v2751 = vrcp.pop %v2748
    %v2752 = vmul.f32 1.0, %v2751
    %v2753 = vrcp.pop %v2749
    %v2754 = vmul.f32 1.0, %v2753
    %v2755 = vrcp.pop %v2750
    %v2756 = vmul.f32 1.0, %v2755
    %v2757 = vtanh.pop %v2738
    %v2758 = vmul.f32 %v2752, %v2389
    %v2759 = vmul.f32 %v2754, %v2390
    %2761 = vrot.lane.b32.xlu0 %v2757, 96
    %v2762 = vpop.permute.xlu0 %2761
    %v2764 = vmul.f32 %v2752, %v2762
    %2766 = vrot.lane.b32.xlu0 %v2764, 96
    %v2767 = vpop.permute.xlu0 %2766
    %v2769 = vadd.f32 %v2758, %v2767
    %v2770 = vadd.f32 %v2759, %v2767
    %v2771 = vtanh.pop %v2769
    %v2772 = vtanh.pop %v2770
    %2775 = vrot.lane.b32.xlu0 %v2771, 96
    %v2776 = vpop.permute.xlu0 %2775
    %2777 = vrot.lane.b32.xlu0 %v2772, 96
    %v2778 = vpop.permute.xlu0 %2777
    %v2779 = vsel %vm299, %v2776, %v2778
    %v2782 = vmul.f32 %v2754, %v2779
    %v2783 = vmul.f32 %v2756, %v2778
    %2784 = vmatprep.subr.bf16.mxu0 0
    %2785 = vmatpush1.bf16.msra.mxu0 0
    %2786 = vmatprep.subr.bf16.mxu0 0
    %2787 = vmatpush1.bf16.msra.mxu0 0
    %2788 = vmatprep.subr.bf16.mxu0 %v279
    %2789 = vmatpush1.bf16.msra.mxu0 %v278
    %2790 = vmatprep.subr.bf16.mxu0 %v276
    %2791 = vmatpush1.bf16.msra.mxu0 %v275
    %2792 = vmatprep.subr.bf16.mxu0 %v273
    %2793 = vmatpush1.bf16.msra.mxu0 %v272
    %2794 = vmatprep.subr.bf16.mxu0 %v270
    %2795 = vmatpush1.bf16.msra.mxu0 %v269
    %2796 = vmatprep.subr.bf16.mxu0 %v267
    %2797 = vmatpush1.bf16.msra.mxu0 %v266
    %2798 = vmatprep.subr.bf16.mxu0 %v264
    %2799 = vmatpush1.bf16.msra.mxu0 %v263
    %2800 = vmatprep.subr.bf16.mxu0 0
    %2801 = vmatpush2.bf16.msra.mxu0 0
    %2802 = vmatprep.subr.bf16.mxu0 0
    %2803 = vmatpush2.bf16.msra.mxu0 0
    %2804 = vmatprep.subr.bf16.mxu0 0
    %2805 = vmatpush2.bf16.msra.mxu0 0
    %2806 = vmatprep.subr.bf16.mxu0 0
    %2807 = vmatpush2.bf16.msra.mxu0 0
    %2808 = vmatprep.subr.bf16.mxu0 0
    %2809 = vmatpush2.bf16.msra.mxu0 0
    %2810 = vmatprep.subr.bf16.mxu0 0
    %2811 = vmatpush2.bf16.msra.mxu0 0
    %2812 = vmatprep.subr.bf16.mxu0 0
    %2813 = vmatpush2.bf16.msra.mxu0 0
    %2814 = vmatprep.subr.bf16.mxu0 0
    %2815 = vmatpush2.bf16.msra.mxu0 0
    %2816 = vmatprep.mubr.bf16.mxu0 0
    %2817 = vmatmul.mubr.bf16.gmra.mxu0 %v2653
    %v2818 = vpop.f32.mrf.mxu0
    %v2819 = vadd.f32 0.0, %v2818
    %v2820 = vpop.f32.mrf.mxu0
    %v2821 = vadd.f32 0.0, %v2820
    %v2822 = vpop.f32.mrf.mxu0
    %v2823 = vpop.f32.mrf.mxu0
    %2824 = vdwg.mxu0
    %2825 = vmatprep.subr.bf16.mxu0 0
    %2826 = vmatpush1.bf16.msra.mxu0 0
    %2827 = vmatprep.subr.bf16.mxu0 0
    %2828 = vmatpush1.bf16.msra.mxu0 0
    %2829 = vmatprep.subr.bf16.mxu0 0
    %2830 = vmatpush1.bf16.msra.mxu0 %v280
    %2831 = vmatprep.subr.bf16.mxu0 0
    %2832 = vmatpush1.bf16.msra.mxu0 %v277
    %2833 = vmatprep.subr.bf16.mxu0 0
    %2834 = vmatpush1.bf16.msra.mxu0 %v274
    %2835 = vmatprep.subr.bf16.mxu0 0
    %2836 = vmatpush1.bf16.msra.mxu0 %v271
    %2837 = vmatprep.subr.bf16.mxu0 0
    %2838 = vmatpush1.bf16.msra.mxu0 %v268
    %2839 = vmatprep.subr.bf16.mxu0 0
    %2840 = vmatpush1.bf16.msra.mxu0 %v265
    %2841 = vmatprep.subr.bf16.mxu0 0
    %2842 = vmatpush2.bf16.msra.mxu0 0
    %2843 = vmatprep.subr.bf16.mxu0 0
    %2844 = vmatpush2.bf16.msra.mxu0 0
    %2845 = vmatprep.subr.bf16.mxu0 0
    %2846 = vmatpush2.bf16.msra.mxu0 0
    %2847 = vmatprep.subr.bf16.mxu0 0
    %2848 = vmatpush2.bf16.msra.mxu0 0
    %2849 = vmatprep.subr.bf16.mxu0 0
    %2850 = vmatpush2.bf16.msra.mxu0 0
    %2851 = vmatprep.subr.bf16.mxu0 0
    %2852 = vmatpush2.bf16.msra.mxu0 0
    %2853 = vmatprep.subr.bf16.mxu0 0
    %2854 = vmatpush2.bf16.msra.mxu0 0
    %2855 = vmatprep.subr.bf16.mxu0 0
    %2856 = vmatpush2.bf16.msra.mxu0 0
    %2857 = vmatprep.mubr.bf16.mxu0 0
    %2858 = vmatmul.mubr.bf16.gmra.mxu0 %v2653
    %v2859 = vpop.f32.mrf.mxu0
    %v2860 = vadd.f32 0.0, %v2859
    %v2861 = vpop.f32.mrf.mxu0
    %v2862 = vpop.f32.mrf.mxu0
    %v2863 = vpop.f32.mrf.mxu0
    %2864 = vdwg.mxu0
    %v2868 = vrot.slane %v2819, 4
    %v2869 = vrot.slane %v2821, 4
    %v2870 = vrot.slane %v2860, 4
    %v2874 = vadd.f32 %v116, %v2868
    %v2875 = vadd.f32 %v118, %v2869
    %v2876 = vadd.f32 %v158, %v2870
    %v2877 = vxor.u32 %v2874, 2147483648
    %v2878 = vxor.u32 %v2875, 2147483648
    %v2879 = vxor.u32 %v2876, 2147483648
    %v2880 = vmul.f32 %v2877, 1.442695
    %v2881 = vpow.pop %v2880
    %v2882 = vmul.f32 %v2878, 1.442695
    %v2883 = vpow.pop %v2882
    %v2884 = vmul.f32 %v2879, 1.442695
    %v2885 = vpow.pop %v2884
    %v2886 = vadd.f32 %v2881, 1.0
    %v2887 = vadd.f32 %v2883, 1.0
    %v2888 = vadd.f32 %v2885, 1.0
    %v2889 = vrcp.pop %v2886
    %v2890 = vmul.f32 1.0, %v2889
    %v2891 = vrcp.pop %v2887
    %v2892 = vmul.f32 1.0, %v2891
    %v2893 = vrcp.pop %v2888
    %v2894 = vmul.f32 1.0, %v2893
    %v2895 = vtanh.pop %v2876
    %v2898 = vrot.slane %v2533, 6
    %v2899 = vrot.slane %v2534, 6
    %v2902 = vmul.f32 %v2890, %v2898
    %v2903 = vmul.f32 %v2892, %v2899
    %2905 = vrot.lane.b32.xlu0 %v2895, 96
    %v2906 = vpop.permute.xlu0 %2905
    %v2908 = vmul.f32 %v2890, %v2906
    %2910 = vrot.lane.b32.xlu0 %v2908, 96
    %v2911 = vpop.permute.xlu0 %2910
    %v2913 = vadd.f32 %v2902, %v2911
    %v2914 = vadd.f32 %v2903, %v2911
    %v2915 = vtanh.pop %v2913
    %v2916 = vtanh.pop %v2914
    %2919 = vrot.lane.b32.xlu0 %v2915, 96
    %v2920 = vpop.permute.xlu0 %2919
    %2921 = vrot.lane.b32.xlu0 %v2916, 96
    %v2922 = vpop.permute.xlu0 %2921
    %v2923 = vsel %vm299, %v2920, %v2922
    %v2926 = vmul.f32 %v2892, %v2923
    %v2927 = vmul.f32 %v2894, %v2922
    %v2928 = vpack.c.bf16 %v2926, %v2926
    %v2929 = vpack.c.bf16 %v2927, %v2927
    %v2930 = vpack.c.bf16 %v2782, %v2782
    %v2931 = vpack.c.bf16 %v2783, %v2783
    %2934 = vrot.lane.b32.xlu0 %v2930, 64
    %v2935 = vpop.permute.xlu0 %2934
    %2936 = vrot.lane.b32.xlu0 %v2931, 64
    %v2937 = vpop.permute.xlu0 %2936
    %v2938 = vsel %vm665, %v2935, %v2937
    %v2940 = vsel %vm299, %v2938, 0
    %2942 = vmatprep.subr.bf16.mxu0 0
    %2943 = vmatpush1.bf16.msra.mxu0 0
    %2944 = vmatprep.subr.bf16.mxu0 0
    %2945 = vmatpush1.bf16.msra.mxu0 0
    %2946 = vmatprep.subr.bf16.mxu0 %v558
    %2947 = vmatpush1.bf16.msra.mxu0 %v557
    %2948 = vmatprep.subr.bf16.mxu0 %v555
    %2949 = vmatpush1.bf16.msra.mxu0 %v554
    %2950 = vmatprep.subr.bf16.mxu0 %v552
    %2951 = vmatpush1.bf16.msra.mxu0 %v551
    %2952 = vmatprep.subr.bf16.mxu0 %v549
    %2953 = vmatpush1.bf16.msra.mxu0 %v548
    %2954 = vmatprep.subr.bf16.mxu0 %v546
    %2955 = vmatpush1.bf16.msra.mxu0 %v545
    %2956 = vmatprep.subr.bf16.mxu0 %v543
    %2957 = vmatpush1.bf16.msra.mxu0 %v542
    %2958 = vmatprep.subr.bf16.mxu0 0
    %2959 = vmatpush2.bf16.msra.mxu0 0
    %2960 = vmatprep.subr.bf16.mxu0 0
    %2961 = vmatpush2.bf16.msra.mxu0 0
    %2962 = vmatprep.subr.bf16.mxu0 0
    %2963 = vmatpush2.bf16.msra.mxu0 0
    %2964 = vmatprep.subr.bf16.mxu0 0
    %2965 = vmatpush2.bf16.msra.mxu0 0
    %2966 = vmatprep.subr.bf16.mxu0 0
    %2967 = vmatpush2.bf16.msra.mxu0 0
    %2968 = vmatprep.subr.bf16.mxu0 0
    %2969 = vmatpush2.bf16.msra.mxu0 0
    %2970 = vmatprep.subr.bf16.mxu0 0
    %2971 = vmatpush2.bf16.msra.mxu0 0
    %2972 = vmatprep.subr.bf16.mxu0 0
    %2973 = vmatpush2.bf16.msra.mxu0 0
    %2974 = vmatprep.mubr.bf16.mxu0 0
    %2975 = vmatmul.mubr.bf16.gmra.mxu0 %v2940
    %v2976 = vpop.f32.mrf.mxu0
    %v2977 = vadd.f32 0.0, %v2976
    %v2978 = vpop.f32.mrf.mxu0
    %v2979 = vadd.f32 0.0, %v2978
    %v2980 = vpop.f32.mrf.mxu0
    %v2981 = vpop.f32.mrf.mxu0
    %2982 = vdwg.mxu0
    %2983 = vmatprep.subr.bf16.mxu0 0
    %2984 = vmatpush1.bf16.msra.mxu0 0
    %2985 = vmatprep.subr.bf16.mxu0 0
    %2986 = vmatpush1.bf16.msra.mxu0 0
    %2987 = vmatprep.subr.bf16.mxu0 0
    %2988 = vmatpush1.bf16.msra.mxu0 %v559
    %2989 = vmatprep.subr.bf16.mxu0 0
    %2990 = vmatpush1.bf16.msra.mxu0 %v556
    %2991 = vmatprep.subr.bf16.mxu0 0
    %2992 = vmatpush1.bf16.msra.mxu0 %v553
    %2993 = vmatprep.subr.bf16.mxu0 0
    %2994 = vmatpush1.bf16.msra.mxu0 %v550
    %2995 = vmatprep.subr.bf16.mxu0 0
    %2996 = vmatpush1.bf16.msra.mxu0 %v547
    %2997 = vmatprep.subr.bf16.mxu0 0
    %2998 = vmatpush1.bf16.msra.mxu0 %v544
    %2999 = vmatprep.subr.bf16.mxu0 0
    %3000 = vmatpush2.bf16.msra.mxu0 0
    %3001 = vmatprep.subr.bf16.mxu0 0
    %3002 = vmatpush2.bf16.msra.mxu0 0
    %3003 = vmatprep.subr.bf16.mxu0 0
    %3004 = vmatpush2.bf16.msra.mxu0 0
    %3005 = vmatprep.subr.bf16.mxu0 0
    %3006 = vmatpush2.bf16.msra.mxu0 0
    %3007 = vmatprep.subr.bf16.mxu0 0
    %3008 = vmatpush2.bf16.msra.mxu0 0
    %3009 = vmatprep.subr.bf16.mxu0 0
    %3010 = vmatpush2.bf16.msra.mxu0 0
    %3011 = vmatprep.subr.bf16.mxu0 0
    %3012 = vmatpush2.bf16.msra.mxu0 0
    %3013 = vmatprep.subr.bf16.mxu0 0
    %3014 = vmatpush2.bf16.msra.mxu0 0
    %3015 = vmatprep.mubr.bf16.mxu0 0
    %3016 = vmatmul.mubr.bf16.gmra.mxu0 %v2940
    %v3017 = vpop.f32.mrf.mxu0
    %v3018 = vadd.f32 0.0, %v3017
    %v3019 = vpop.f32.mrf.mxu0
    %v3020 = vpop.f32.mrf.mxu0
    %v3021 = vpop.f32.mrf.mxu0
    %3022 = vdwg.mxu0
    %v3025 = vrot.slane %v2928, 2
    %v3026 = vrot.slane %v2929, 2
    %3027 = vrot.lane.b32.xlu0 %v3025, 64
    %v3028 = vpop.permute.xlu0 %3027
    %3029 = vrot.lane.b32.xlu0 %v3026, 64
    %v3030 = vpop.permute.xlu0 %3029
    %v3031 = vsel %vm665, %v3028, %v3030
    %v3033 = vsel %vm299, %v3031, 0
    %3035 = vmatprep.subr.bf16.mxu0 0
    %3036 = vmatpush1.bf16.msra.mxu0 0
    %3037 = vmatprep.subr.bf16.mxu0 0
    %3038 = vmatpush1.bf16.msra.mxu0 0
    %3039 = vmatprep.subr.bf16.mxu0 %v743
    %3040 = vmatpush1.bf16.msra.mxu0 %v742
    %3041 = vmatprep.subr.bf16.mxu0 %v740
    %3042 = vmatpush1.bf16.msra.mxu0 %v739
    %3043 = vmatprep.subr.bf16.mxu0 %v737
    %3044 = vmatpush1.bf16.msra.mxu0 %v736
    %3045 = vmatprep.subr.bf16.mxu0 %v734
    %3046 = vmatpush1.bf16.msra.mxu0 %v733
    %3047 = vmatprep.subr.bf16.mxu0 %v731
    %3048 = vmatpush1.bf16.msra.mxu0 %v730
    %3049 = vmatprep.subr.bf16.mxu0 %v728
    %3050 = vmatpush1.bf16.msra.mxu0 %v727
    %3051 = vmatprep.subr.bf16.mxu0 0
    %3052 = vmatpush2.bf16.msra.mxu0 0
    %3053 = vmatprep.subr.bf16.mxu0 0
    %3054 = vmatpush2.bf16.msra.mxu0 0
    %3055 = vmatprep.subr.bf16.mxu0 0
    %3056 = vmatpush2.bf16.msra.mxu0 0
    %3057 = vmatprep.subr.bf16.mxu0 0
    %3058 = vmatpush2.bf16.msra.mxu0 0
    %3059 = vmatprep.subr.bf16.mxu0 0
    %3060 = vmatpush2.bf16.msra.mxu0 0
    %3061 = vmatprep.subr.bf16.mxu0 0
    %3062 = vmatpush2.bf16.msra.mxu0 0
    %3063 = vmatprep.subr.bf16.mxu0 0
    %3064 = vmatpush2.bf16.msra.mxu0 0
    %3065 = vmatprep.subr.bf16.mxu0 0
    %3066 = vmatpush2.bf16.msra.mxu0 0
    %3067 = vmatprep.mubr.bf16.mxu0 0
    %3068 = vmatmul.mubr.bf16.gmra.mxu0 %v3033
    %v3069 = vpop.f32.mrf.mxu0
    %v3070 = vadd.f32 %v2977, %v3069
    %v3071 = vpop.f32.mrf.mxu0
    %v3072 = vadd.f32 %v2979, %v3071
    %v3073 = vpop.f32.mrf.mxu0
    %v3074 = vpop.f32.mrf.mxu0
    %3075 = vdwg.mxu0
    %3076 = vmatprep.subr.bf16.mxu0 0
    %3077 = vmatpush1.bf16.msra.mxu0 0
    %3078 = vmatprep.subr.bf16.mxu0 0
    %3079 = vmatpush1.bf16.msra.mxu0 0
    %3080 = vmatprep.subr.bf16.mxu0 0
    %3081 = vmatpush1.bf16.msra.mxu0 %v744
    %3082 = vmatprep.subr.bf16.mxu0 0
    %3083 = vmatpush1.bf16.msra.mxu0 %v741
    %3084 = vmatprep.subr.bf16.mxu0 0
    %3085 = vmatpush1.bf16.msra.mxu0 %v738
    %3086 = vmatprep.subr.bf16.mxu0 0
    %3087 = vmatpush1.bf16.msra.mxu0 %v735
    %3088 = vmatprep.subr.bf16.mxu0 0
    %3089 = vmatpush1.bf16.msra.mxu0 %v732
    %3090 = vmatprep.subr.bf16.mxu0 0
    %3091 = vmatpush1.bf16.msra.mxu0 %v729
    %3092 = vmatprep.subr.bf16.mxu0 0
    %3093 = vmatpush2.bf16.msra.mxu0 0
    %3094 = vmatprep.subr.bf16.mxu0 0
    %3095 = vmatpush2.bf16.msra.mxu0 0
    %3096 = vmatprep.subr.bf16.mxu0 0
    %3097 = vmatpush2.bf16.msra.mxu0 0
    %3098 = vmatprep.subr.bf16.mxu0 0
    %3099 = vmatpush2.bf16.msra.mxu0 0
    %3100 = vmatprep.subr.bf16.mxu0 0
    %3101 = vmatpush2.bf16.msra.mxu0 0
    %3102 = vmatprep.subr.bf16.mxu0 0
    %3103 = vmatpush2.bf16.msra.mxu0 0
    %3104 = vmatprep.subr.bf16.mxu0 0
    %3105 = vmatpush2.bf16.msra.mxu0 0
    %3106 = vmatprep.subr.bf16.mxu0 0
    %3107 = vmatpush2.bf16.msra.mxu0 0
    %3108 = vmatprep.mubr.bf16.mxu0 0
    %3109 = vmatmul.mubr.bf16.gmra.mxu0 %v3033
    %v3110 = vpop.f32.mrf.mxu0
    %v3111 = vadd.f32 %v3018, %v3110
    %v3112 = vpop.f32.mrf.mxu0
    %v3113 = vpop.f32.mrf.mxu0
    %v3114 = vpop.f32.mrf.mxu0
    %3115 = vdwg.mxu0
    %v3116 = vadd.f32 %v3070, %v167
    %v3117 = vadd.f32 %v3072, %v171
    %v3118 = vadd.f32 %v3111, %v175
    %v3119 = vxor.u32 %v3116, 2147483648
    %v3120 = vxor.u32 %v3117, 2147483648
    %v3121 = vxor.u32 %v3118, 2147483648
    %v3122 = vmul.f32 %v3119, 1.442695
    %v3123 = vpow.pop %v3122
    %v3124 = vmul.f32 %v3120, 1.442695
    %v3125 = vpow.pop %v3124
    %v3126 = vmul.f32 %v3121, 1.442695
    %v3127 = vpow.pop %v3126
    %v3128 = vadd.f32 %v3123, 1.0
    %v3129 = vadd.f32 %v3125, 1.0
    %v3130 = vadd.f32 %v3127, 1.0
    %v3131 = vrcp.pop %v3128
    %v3132 = vmul.f32 1.0, %v3131
    %v3133 = vrcp.pop %v3129
    %v3134 = vmul.f32 1.0, %v3133
    %v3135 = vrcp.pop %v3130
    %v3136 = vmul.f32 1.0, %v3135
    %v3137 = vtanh.pop %v3118
    %v3138 = vmul.f32 %v3132, %v2769
    %v3139 = vmul.f32 %v3134, %v2770
    %3141 = vrot.lane.b32.xlu0 %v3137, 96
    %v3142 = vpop.permute.xlu0 %3141
    %v3144 = vmul.f32 %v3132, %v3142
    %3146 = vrot.lane.b32.xlu0 %v3144, 96
    %v3147 = vpop.permute.xlu0 %3146
    %v3149 = vadd.f32 %v3138, %v3147
    %v3150 = vadd.f32 %v3139, %v3147
    %v3151 = vtanh.pop %v3149
    %v3152 = vtanh.pop %v3150
    %3155 = vrot.lane.b32.xlu0 %v3151, 96
    %v3156 = vpop.permute.xlu0 %3155
    %3157 = vrot.lane.b32.xlu0 %v3152, 96
    %v3158 = vpop.permute.xlu0 %3157
    %v3159 = vsel %vm299, %v3156, %v3158
    %v3162 = vmul.f32 %v3134, %v3159
    %v3163 = vmul.f32 %v3136, %v3158
    %3164 = vmatprep.subr.bf16.mxu0 0
    %3165 = vmatpush1.bf16.msra.mxu0 0
    %3166 = vmatprep.subr.bf16.mxu0 0
    %3167 = vmatpush1.bf16.msra.mxu0 0
    %3168 = vmatprep.subr.bf16.mxu0 %v279
    %3169 = vmatpush1.bf16.msra.mxu0 %v278
    %3170 = vmatprep.subr.bf16.mxu0 %v276
    %3171 = vmatpush1.bf16.msra.mxu0 %v275
    %3172 = vmatprep.subr.bf16.mxu0 %v273
    %3173 = vmatpush1.bf16.msra.mxu0 %v272
    %3174 = vmatprep.subr.bf16.mxu0 %v270
    %3175 = vmatpush1.bf16.msra.mxu0 %v269
    %3176 = vmatprep.subr.bf16.mxu0 %v267
    %3177 = vmatpush1.bf16.msra.mxu0 %v266
    %3178 = vmatprep.subr.bf16.mxu0 %v264
    %3179 = vmatpush1.bf16.msra.mxu0 %v263
    %3180 = vmatprep.subr.bf16.mxu0 0
    %3181 = vmatpush2.bf16.msra.mxu0 0
    %3182 = vmatprep.subr.bf16.mxu0 0
    %3183 = vmatpush2.bf16.msra.mxu0 0
    %3184 = vmatprep.subr.bf16.mxu0 0
    %3185 = vmatpush2.bf16.msra.mxu0 0
    %3186 = vmatprep.subr.bf16.mxu0 0
    %3187 = vmatpush2.bf16.msra.mxu0 0
    %3188 = vmatprep.subr.bf16.mxu0 0
    %3189 = vmatpush2.bf16.msra.mxu0 0
    %3190 = vmatprep.subr.bf16.mxu0 0
    %3191 = vmatpush2.bf16.msra.mxu0 0
    %3192 = vmatprep.subr.bf16.mxu0 0
    %3193 = vmatpush2.bf16.msra.mxu0 0
    %3194 = vmatprep.subr.bf16.mxu0 0
    %3195 = vmatpush2.bf16.msra.mxu0 0
    %3196 = vmatprep.mubr.bf16.mxu0 0
    %3197 = vmatmul.mubr.bf16.gmra.mxu0 %v3033
    %v3198 = vpop.f32.mrf.mxu0
    %v3199 = vadd.f32 0.0, %v3198
    %v3200 = vpop.f32.mrf.mxu0
    %v3201 = vadd.f32 0.0, %v3200
    %v3202 = vpop.f32.mrf.mxu0
    %v3203 = vpop.f32.mrf.mxu0
    %3204 = vdwg.mxu0
    %3205 = vmatprep.subr.bf16.mxu0 0
    %3206 = vmatpush1.bf16.msra.mxu0 0
    %3207 = vmatprep.subr.bf16.mxu0 0
    %3208 = vmatpush1.bf16.msra.mxu0 0
    %3209 = vmatprep.subr.bf16.mxu0 0
    %3210 = vmatpush1.bf16.msra.mxu0 %v280
    %3211 = vmatprep.subr.bf16.mxu0 0
    %3212 = vmatpush1.bf16.msra.mxu0 %v277
    %3213 = vmatprep.subr.bf16.mxu0 0
    %3214 = vmatpush1.bf16.msra.mxu0 %v274
    %3215 = vmatprep.subr.bf16.mxu0 0
    %3216 = vmatpush1.bf16.msra.mxu0 %v271
    %3217 = vmatprep.subr.bf16.mxu0 0
    %3218 = vmatpush1.bf16.msra.mxu0 %v268
    %3219 = vmatprep.subr.bf16.mxu0 0
    %3220 = vmatpush1.bf16.msra.mxu0 %v265
    %3221 = vmatprep.subr.bf16.mxu0 0
    %3222 = vmatpush2.bf16.msra.mxu0 0
    %3223 = vmatprep.subr.bf16.mxu0 0
    %3224 = vmatpush2.bf16.msra.mxu0 0
    %3225 = vmatprep.subr.bf16.mxu0 0
    %3226 = vmatpush2.bf16.msra.mxu0 0
    %3227 = vmatprep.subr.bf16.mxu0 0
    %3228 = vmatpush2.bf16.msra.mxu0 0
    %3229 = vmatprep.subr.bf16.mxu0 0
    %3230 = vmatpush2.bf16.msra.mxu0 0
    %3231 = vmatprep.subr.bf16.mxu0 0
    %3232 = vmatpush2.bf16.msra.mxu0 0
    %3233 = vmatprep.subr.bf16.mxu0 0
    %3234 = vmatpush2.bf16.msra.mxu0 0
    %3235 = vmatprep.subr.bf16.mxu0 0
    %3236 = vmatpush2.bf16.msra.mxu0 0
    %3237 = vmatprep.mubr.bf16.mxu0 0
    %3238 = vmatmul.mubr.bf16.gmra.mxu0 %v3033
    %v3239 = vpop.f32.mrf.mxu0
    %v3240 = vadd.f32 0.0, %v3239
    %v3241 = vpop.f32.mrf.mxu0
    %v3242 = vpop.f32.mrf.mxu0
    %v3243 = vpop.f32.mrf.mxu0
    %3244 = vdwg.mxu0
    %v3248 = vrot.slane %v3199, 2
    %v3249 = vrot.slane %v3201, 2
    %v3250 = vrot.slane %v3240, 2
    %v3254 = vadd.f32 %v116, %v3248
    %v3255 = vadd.f32 %v118, %v3249
    %v3256 = vadd.f32 %v158, %v3250
    %v3257 = vxor.u32 %v3254, 2147483648
    %v3258 = vxor.u32 %v3255, 2147483648
    %v3259 = vxor.u32 %v3256, 2147483648
    %v3260 = vmul.f32 %v3257, 1.442695
    %v3261 = vpow.pop %v3260
    %v3262 = vmul.f32 %v3258, 1.442695
    %v3263 = vpow.pop %v3262
    %v3264 = vmul.f32 %v3259, 1.442695
    %v3265 = vpow.pop %v3264
    %v3266 = vadd.f32 %v3261, 1.0
    %v3267 = vadd.f32 %v3263, 1.0
    %v3268 = vadd.f32 %v3265, 1.0
    %v3269 = vrcp.pop %v3266
    %v3270 = vmul.f32 1.0, %v3269
    %v3271 = vrcp.pop %v3267
    %v3272 = vmul.f32 1.0, %v3271
    %v3273 = vrcp.pop %v3268
    %v3274 = vmul.f32 1.0, %v3273
    %v3275 = vtanh.pop %v3256
    %v3278 = vrot.slane %v2913, 6
    %v3279 = vrot.slane %v2914, 6
    %v3282 = vmul.f32 %v3270, %v3278
    %v3283 = vmul.f32 %v3272, %v3279
    %3285 = vrot.lane.b32.xlu0 %v3275, 96
    %v3286 = vpop.permute.xlu0 %3285
    %v3288 = vmul.f32 %v3270, %v3286
    %3290 = vrot.lane.b32.xlu0 %v3288, 96
    %v3291 = vpop.permute.xlu0 %3290
    %v3293 = vadd.f32 %v3282, %v3291
    %v3294 = vadd.f32 %v3283, %v3291
    %v3295 = vtanh.pop %v3293
    %v3296 = vtanh.pop %v3294
    %3299 = vrot.lane.b32.xlu0 %v3295, 96
    %v3300 = vpop.permute.xlu0 %3299
    %3301 = vrot.lane.b32.xlu0 %v3296, 96
    %v3302 = vpop.permute.xlu0 %3301
    %v3303 = vsel %vm299, %v3300, %v3302
    %v3306 = vmul.f32 %v3272, %v3303
    %v3307 = vmul.f32 %v3274, %v3302
    %v3308 = vpack.c.bf16 %v3306, %v3306
    %v3309 = vpack.c.bf16 %v3307, %v3307
    %v3310 = vpack.c.bf16 %v3162, %v3162
    %v3311 = vpack.c.bf16 %v3163, %v3163
    %3314 = vrot.lane.b32.xlu0 %v3310, 64
    %v3315 = vpop.permute.xlu0 %3314
    %3316 = vrot.lane.b32.xlu0 %v3311, 64
    %v3317 = vpop.permute.xlu0 %3316
    %v3318 = vsel %vm665, %v3315, %v3317
    %v3320 = vsel %vm299, %v3318, 0
    %3322 = vmatprep.subr.bf16.mxu0 0
    %3323 = vmatpush1.bf16.msra.mxu0 0
    %3324 = vmatprep.subr.bf16.mxu0 0
    %3325 = vmatpush1.bf16.msra.mxu0 0
    %3326 = vmatprep.subr.bf16.mxu0 %v558
    %3327 = vmatpush1.bf16.msra.mxu0 %v557
    %3328 = vmatprep.subr.bf16.mxu0 %v555
    %3329 = vmatpush1.bf16.msra.mxu0 %v554
    %3330 = vmatprep.subr.bf16.mxu0 %v552
    %3331 = vmatpush1.bf16.msra.mxu0 %v551
    %3332 = vmatprep.subr.bf16.mxu0 %v549
    %3333 = vmatpush1.bf16.msra.mxu0 %v548
    %3334 = vmatprep.subr.bf16.mxu0 %v546
    %3335 = vmatpush1.bf16.msra.mxu0 %v545
    %3336 = vmatprep.subr.bf16.mxu0 %v543
    %3337 = vmatpush1.bf16.msra.mxu0 %v542
    %3338 = vmatprep.subr.bf16.mxu0 0
    %3339 = vmatpush2.bf16.msra.mxu0 0
    %3340 = vmatprep.subr.bf16.mxu0 0
    %3341 = vmatpush2.bf16.msra.mxu0 0
    %3342 = vmatprep.subr.bf16.mxu0 0
    %3343 = vmatpush2.bf16.msra.mxu0 0
    %3344 = vmatprep.subr.bf16.mxu0 0
    %3345 = vmatpush2.bf16.msra.mxu0 0
    %3346 = vmatprep.subr.bf16.mxu0 0
    %3347 = vmatpush2.bf16.msra.mxu0 0
    %3348 = vmatprep.subr.bf16.mxu0 0
    %3349 = vmatpush2.bf16.msra.mxu0 0
    %3350 = vmatprep.subr.bf16.mxu0 0
    %3351 = vmatpush2.bf16.msra.mxu0 0
    %3352 = vmatprep.subr.bf16.mxu0 0
    %3353 = vmatpush2.bf16.msra.mxu0 0
    %3354 = vmatprep.mubr.bf16.mxu0 0
    %3355 = vmatmul.mubr.bf16.gmra.mxu0 %v3320
    %v3356 = vpop.f32.mrf.mxu0
    %v3357 = vadd.f32 0.0, %v3356
    %v3358 = vpop.f32.mrf.mxu0
    %v3359 = vadd.f32 0.0, %v3358
    %v3360 = vpop.f32.mrf.mxu0
    %v3361 = vpop.f32.mrf.mxu0
    %3362 = vdwg.mxu0
    %3363 = vmatprep.subr.bf16.mxu0 0
    %3364 = vmatpush1.bf16.msra.mxu0 0
    %3365 = vmatprep.subr.bf16.mxu0 0
    %3366 = vmatpush1.bf16.msra.mxu0 0
    %3367 = vmatprep.subr.bf16.mxu0 0
    %3368 = vmatpush1.bf16.msra.mxu0 %v559
    %3369 = vmatprep.subr.bf16.mxu0 0
    %3370 = vmatpush1.bf16.msra.mxu0 %v556
    %3371 = vmatprep.subr.bf16.mxu0 0
    %3372 = vmatpush1.bf16.msra.mxu0 %v553
    %3373 = vmatprep.subr.bf16.mxu0 0
    %3374 = vmatpush1.bf16.msra.mxu0 %v550
    %3375 = vmatprep.subr.bf16.mxu0 0
    %3376 = vmatpush1.bf16.msra.mxu0 %v547
    %3377 = vmatprep.subr.bf16.mxu0 0
    %3378 = vmatpush1.bf16.msra.mxu0 %v544
    %3379 = vmatprep.subr.bf16.mxu0 0
    %3380 = vmatpush2.bf16.msra.mxu0 0
    %3381 = vmatprep.subr.bf16.mxu0 0
    %3382 = vmatpush2.bf16.msra.mxu0 0
    %3383 = vmatprep.subr.bf16.mxu0 0
    %3384 = vmatpush2.bf16.msra.mxu0 0
    %3385 = vmatprep.subr.bf16.mxu0 0
    %3386 = vmatpush2.bf16.msra.mxu0 0
    %3387 = vmatprep.subr.bf16.mxu0 0
    %3388 = vmatpush2.bf16.msra.mxu0 0
    %3389 = vmatprep.subr.bf16.mxu0 0
    %3390 = vmatpush2.bf16.msra.mxu0 0
    %3391 = vmatprep.subr.bf16.mxu0 0
    %3392 = vmatpush2.bf16.msra.mxu0 0
    %3393 = vmatprep.subr.bf16.mxu0 0
    %3394 = vmatpush2.bf16.msra.mxu0 0
    %3395 = vmatprep.mubr.bf16.mxu0 0
    %3396 = vmatmul.mubr.bf16.gmra.mxu0 %v3320
    %v3397 = vpop.f32.mrf.mxu0
    %v3398 = vadd.f32 0.0, %v3397
    %v3399 = vpop.f32.mrf.mxu0
    %v3400 = vpop.f32.mrf.mxu0
    %v3401 = vpop.f32.mrf.mxu0
    %3402 = vdwg.mxu0
    %v3405 = vrot.slane %v3308, 3
    %v3406 = vrot.slane %v3309, 3
    %3407 = vrot.lane.b32.xlu0 %v3405, 64
    %v3408 = vpop.permute.xlu0 %3407
    %3409 = vrot.lane.b32.xlu0 %v3406, 64
    %v3410 = vpop.permute.xlu0 %3409
    %v3411 = vsel %vm665, %v3408, %v3410
    %v3413 = vsel %vm299, %v3411, 0
    %3415 = vmatprep.subr.bf16.mxu0 0
    %3416 = vmatpush1.bf16.msra.mxu0 0
    %3417 = vmatprep.subr.bf16.mxu0 0
    %3418 = vmatpush1.bf16.msra.mxu0 0
    %3419 = vmatprep.subr.bf16.mxu0 %v743
    %3420 = vmatpush1.bf16.msra.mxu0 %v742
    %3421 = vmatprep.subr.bf16.mxu0 %v740
    %3422 = vmatpush1.bf16.msra.mxu0 %v739
    %3423 = vmatprep.subr.bf16.mxu0 %v737
    %3424 = vmatpush1.bf16.msra.mxu0 %v736
    %3425 = vmatprep.subr.bf16.mxu0 %v734
    %3426 = vmatpush1.bf16.msra.mxu0 %v733
    %3427 = vmatprep.subr.bf16.mxu0 %v731
    %3428 = vmatpush1.bf16.msra.mxu0 %v730
    %3429 = vmatprep.subr.bf16.mxu0 %v728
    %3430 = vmatpush1.bf16.msra.mxu0 %v727
    %3431 = vmatprep.subr.bf16.mxu0 0
    %3432 = vmatpush2.bf16.msra.mxu0 0
    %3433 = vmatprep.subr.bf16.mxu0 0
    %3434 = vmatpush2.bf16.msra.mxu0 0
    %3435 = vmatprep.subr.bf16.mxu0 0
    %3436 = vmatpush2.bf16.msra.mxu0 0
    %3437 = vmatprep.subr.bf16.mxu0 0
    %3438 = vmatpush2.bf16.msra.mxu0 0
    %3439 = vmatprep.subr.bf16.mxu0 0
    %3440 = vmatpush2.bf16.msra.mxu0 0
    %3441 = vmatprep.subr.bf16.mxu0 0
    %3442 = vmatpush2.bf16.msra.mxu0 0
    %3443 = vmatprep.subr.bf16.mxu0 0
    %3444 = vmatpush2.bf16.msra.mxu0 0
    %3445 = vmatprep.subr.bf16.mxu0 0
    %3446 = vmatpush2.bf16.msra.mxu0 0
    %3447 = vmatprep.mubr.bf16.mxu0 0
    %3448 = vmatmul.mubr.bf16.gmra.mxu0 %v3413
    %v3449 = vpop.f32.mrf.mxu0
    %v3450 = vadd.f32 %v3357, %v3449
    %v3451 = vpop.f32.mrf.mxu0
    %v3452 = vadd.f32 %v3359, %v3451
    %v3453 = vpop.f32.mrf.mxu0
    %v3454 = vpop.f32.mrf.mxu0
    %3455 = vdwg.mxu0
    %3456 = vmatprep.subr.bf16.mxu0 0
    %3457 = vmatpush1.bf16.msra.mxu0 0
    %3458 = vmatprep.subr.bf16.mxu0 0
    %3459 = vmatpush1.bf16.msra.mxu0 0
    %3460 = vmatprep.subr.bf16.mxu0 0
    %3461 = vmatpush1.bf16.msra.mxu0 %v744
    %3462 = vmatprep.subr.bf16.mxu0 0
    %3463 = vmatpush1.bf16.msra.mxu0 %v741
    %3464 = vmatprep.subr.bf16.mxu0 0
    %3465 = vmatpush1.bf16.msra.mxu0 %v738
    %3466 = vmatprep.subr.bf16.mxu0 0
    %3467 = vmatpush1.bf16.msra.mxu0 %v735
    %3468 = vmatprep.subr.bf16.mxu0 0
    %3469 = vmatpush1.bf16.msra.mxu0 %v732
    %3470 = vmatprep.subr.bf16.mxu0 0
    %3471 = vmatpush1.bf16.msra.mxu0 %v729
    %3472 = vmatprep.subr.bf16.mxu0 0
    %3473 = vmatpush2.bf16.msra.mxu0 0
    %3474 = vmatprep.subr.bf16.mxu0 0
    %3475 = vmatpush2.bf16.msra.mxu0 0
    %3476 = vmatprep.subr.bf16.mxu0 0
    %3477 = vmatpush2.bf16.msra.mxu0 0
    %3478 = vmatprep.subr.bf16.mxu0 0
    %3479 = vmatpush2.bf16.msra.mxu0 0
    %3480 = vmatprep.subr.bf16.mxu0 0
    %3481 = vmatpush2.bf16.msra.mxu0 0
    %3482 = vmatprep.subr.bf16.mxu0 0
    %3483 = vmatpush2.bf16.msra.mxu0 0
    %3484 = vmatprep.subr.bf16.mxu0 0
    %3485 = vmatpush2.bf16.msra.mxu0 0
    %3486 = vmatprep.subr.bf16.mxu0 0
    %3487 = vmatpush2.bf16.msra.mxu0 0
    %3488 = vmatprep.mubr.bf16.mxu0 0
    %3489 = vmatmul.mubr.bf16.gmra.mxu0 %v3413
    %v3490 = vpop.f32.mrf.mxu0
    %v3491 = vadd.f32 %v3398, %v3490
    %v3492 = vpop.f32.mrf.mxu0
    %v3493 = vpop.f32.mrf.mxu0
    %v3494 = vpop.f32.mrf.mxu0
    %3495 = vdwg.mxu0
    %v3496 = vadd.f32 %v3450, %v167
    %v3497 = vadd.f32 %v3452, %v171
    %v3498 = vadd.f32 %v3491, %v175
    %v3499 = vxor.u32 %v3496, 2147483648
    %v3500 = vxor.u32 %v3497, 2147483648
    %v3501 = vxor.u32 %v3498, 2147483648
    %v3502 = vmul.f32 %v3499, 1.442695
    %v3503 = vpow.pop %v3502
    %v3504 = vmul.f32 %v3500, 1.442695
    %v3505 = vpow.pop %v3504
    %v3506 = vmul.f32 %v3501, 1.442695
    %v3507 = vpow.pop %v3506
    %v3508 = vadd.f32 %v3503, 1.0
    %v3509 = vadd.f32 %v3505, 1.0
    %v3510 = vadd.f32 %v3507, 1.0
    %v3511 = vrcp.pop %v3508
    %v3512 = vmul.f32 1.0, %v3511
    %v3513 = vrcp.pop %v3509
    %v3514 = vmul.f32 1.0, %v3513
    %v3515 = vrcp.pop %v3510
    %v3516 = vmul.f32 1.0, %v3515
    %v3517 = vtanh.pop %v3498
    %v3518 = vmul.f32 %v3512, %v3149
    %v3519 = vmul.f32 %v3514, %v3150
    %3521 = vrot.lane.b32.xlu0 %v3517, 96
    %v3522 = vpop.permute.xlu0 %3521
    %v3524 = vmul.f32 %v3512, %v3522
    %3526 = vrot.lane.b32.xlu0 %v3524, 96
    %v3527 = vpop.permute.xlu0 %3526
    %v3529 = vadd.f32 %v3518, %v3527
    %v3530 = vadd.f32 %v3519, %v3527
    %v3531 = vtanh.pop %v3529
    %v3532 = vtanh.pop %v3530
    %3535 = vrot.lane.b32.xlu0 %v3531, 96
    %v3536 = vpop.permute.xlu0 %3535
    %3537 = vrot.lane.b32.xlu0 %v3532, 96
    %v3538 = vpop.permute.xlu0 %3537
    %v3539 = vsel %vm299, %v3536, %v3538
    %v3542 = vmul.f32 %v3514, %v3539
    %v3543 = vmul.f32 %v3516, %v3538
    %v3546 = vcombine.low %v893, %v894
    %v3548 = vunpack.c.l.s4 1966171168
    %v3549 = vunpack.c.0.s8 %v3548
    %v3550 = vlaneseq
    %v3551 = vshrl.u32 %v3550, 7
    %v3552 = vsub.s32 %v3549, %v3551
    %v3553 = vrot.slane %v3546, %v3552
    %v3554 = vcombine.high %v3553, %v3553
    %v3556 = vunpack.c.l.s4 1966171168
    %v3557 = vunpack.c.0.s8 %v3556
    %v3558 = vlaneseq
    %v3559 = vshrl.u32 %v3558, 7
    %v3560 = vsub.s32 %v3557, %v3559
    %v3561 = vrot.slane %v3553, %v3560
    %v3563 = vunpack.c.l.s4 1966171168
    %v3564 = vunpack.c.0.s8 %v3563
    %v3565 = vlaneseq
    %v3566 = vshrl.u32 %v3565, 7
    %v3567 = vsub.s32 %v3564, %v3566
    %v3568 = vrot.slane %v3554, %v3567
    %v3571 = vcombine.low %v1273, %v1274
    %v3573 = vunpack.c.l.s4 1966171168
    %v3574 = vunpack.c.0.s8 %v3573
    %v3575 = vlaneseq
    %v3576 = vshrl.u32 %v3575, 7
    %v3577 = vsub.s32 %v3574, %v3576
    %v3578 = vrot.slane %v3571, %v3577
    %v3579 = vcombine.high %v3578, %v3578
    %v3581 = vunpack.c.l.s4 1966171168
    %v3582 = vunpack.c.0.s8 %v3581
    %v3583 = vlaneseq
    %v3584 = vshrl.u32 %v3583, 7
    %v3585 = vsub.s32 %v3582, %v3584
    %v3586 = vrot.slane %v3578, %v3585
    %v3588 = vunpack.c.l.s4 1966171168
    %v3589 = vunpack.c.0.s8 %v3588
    %v3590 = vlaneseq
    %v3591 = vshrl.u32 %v3590, 7
    %v3592 = vsub.s32 %v3589, %v3591
    %v3593 = vrot.slane %v3579, %v3592
    %v3596 = vcombine.low %v1653, %v1654
    %v3598 = vunpack.c.l.s4 1966171168
    %v3599 = vunpack.c.0.s8 %v3598
    %v3600 = vlaneseq
    %v3601 = vshrl.u32 %v3600, 7
    %v3602 = vsub.s32 %v3599, %v3601
    %v3603 = vrot.slane %v3596, %v3602
    %v3604 = vcombine.high %v3603, %v3603
    %v3606 = vunpack.c.l.s4 1966171168
    %v3607 = vunpack.c.0.s8 %v3606
    %v3608 = vlaneseq
    %v3609 = vshrl.u32 %v3608, 7
    %v3610 = vsub.s32 %v3607, %v3609
    %v3611 = vrot.slane %v3603, %v3610
    %v3613 = vunpack.c.l.s4 1966171168
    %v3614 = vunpack.c.0.s8 %v3613
    %v3615 = vlaneseq
    %v3616 = vshrl.u32 %v3615, 7
    %v3617 = vsub.s32 %v3614, %v3616
    %v3618 = vrot.slane %v3604, %v3617
    %v3621 = vcombine.low %v2033, %v2034
    %v3623 = vunpack.c.l.s4 1966171168
    %v3624 = vunpack.c.0.s8 %v3623
    %v3625 = vlaneseq
    %v3626 = vshrl.u32 %v3625, 7
    %v3627 = vsub.s32 %v3624, %v3626
    %v3628 = vrot.slane %v3621, %v3627
    %v3629 = vcombine.high %v3628, %v3628
    %v3631 = vunpack.c.l.s4 1966171168
    %v3632 = vunpack.c.0.s8 %v3631
    %v3633 = vlaneseq
    %v3634 = vshrl.u32 %v3633, 7
    %v3635 = vsub.s32 %v3632, %v3634
    %v3636 = vrot.slane %v3628, %v3635
    %v3638 = vunpack.c.l.s4 1966171168
    %v3639 = vunpack.c.0.s8 %v3638
    %v3640 = vlaneseq
    %v3641 = vshrl.u32 %v3640, 7
    %v3642 = vsub.s32 %v3639, %v3641
    %v3643 = vrot.slane %v3629, %v3642
    %v3646 = vcombine.low %v2402, %v2403
    %v3648 = vunpack.c.l.s4 1966171168
    %v3649 = vunpack.c.0.s8 %v3648
    %v3650 = vlaneseq
    %v3651 = vshrl.u32 %v3650, 7
    %v3652 = vsub.s32 %v3649, %v3651
    %v3653 = vrot.slane %v3646, %v3652
    %v3654 = vcombine.high %v3653, %v3653
    %v3656 = vunpack.c.l.s4 1966171168
    %v3657 = vunpack.c.0.s8 %v3656
    %v3658 = vlaneseq
    %v3659 = vshrl.u32 %v3658, 7
    %v3660 = vsub.s32 %v3657, %v3659
    %v3661 = vrot.slane %v3653, %v3660
    %v3663 = vunpack.c.l.s4 1966171168
    %v3664 = vunpack.c.0.s8 %v3663
    %v3665 = vlaneseq
    %v3666 = vshrl.u32 %v3665, 7
    %v3667 = vsub.s32 %v3664, %v3666
    %v3668 = vrot.slane %v3654, %v3667
    %v3671 = vcombine.low %v2782, %v2783
    %v3673 = vunpack.c.l.s4 1966171168
    %v3674 = vunpack.c.0.s8 %v3673
    %v3675 = vlaneseq
    %v3676 = vshrl.u32 %v3675, 7
    %v3677 = vsub.s32 %v3674, %v3676
    %v3678 = vrot.slane %v3671, %v3677
    %v3679 = vcombine.high %v3678, %v3678
    %v3681 = vunpack.c.l.s4 1966171168
    %v3682 = vunpack.c.0.s8 %v3681
    %v3683 = vlaneseq
    %v3684 = vshrl.u32 %v3683, 7
    %v3685 = vsub.s32 %v3682, %v3684
    %v3686 = vrot.slane %v3678, %v3685
    %v3688 = vunpack.c.l.s4 1966171168
    %v3689 = vunpack.c.0.s8 %v3688
    %v3690 = vlaneseq
    %v3691 = vshrl.u32 %v3690, 7
    %v3692 = vsub.s32 %v3689, %v3691
    %v3693 = vrot.slane %v3679, %v3692
    %v3696 = vcombine.low %v3162, %v3163
    %v3698 = vunpack.c.l.s4 1966171168
    %v3699 = vunpack.c.0.s8 %v3698
    %v3700 = vlaneseq
    %v3701 = vshrl.u32 %v3700, 7
    %v3702 = vsub.s32 %v3699, %v3701
    %v3703 = vrot.slane %v3696, %v3702
    %v3704 = vcombine.high %v3703, %v3703
    %v3706 = vunpack.c.l.s4 1966171168
    %v3707 = vunpack.c.0.s8 %v3706
    %v3708 = vlaneseq
    %v3709 = vshrl.u32 %v3708, 7
    %v3710 = vsub.s32 %v3707, %v3709
    %v3711 = vrot.slane %v3703, %v3710
    %v3713 = vunpack.c.l.s4 1966171168
    %v3714 = vunpack.c.0.s8 %v3713
    %v3715 = vlaneseq
    %v3716 = vshrl.u32 %v3715, 7
    %v3717 = vsub.s32 %v3714, %v3716
    %v3718 = vrot.slane %v3704, %v3717
    %v3721 = vcombine.low %v3542, %v3543
    %v3723 = vunpack.c.l.s4 1966171168
    %v3724 = vunpack.c.0.s8 %v3723
    %v3725 = vlaneseq
    %v3726 = vshrl.u32 %v3725, 7
    %v3727 = vsub.s32 %v3724, %v3726
    %v3728 = vrot.slane %v3721, %v3727
    %v3729 = vcombine.high %v3728, %v3728
    %v3731 = vunpack.c.l.s4 1966171168
    %v3732 = vunpack.c.0.s8 %v3731
    %v3733 = vlaneseq
    %v3734 = vshrl.u32 %v3733, 7
    %v3735 = vsub.s32 %v3732, %v3734
    %v3736 = vrot.slane %v3728, %v3735
    %v3738 = vunpack.c.l.s4 1966171168
    %v3739 = vunpack.c.0.s8 %v3738
    %v3740 = vlaneseq
    %v3741 = vshrl.u32 %v3740, 7
    %v3742 = vsub.s32 %v3739, %v3741
    %v3743 = vrot.slane %v3729, %v3742
    %v3744 = vlaneseq
    %v3745 = vshrl.u32 %v3744, 7
    %v3746 = vsub.s32 0, %v3745
    %v3747 = vrot.slane %v3561, %v3746
    %v3748 = vlaneseq
    %v3749 = vshrl.u32 %v3748, 7
    %v3750 = vsub.s32 1, %v3749
    %v3751 = vrot.slane %v3561, %v3750
    %v3752 = vlaneseq
    %v3753 = vshrl.u32 %v3752, 7
    %v3754 = vsub.s32 0, %v3753
    %v3755 = vrot.slane %v3568, %v3754
    %v3756 = vlaneseq
    %v3757 = vshrl.u32 %v3756, 7
    %v3758 = vsub.s32 1, %v3757
    %v3759 = vrot.slane %v3568, %v3758
    %v3764 = vlaneseq
    %v3765 = vshrl.u32 %v3764, 7
    %v3766 = vsub.s32 0, %v3765
    %v3767 = vrot.slane %v3586, %v3766
    %v3768 = vlaneseq
    %v3769 = vshrl.u32 %v3768, 7
    %v3770 = vsub.s32 1, %v3769
    %v3771 = vrot.slane %v3586, %v3770
    %v3772 = vlaneseq
    %v3773 = vshrl.u32 %v3772, 7
    %v3774 = vsub.s32 0, %v3773
    %v3775 = vrot.slane %v3593, %v3774
    %v3776 = vlaneseq
    %v3777 = vshrl.u32 %v3776, 7
    %v3778 = vsub.s32 1, %v3777
    %v3779 = vrot.slane %v3593, %v3778
    %v3784 = vlaneseq
    %v3785 = vshrl.u32 %v3784, 7
    %v3786 = vsub.s32 0, %v3785
    %v3787 = vrot.slane %v3611, %v3786
    %v3788 = vlaneseq
    %v3789 = vshrl.u32 %v3788, 7
    %v3790 = vsub.s32 1, %v3789
    %v3791 = vrot.slane %v3611, %v3790
    %v3792 = vlaneseq
    %v3793 = vshrl.u32 %v3792, 7
    %v3794 = vsub.s32 0, %v3793
    %v3795 = vrot.slane %v3618, %v3794
    %v3796 = vlaneseq
    %v3797 = vshrl.u32 %v3796, 7
    %v3798 = vsub.s32 1, %v3797
    %v3799 = vrot.slane %v3618, %v3798
    %v3804 = vlaneseq
    %v3805 = vshrl.u32 %v3804, 7
    %v3806 = vsub.s32 0, %v3805
    %v3807 = vrot.slane %v3636, %v3806
    %v3808 = vlaneseq
    %v3809 = vshrl.u32 %v3808, 7
    %v3810 = vsub.s32 1, %v3809
    %v3811 = vrot.slane %v3636, %v3810
    %v3812 = vlaneseq
    %v3813 = vshrl.u32 %v3812, 7
    %v3814 = vsub.s32 0, %v3813
    %v3815 = vrot.slane %v3643, %v3814
    %v3816 = vlaneseq
    %v3817 = vshrl.u32 %v3816, 7
    %v3818 = vsub.s32 1, %v3817
    %v3819 = vrot.slane %v3643, %v3818
    %v3824 = vlaneseq
    %v3825 = vshrl.u32 %v3824, 7
    %v3826 = vsub.s32 0, %v3825
    %v3827 = vrot.slane %v3661, %v3826
    %v3828 = vlaneseq
    %v3829 = vshrl.u32 %v3828, 7
    %v3830 = vsub.s32 1, %v3829
    %v3831 = vrot.slane %v3661, %v3830
    %v3832 = vlaneseq
    %v3833 = vshrl.u32 %v3832, 7
    %v3834 = vsub.s32 0, %v3833
    %v3835 = vrot.slane %v3668, %v3834
    %v3836 = vlaneseq
    %v3837 = vshrl.u32 %v3836, 7
    %v3838 = vsub.s32 1, %v3837
    %v3839 = vrot.slane %v3668, %v3838
    %v3844 = vlaneseq
    %v3845 = vshrl.u32 %v3844, 7
    %v3846 = vsub.s32 0, %v3845
    %v3847 = vrot.slane %v3686, %v3846
    %v3848 = vlaneseq
    %v3849 = vshrl.u32 %v3848, 7
    %v3850 = vsub.s32 1, %v3849
    %v3851 = vrot.slane %v3686, %v3850
    %v3852 = vlaneseq
    %v3853 = vshrl.u32 %v3852, 7
    %v3854 = vsub.s32 0, %v3853
    %v3855 = vrot.slane %v3693, %v3854
    %v3856 = vlaneseq
    %v3857 = vshrl.u32 %v3856, 7
    %v3858 = vsub.s32 1, %v3857
    %v3859 = vrot.slane %v3693, %v3858
    %v3864 = vlaneseq
    %v3865 = vshrl.u32 %v3864, 7
    %v3866 = vsub.s32 0, %v3865
    %v3867 = vrot.slane %v3711, %v3866
    %v3868 = vlaneseq
    %v3869 = vshrl.u32 %v3868, 7
    %v3870 = vsub.s32 1, %v3869
    %v3871 = vrot.slane %v3711, %v3870
    %v3872 = vlaneseq
    %v3873 = vshrl.u32 %v3872, 7
    %v3874 = vsub.s32 0, %v3873
    %v3875 = vrot.slane %v3718, %v3874
    %v3876 = vlaneseq
    %v3877 = vshrl.u32 %v3876, 7
    %v3878 = vsub.s32 1, %v3877
    %v3879 = vrot.slane %v3718, %v3878
    %v3884 = vlaneseq
    %v3885 = vshrl.u32 %v3884, 7
    %v3886 = vsub.s32 0, %v3885
    %v3887 = vrot.slane %v3736, %v3886
    %v3888 = vlaneseq
    %v3889 = vshrl.u32 %v3888, 7
    %v3890 = vsub.s32 1, %v3889
    %v3891 = vrot.slane %v3736, %v3890
    %v3892 = vlaneseq
    %v3893 = vshrl.u32 %v3892, 7
    %v3894 = vsub.s32 0, %v3893
    %v3895 = vrot.slane %v3743, %v3894
    %v3896 = vlaneseq
    %v3897 = vshrl.u32 %v3896, 7
    %v3898 = vsub.s32 1, %v3897
    %v3899 = vrot.slane %v3743, %v3898
    %vm3904 = vcmask 1040384
    %v3905 = vsel %vm3904, %v3747, %v3767
    %v3906 = vsel %vm3904, %v3751, %v3771
    %v3907 = vsel %vm3904, %v3755, %v3775
    %v3908 = vsel %vm3904, %v3759, %v3779
    %vm3909 = vcmask 1041408
    %v3910 = vsel %vm3909, %v3905, %v3787
    %v3911 = vsel %vm3909, %v3906, %v3791
    %v3912 = vsel %vm3909, %v3907, %v3795
    %v3913 = vsel %vm3909, %v3908, %v3799
    %vm3914 = vcmask 1042432
    %v3915 = vsel %vm3914, %v3910, %v3807
    %v3916 = vsel %vm3914, %v3911, %v3811
    %v3917 = vsel %vm3914, %v3912, %v3815
    %v3918 = vsel %vm3914, %v3913, %v3819
    %vm3919 = vcmask 1043456
    %v3920 = vsel %vm3919, %v3915, %v3827
    %v3921 = vsel %vm3919, %v3916, %v3831
    %v3922 = vsel %vm3919, %v3917, %v3835
    %v3923 = vsel %vm3919, %v3918, %v3839
    %vm3924 = vcmask 1044480
    %v3925 = vsel %vm3924, %v3920, %v3847
    %v3926 = vsel %vm3924, %v3921, %v3851
    %v3927 = vsel %vm3924, %v3922, %v3855
    %v3928 = vsel %vm3924, %v3923, %v3859
    %vm3929 = vcmask 1045504
    %v3930 = vsel %vm3929, %v3925, %v3867
    %v3931 = vsel %vm3929, %v3926, %v3871
    %v3932 = vsel %vm3929, %v3927, %v3875
    %v3933 = vsel %vm3929, %v3928, %v3879
    %vm3934 = vcmask 1046528
    %v3935 = vsel %vm3934, %v3930, %v3887
    %v3936 = vsel %vm3934, %v3931, %v3891
    %v3937 = vsel %vm3934, %v3932, %v3895
    %v3938 = vsel %vm3934, %v3933, %v3899
    %v3939 = vpack.c.bf16 %v3935, %v3935
    %v3940 = vpack.c.bf16 %v3936, %v3936
    %v3941 = vpack.c.bf16 %v3937, %v3937
    %v3942 = vpack.c.bf16 %v3938, %v3938
    %3944 = vrot.lane.b32.xlu0 %v3939, 64
    %v3945 = vpop.permute.xlu0 %3944
    %vm3946 = vcmask 261120
    %v3948 = vsel %vm3946, %v3945, 0
    %3950 = vmatprep.subr.bf16.mxu0 0
    %3951 = vmatpush1.bf16.xpose.msra.mxu0 0
    %3952 = vmatprep.subr.bf16.mxu0 0
    %3953 = vmatpush1.bf16.xpose.msra.mxu0 0
    %3954 = vmatprep.subr.bf16.mxu0 0
    %3955 = vmatpush1.bf16.xpose.msra.mxu0 0
    %3956 = vmatprep.subr.bf16.mxu0 0
    %3957 = vmatpush1.bf16.xpose.msra.mxu0 0
    %3958 = vmatprep.subr.bf16.mxu0 0
    %3959 = vmatpush1.bf16.xpose.msra.mxu0 0
    %3960 = vmatprep.subr.bf16.mxu0 0
    %3961 = vmatpush1.bf16.xpose.msra.mxu0 0
    %3962 = vmatprep.subr.bf16.mxu0 0
    %3963 = vmatpush1.bf16.xpose.msra.mxu0 0
    %3964 = vmatprep.subr.bf16.mxu0 0
    %3965 = vmatpush1.bf16.xpose.msra.mxu0 %v3948
    %3966 = vmatprep.subr.bf16.mxu0 0
    %3967 = vmatpush2.bf16.xpose.msra.mxu0 0
    %3968 = vmatprep.subr.bf16.mxu0 0
    %3969 = vmatpush2.bf16.xpose.msra.mxu0 0
    %3970 = vmatprep.subr.bf16.mxu0 0
    %3971 = vmatpush2.bf16.xpose.msra.mxu0 0
    %3972 = vmatprep.subr.bf16.mxu0 0
    %3973 = vmatpush2.bf16.xpose.msra.mxu0 0
    %3974 = vmatprep.subr.bf16.mxu0 0
    %3975 = vmatpush2.bf16.xpose.msra.mxu0 0
    %3976 = vmatprep.subr.bf16.mxu0 0
    %3977 = vmatpush2.bf16.xpose.msra.mxu0 0
    %3978 = vmatprep.subr.bf16.mxu0 0
    %3979 = vmatpush2.bf16.xpose.msra.mxu0 0
    %3980 = vmatprep.subr.bf16.mxu0 0
    %3981 = vmatpush2.bf16.xpose.msra.mxu0 0
    %3982 = vmatprep.mubr.bf16.mxu0 0
    %3983 = vmatmul.mubr.bf16.gmra.mxu0 %v3948
    %v3984 = vpop.f32.mrf.mxu0
    %v3985 = vadd.f32 0.0, %v3984
    %v3986 = vpop.f32.mrf.mxu0
    %v3987 = vpop.f32.mrf.mxu0
    %v3988 = vpop.f32.mrf.mxu0
    %3989 = vdwg.mxu0
    %3991 = vrot.lane.b32.xlu0 %v3941, 64
    %v3992 = vpop.permute.xlu0 %3991
    %v3994 = vsel %vm3946, %v3992, 0
    %3996 = vmatprep.subr.bf16.mxu0 0
    %3997 = vmatpush1.bf16.xpose.msra.mxu0 0
    %3998 = vmatprep.subr.bf16.mxu0 0
    %3999 = vmatpush1.bf16.xpose.msra.mxu0 0
    %4000 = vmatprep.subr.bf16.mxu0 0
    %4001 = vmatpush1.bf16.xpose.msra.mxu0 0
    %4002 = vmatprep.subr.bf16.mxu0 0
    %4003 = vmatpush1.bf16.xpose.msra.mxu0 0
    %4004 = vmatprep.subr.bf16.mxu0 0
    %4005 = vmatpush1.bf16.xpose.msra.mxu0 0
    %4006 = vmatprep.subr.bf16.mxu0 0
    %4007 = vmatpush1.bf16.xpose.msra.mxu0 0
    %4008 = vmatprep.subr.bf16.mxu0 0
    %4009 = vmatpush1.bf16.xpose.msra.mxu0 0
    %4010 = vmatprep.subr.bf16.mxu0 0
    %4011 = vmatpush1.bf16.xpose.msra.mxu0 %v3994
    %4012 = vmatprep.subr.bf16.mxu0 0
    %4013 = vmatpush2.bf16.xpose.msra.mxu0 0
    %4014 = vmatprep.subr.bf16.mxu0 0
    %4015 = vmatpush2.bf16.xpose.msra.mxu0 0
    %4016 = vmatprep.subr.bf16.mxu0 0
    %4017 = vmatpush2.bf16.xpose.msra.mxu0 0
    %4018 = vmatprep.subr.bf16.mxu0 0
    %4019 = vmatpush2.bf16.xpose.msra.mxu0 0
    %4020 = vmatprep.subr.bf16.mxu0 0
    %4021 = vmatpush2.bf16.xpose.msra.mxu0 0
    %4022 = vmatprep.subr.bf16.mxu0 0
    %4023 = vmatpush2.bf16.xpose.msra.mxu0 0
    %4024 = vmatprep.subr.bf16.mxu0 0
    %4025 = vmatpush2.bf16.xpose.msra.mxu0 0
    %4026 = vmatprep.subr.bf16.mxu0 0
    %4027 = vmatpush2.bf16.xpose.msra.mxu0 0
    %4028 = vmatprep.mubr.bf16.mxu0 0
    %4029 = vmatmul.mubr.bf16.gmra.mxu0 %v3994
    %v4030 = vpop.f32.mrf.mxu0
    %v4031 = vadd.f32 0.0, %v4030
    %v4032 = vpop.f32.mrf.mxu0
    %v4033 = vpop.f32.mrf.mxu0
    %v4034 = vpop.f32.mrf.mxu0
    %4035 = vdwg.mxu0
    %v4036 = vld [vmem:[%s2 + $0x2] ss:$0 sm:$0xff]
    %4038 = vrot.lane.b32.xlu0 %v4036, 64
    %v4039 = vpop.permute.xlu0 %4038
    %v4041 = vmul.f32 %v3935, %v4039
    %v4042 = vmul.f32 %v3937, %v4039
    %4045 = vrot.lane.b32.xlu0 %v4041, 64
    %v4046 = vpop.permute.xlu0 %4045
    %4047 = vrot.lane.b32.xlu0 %v4042, 64
    %v4048 = vpop.permute.xlu0 %4047
    %v4051 = vsel %vm3946, %v4046, 0.0
    %4052 = vadd.xlane.f32.xlu0 %v4051
    %v4053 = vpop.xlane.xlu0 %4052
    %v4054 = vsel %vm3946, %v4048, 0.0
    %4055 = vadd.xlane.f32.xlu0 %v4054
    %v4056 = vpop.xlane.xlu0 %4055
    %4057 = vrot.lane.b32.xlu0 %v3939, 32
    %v4058 = vpop.permute.xlu0 %4057
    %v4060 = vsel %vm3946, %v4058, 0
    %4062 = vmatprep.subr.bf16.mxu0 0
    %4063 = vmatpush1.bf16.xpose.msra.mxu0 0
    %4064 = vmatprep.subr.bf16.mxu0 0
    %4065 = vmatpush1.bf16.xpose.msra.mxu0 0
    %4066 = vmatprep.subr.bf16.mxu0 0
    %4067 = vmatpush1.bf16.xpose.msra.mxu0 0
    %4068 = vmatprep.subr.bf16.mxu0 0
    %4069 = vmatpush1.bf16.xpose.msra.mxu0 0
    %4070 = vmatprep.subr.bf16.mxu0 0
    %4071 = vmatpush1.bf16.xpose.msra.mxu0 0
    %4072 = vmatprep.subr.bf16.mxu0 0
    %4073 = vmatpush1.bf16.xpose.msra.mxu0 0
    %4074 = vmatprep.subr.bf16.mxu0 0
    %4075 = vmatpush1.bf16.xpose.msra.mxu0 0
    %4076 = vmatprep.subr.bf16.mxu0 0
    %4077 = vmatpush1.bf16.xpose.msra.mxu0 %v4060
    %4078 = vmatprep.subr.bf16.mxu0 0
    %4079 = vmatpush2.bf16.xpose.msra.mxu0 0
    %4080 = vmatprep.subr.bf16.mxu0 0
    %4081 = vmatpush2.bf16.xpose.msra.mxu0 0
    %4082 = vmatprep.subr.bf16.mxu0 0
    %4083 = vmatpush2.bf16.xpose.msra.mxu0 0
    %4084 = vmatprep.subr.bf16.mxu0 0
    %4085 = vmatpush2.bf16.xpose.msra.mxu0 0
    %4086 = vmatprep.subr.bf16.mxu0 0
    %4087 = vmatpush2.bf16.xpose.msra.mxu0 0
    %4088 = vmatprep.subr.bf16.mxu0 0
    %4089 = vmatpush2.bf16.xpose.msra.mxu0 0
    %4090 = vmatprep.subr.bf16.mxu0 0
    %4091 = vmatpush2.bf16.xpose.msra.mxu0 0
    %4092 = vmatprep.subr.bf16.mxu0 0
    %4093 = vmatpush2.bf16.xpose.msra.mxu0 0
    %4094 = vmatprep.mubr.bf16.mxu0 0
    %4095 = vmatmul.mubr.bf16.gmra.mxu0 %v4060
    %v4096 = vpop.f32.mrf.mxu0
    %v4097 = vadd.f32 0.0, %v4096
    %v4098 = vpop.f32.mrf.mxu0
    %v4099 = vpop.f32.mrf.mxu0
    %v4100 = vpop.f32.mrf.mxu0
    %4101 = vdwg.mxu0
    %4102 = vrot.lane.b32.xlu0 %v3941, 32
    %v4103 = vpop.permute.xlu0 %4102
    %v4105 = vsel %vm3946, %v4103, 0
    %4107 = vmatprep.subr.bf16.mxu0 0
    %4108 = vmatpush1.bf16.xpose.msra.mxu0 0
    %4109 = vmatprep.subr.bf16.mxu0 0
    %4110 = vmatpush1.bf16.xpose.msra.mxu0 0
    %4111 = vmatprep.subr.bf16.mxu0 0
    %4112 = vmatpush1.bf16.xpose.msra.mxu0 0
    %4113 = vmatprep.subr.bf16.mxu0 0
    %4114 = vmatpush1.bf16.xpose.msra.mxu0 0
    %4115 = vmatprep.subr.bf16.mxu0 0
    %4116 = vmatpush1.bf16.xpose.msra.mxu0 0
    %4117 = vmatprep.subr.bf16.mxu0 0
    %4118 = vmatpush1.bf16.xpose.msra.mxu0 0
    %4119 = vmatprep.subr.bf16.mxu0 0
    %4120 = vmatpush1.bf16.xpose.msra.mxu0 0
    %4121 = vmatprep.subr.bf16.mxu0 0
    %4122 = vmatpush1.bf16.xpose.msra.mxu0 %v4105
    %4123 = vmatprep.subr.bf16.mxu0 0
    %4124 = vmatpush2.bf16.xpose.msra.mxu0 0
    %4125 = vmatprep.subr.bf16.mxu0 0
    %4126 = vmatpush2.bf16.xpose.msra.mxu0 0
    %4127 = vmatprep.subr.bf16.mxu0 0
    %4128 = vmatpush2.bf16.xpose.msra.mxu0 0
    %4129 = vmatprep.subr.bf16.mxu0 0
    %4130 = vmatpush2.bf16.xpose.msra.mxu0 0
    %4131 = vmatprep.subr.bf16.mxu0 0
    %4132 = vmatpush2.bf16.xpose.msra.mxu0 0
    %4133 = vmatprep.subr.bf16.mxu0 0
    %4134 = vmatpush2.bf16.xpose.msra.mxu0 0
    %4135 = vmatprep.subr.bf16.mxu0 0
    %4136 = vmatpush2.bf16.xpose.msra.mxu0 0
    %4137 = vmatprep.subr.bf16.mxu0 0
    %4138 = vmatpush2.bf16.xpose.msra.mxu0 0
    %4139 = vmatprep.mubr.bf16.mxu0 0
    %4140 = vmatmul.mubr.bf16.gmra.mxu0 %v4105
    %v4141 = vpop.f32.mrf.mxu0
    %v4142 = vadd.f32 0.0, %v4141
    %v4143 = vpop.f32.mrf.mxu0
    %v4144 = vpop.f32.mrf.mxu0
    %v4145 = vpop.f32.mrf.mxu0
    %4146 = vdwg.mxu0
    %v4147 = vld [vmem:[%s2 + $0x3] ss:$0 sm:$0xff]
    %4149 = vrot.lane.b32.xlu0 %v4147, 96
    %v4150 = vpop.permute.xlu0 %4149
    %v4152 = vmul.f32 %v3935, %v4150
    %v4153 = vmul.f32 %v3937, %v4150
    %4156 = vrot.lane.b32.xlu0 %v4152, 32
    %v4157 = vpop.permute.xlu0 %4156
    %4158 = vrot.lane.b32.xlu0 %v4153, 32
    %v4159 = vpop.permute.xlu0 %4158
    %v4162 = vsel %vm3946, %v4157, 0.0
    %4163 = vadd.xlane.f32.xlu0 %v4162
    %v4164 = vpop.xlane.xlu0 %4163
    %v4165 = vsel %vm3946, %v4159, 0.0
    %4166 = vadd.xlane.f32.xlu0 %v4165
    %v4167 = vpop.xlane.xlu0 %4166
    %v4169 = vsel %vm3946, %v3940, 0
    %4171 = vmatprep.subr.bf16.mxu0 0
    %4172 = vmatpush1.bf16.xpose.msra.mxu0 0
    %4173 = vmatprep.subr.bf16.mxu0 0
    %4174 = vmatpush1.bf16.xpose.msra.mxu0 0
    %4175 = vmatprep.subr.bf16.mxu0 0
    %4176 = vmatpush1.bf16.xpose.msra.mxu0 0
    %4177 = vmatprep.subr.bf16.mxu0 0
    %4178 = vmatpush1.bf16.xpose.msra.mxu0 0
    %4179 = vmatprep.subr.bf16.mxu0 0
    %4180 = vmatpush1.bf16.xpose.msra.mxu0 0
    %4181 = vmatprep.subr.bf16.mxu0 0
    %4182 = vmatpush1.bf16.xpose.msra.mxu0 0
    %4183 = vmatprep.subr.bf16.mxu0 0
    %4184 = vmatpush1.bf16.xpose.msra.mxu0 0
    %4185 = vmatprep.subr.bf16.mxu0 0
    %4186 = vmatpush1.bf16.xpose.msra.mxu0 %v4169
    %4187 = vmatprep.subr.bf16.mxu0 0
    %4188 = vmatpush2.bf16.xpose.msra.mxu0 0
    %4189 = vmatprep.subr.bf16.mxu0 0
    %4190 = vmatpush2.bf16.xpose.msra.mxu0 0
    %4191 = vmatprep.subr.bf16.mxu0 0
    %4192 = vmatpush2.bf16.xpose.msra.mxu0 0
    %4193 = vmatprep.subr.bf16.mxu0 0
    %4194 = vmatpush2.bf16.xpose.msra.mxu0 0
    %4195 = vmatprep.subr.bf16.mxu0 0
    %4196 = vmatpush2.bf16.xpose.msra.mxu0 0
    %4197 = vmatprep.subr.bf16.mxu0 0
    %4198 = vmatpush2.bf16.xpose.msra.mxu0 0
    %4199 = vmatprep.subr.bf16.mxu0 0
    %4200 = vmatpush2.bf16.xpose.msra.mxu0 0
    %4201 = vmatprep.subr.bf16.mxu0 0
    %4202 = vmatpush2.bf16.xpose.msra.mxu0 0
    %4203 = vmatprep.mubr.bf16.mxu0 0
    %4204 = vmatmul.mubr.bf16.gmra.mxu0 %v4169
    %v4205 = vpop.f32.mrf.mxu0
    %v4206 = vadd.f32 0.0, %v4205
    %v4207 = vpop.f32.mrf.mxu0
    %v4208 = vpop.f32.mrf.mxu0
    %v4209 = vpop.f32.mrf.mxu0
    %4210 = vdwg.mxu0
    %v4212 = vsel %vm3946, %v3942, 0
    %4214 = vmatprep.subr.bf16.mxu0 0
    %4215 = vmatpush1.bf16.xpose.msra.mxu0 0
    %4216 = vmatprep.subr.bf16.mxu0 0
    %4217 = vmatpush1.bf16.xpose.msra.mxu0 0
    %4218 = vmatprep.subr.bf16.mxu0 0
    %4219 = vmatpush1.bf16.xpose.msra.mxu0 0
    %4220 = vmatprep.subr.bf16.mxu0 0
    %4221 = vmatpush1.bf16.xpose.msra.mxu0 0
    %4222 = vmatprep.subr.bf16.mxu0 0
    %4223 = vmatpush1.bf16.xpose.msra.mxu0 0
    %4224 = vmatprep.subr.bf16.mxu0 0
    %4225 = vmatpush1.bf16.xpose.msra.mxu0 0
    %4226 = vmatprep.subr.bf16.mxu0 0
    %4227 = vmatpush1.bf16.xpose.msra.mxu0 0
    %4228 = vmatprep.subr.bf16.mxu0 0
    %4229 = vmatpush1.bf16.xpose.msra.mxu0 %v4212
    %4230 = vmatprep.subr.bf16.mxu0 0
    %4231 = vmatpush2.bf16.xpose.msra.mxu0 0
    %4232 = vmatprep.subr.bf16.mxu0 0
    %4233 = vmatpush2.bf16.xpose.msra.mxu0 0
    %4234 = vmatprep.subr.bf16.mxu0 0
    %4235 = vmatpush2.bf16.xpose.msra.mxu0 0
    %4236 = vmatprep.subr.bf16.mxu0 0
    %4237 = vmatpush2.bf16.xpose.msra.mxu0 0
    %4238 = vmatprep.subr.bf16.mxu0 0
    %4239 = vmatpush2.bf16.xpose.msra.mxu0 0
    %4240 = vmatprep.subr.bf16.mxu0 0
    %4241 = vmatpush2.bf16.xpose.msra.mxu0 0
    %4242 = vmatprep.subr.bf16.mxu0 0
    %4243 = vmatpush2.bf16.xpose.msra.mxu0 0
    %4244 = vmatprep.subr.bf16.mxu0 0
    %4245 = vmatpush2.bf16.xpose.msra.mxu0 0
    %4246 = vmatprep.mubr.bf16.mxu0 0
    %4247 = vmatmul.mubr.bf16.gmra.mxu0 %v4212
    %v4248 = vpop.f32.mrf.mxu0
    %v4249 = vadd.f32 0.0, %v4248
    %v4250 = vpop.f32.mrf.mxu0
    %v4251 = vpop.f32.mrf.mxu0
    %v4252 = vpop.f32.mrf.mxu0
    %4253 = vdwg.mxu0
    %v4254 = vld [vmem:[%s2 + $0x4] ss:$0 sm:$0xff]
    %v4255 = vmul.f32 %v3936, %v4254
    %v4256 = vmul.f32 %v3938, %v4254
    %v4257 = vsel %vm3946, %v4255, 0.0
    %4258 = vadd.xlane.f32.xlu0 %v4257
    %v4259 = vpop.xlane.xlu0 %4258
    %v4260 = vsel %vm3946, %v4256, 0.0
    %4261 = vadd.xlane.f32.xlu0 %v4260
    %v4262 = vpop.xlane.xlu0 %4261
    %v4263 = vmul.f32 %v3985, 0.17677669
    %v4264 = vmul.f32 %v4031, 0.17677669
    %v4265 = vmul.f32 %v4097, 0.17677669
    %v4266 = vmul.f32 %v4142, 0.17677669
    %v4267 = vmul.f32 %v4206, 0.17677669
    %v4268 = vmul.f32 %v4249, 0.17677669
    %vm4269 = vcmask 64512
    %v4270 = vsel %vm4269, %v4263, -inf
    %4271 = vmax.xlane.f32.xlu0 %v4270
    %v4272 = vpop.xlane.xlu0 %4271
    %v4273 = vsel %vm4269, %v4264, -inf
    %4274 = vmax.xlane.f32.xlu0 %v4273
    %v4275 = vpop.xlane.xlu0 %4274
    %v4276 = vsel %vm4269, %v4265, -inf
    %4277 = vmax.xlane.f32.xlu0 %v4276
    %v4278 = vpop.xlane.xlu0 %4277
    %v4279 = vsel %vm4269, %v4266, -inf
    %4280 = vmax.xlane.f32.xlu0 %v4279
    %v4281 = vpop.xlane.xlu0 %4280
    %v4282 = vsel %vm4269, %v4267, -inf
    %4283 = vmax.xlane.f32.xlu0 %v4282
    %v4284 = vpop.xlane.xlu0 %4283
    %v4285 = vsel %vm4269, %v4268, -inf
    %4286 = vmax.xlane.f32.xlu0 %v4285
    %v4287 = vpop.xlane.xlu0 %4286
    %v4288 = vsub.f32 %v4263, %v4272
    %v4289 = vsub.f32 %v4264, %v4275
    %v4290 = vsub.f32 %v4265, %v4278
    %v4291 = vsub.f32 %v4266, %v4281
    %v4292 = vsub.f32 %v4267, %v4284
    %v4293 = vsub.f32 %v4268, %v4287
    %v4294 = vmul.f32 %v4288, 1.442695
    %v4295 = vpow.pop %v4294
    %v4296 = vmul.f32 %v4289, 1.442695
    %v4297 = vpow.pop %v4296
    %v4298 = vmul.f32 %v4290, 1.442695
    %v4299 = vpow.pop %v4298
    %v4300 = vmul.f32 %v4291, 1.442695
    %v4301 = vpow.pop %v4300
    %v4302 = vmul.f32 %v4292, 1.442695
    %v4303 = vpow.pop %v4302
    %v4304 = vmul.f32 %v4293, 1.442695
    %v4305 = vpow.pop %v4304
    %v4306 = vsel %vm4269, %v4295, 0.0
    %4307 = vadd.xlane.f32.xlu0 %v4306
    %v4308 = vpop.xlane.xlu0 %4307
    %v4309 = vsel %vm4269, %v4297, 0.0
    %4310 = vadd.xlane.f32.xlu0 %v4309
    %v4311 = vpop.xlane.xlu0 %4310
    %v4312 = vsel %vm4269, %v4299, 0.0
    %4313 = vadd.xlane.f32.xlu0 %v4312
    %v4314 = vpop.xlane.xlu0 %4313
    %v4315 = vsel %vm4269, %v4301, 0.0
    %4316 = vadd.xlane.f32.xlu0 %v4315
    %v4317 = vpop.xlane.xlu0 %4316
    %v4318 = vsel %vm4269, %v4303, 0.0
    %4319 = vadd.xlane.f32.xlu0 %v4318
    %v4320 = vpop.xlane.xlu0 %4319
    %v4321 = vsel %vm4269, %v4305, 0.0
    %4322 = vadd.xlane.f32.xlu0 %v4321
    %v4323 = vpop.xlane.xlu0 %4322
    %v4324 = vrcp.pop %v4308
    %v4325 = vrcp.pop %v4311
    %v4326 = vrcp.pop %v4314
    %v4327 = vrcp.pop %v4317
    %v4328 = vrcp.pop %v4320
    %v4329 = vrcp.pop %v4323
    %v4330 = vmul.f32 %v4295, %v4324
    %v4331 = vmul.f32 %v4297, %v4325
    %v4332 = vmul.f32 %v4299, %v4326
    %v4333 = vmul.f32 %v4301, %v4327
    %v4334 = vmul.f32 %v4303, %v4328
    %v4335 = vmul.f32 %v4305, %v4329
    %v4336 = vsel %vm4269, %v4330, 0.0
    %v4337 = vrot.slane %v4336, 4
    %v4338 = vadd.f32 %v4336, %v4337
    %v4339 = vrot.slane %v4338, 2
    %v4340 = vadd.f32 %v4338, %v4339
    %v4341 = vrot.slane %v4340, 1
    %v4342 = vadd.f32 %v4340, %v4341
    %v4343 = vsel %vm4269, %v4331, 0.0
    %v4344 = vrot.slane %v4343, 4
    %v4345 = vadd.f32 %v4343, %v4344
    %v4346 = vrot.slane %v4345, 2
    %v4347 = vadd.f32 %v4345, %v4346
    %v4348 = vrot.slane %v4347, 1
    %v4349 = vadd.f32 %v4347, %v4348
    %v4350 = vsel %vm4269, %v4332, 0.0
    %v4351 = vrot.slane %v4350, 4
    %v4352 = vadd.f32 %v4350, %v4351
    %v4353 = vrot.slane %v4352, 2
    %v4354 = vadd.f32 %v4352, %v4353
    %v4355 = vrot.slane %v4354, 1
    %v4356 = vadd.f32 %v4354, %v4355
    %v4357 = vsel %vm4269, %v4333, 0.0
    %v4358 = vrot.slane %v4357, 4
    %v4359 = vadd.f32 %v4357, %v4358
    %v4360 = vrot.slane %v4359, 2
    %v4361 = vadd.f32 %v4359, %v4360
    %v4362 = vrot.slane %v4361, 1
    %v4363 = vadd.f32 %v4361, %v4362
    %v4364 = vsel %vm4269, %v4334, 0.0
    %v4365 = vrot.slane %v4364, 4
    %v4366 = vadd.f32 %v4364, %v4365
    %v4367 = vrot.slane %v4366, 2
    %v4368 = vadd.f32 %v4366, %v4367
    %v4369 = vrot.slane %v4368, 1
    %v4370 = vadd.f32 %v4368, %v4369
    %v4371 = vsel %vm4269, %v4335, 0.0
    %v4372 = vrot.slane %v4371, 4
    %v4373 = vadd.f32 %v4371, %v4372
    %v4374 = vrot.slane %v4373, 2
    %v4375 = vadd.f32 %v4373, %v4374
    %v4376 = vrot.slane %v4375, 1
    %v4377 = vadd.f32 %v4375, %v4376
    %v4380 = vlaneseq
    %v4381 = vand.u32 %v4380, 127
    %v4382 = vlaneseq
    %v4383 = vshrl.u32 %v4382, 7
    %v4384 = vsub.s32 %v4381, %v4383
    %v4385 = vrot.slane %v4053, %v4384
    %v4386 = vlaneseq
    %v4387 = vshrl.u32 %v4386, 7
    %v4388 = vsub.s32 %v4381, %v4387
    %v4389 = vrot.slane %v4056, %v4388
    %vm4390 = vcmask 1041409
    %v4391 = vsel %vm4390, %v4389, %v4385
    %v4395 = vlaneseq
    %v4396 = vshrl.u32 %v4395, 7
    %v4397 = vsub.s32 %v4381, %v4396
    %v4398 = vrot.slane %v4164, %v4397
    %v4399 = vlaneseq
    %v4400 = vshrl.u32 %v4399, 7
    %v4401 = vsub.s32 %v4381, %v4400
    %v4402 = vrot.slane %v4167, %v4401
    %vm4403 = vcmask 1043459
    %v4404 = vsel %vm4403, %v4402, %v4398
    %v4408 = vlaneseq
    %v4409 = vshrl.u32 %v4408, 7
    %v4410 = vsub.s32 %v4381, %v4409
    %v4411 = vrot.slane %v4259, %v4410
    %v4412 = vlaneseq
    %v4413 = vshrl.u32 %v4412, 7
    %v4414 = vsub.s32 %v4381, %v4413
    %v4415 = vrot.slane %v4262, %v4414
    %vm4416 = vcmask 1045509
    %v4417 = vsel %vm4416, %v4415, %v4411
    %v4419 = vsel %vm3909, %v4391, %v4404
    %v4420 = vsel %vm3919, %v4419, %v4417
    %v4422 = vrot.slane %v4420, 1
    %v4423 = vrot.slane %v4420, 2
    %v4424 = vrot.slane %v4420, 3
    %v4425 = vrot.slane %v4420, 4
    %v4426 = vrot.slane %v4420, 5
    %v4433 = vmul.f32 %v4342, %v4420
    %v4434 = vmul.f32 %v4349, %v4422
    %v4435 = vmul.f32 %v4356, %v4423
    %v4436 = vmul.f32 %v4363, %v4424
    %v4437 = vmul.f32 %v4370, %v4425
    %v4438 = vmul.f32 %v4377, %v4426
    %v4445 = vrot.slane %v4434, 7
    %v4446 = vsel %vm4390, %v4445, %v4433
    %v4447 = vrot.slane %v4435, 6
    %vm4448 = vcmask 1042434
    %v4449 = vsel %vm4448, %v4447, %v4446
    %v4450 = vrot.slane %v4436, 5
    %v4451 = vsel %vm4403, %v4450, %v4449
    %v4452 = vrot.slane %v4437, 4
    %vm4453 = vcmask 1044484
    %v4454 = vsel %vm4453, %v4452, %v4451
    %v4455 = vrot.slane %v4438, 3
    %v4456 = vsel %vm4416, %v4455, %v4454
    %vm4458 = vcmask 62464
    %v4459 = vsel %vm4458, %v4456, 0.0
    %4460 = vadd.xlane.f32.xlu0 %v4459
    %v4461 = vpop.xlane.xlu0 %4460
    %v4463 = vrot.slane %v4461, 2
    %v4465 = vadd.f32 %v4461, %v4463
    %v4466 = vrot.slane %v4461, 4
    %v4468 = vadd.f32 %v4465, %v4466
    %v4469 = vld [vmem:[%s2 + $0x5] ss:$0 sm:$0xff]
    %v4470 = vadd.f32 %v4468, %v4469
    %vm4471 = vcmask 1024
    %4472 = vst.msk [vmem:[%s3] sm:$0x3] %vm4471, %v4470
    // Predicated region
    $region18: #{lstm_att_forward.1} parent=1 // pred_check
      _
    $region19: #{lstm_att_forward.1} parent=1 // pred_check_branch
      %4474 = sbr.rel (0) target = $region21
    $region20: #{lstm_att_forward.1} parent=1 // pred_region
      _
    $region21: #{lstm_att_forward.1} parent=1 // pred_fallthru
      _
    // Predicated region
    $region22: #{lstm_att_forward.1} parent=1 // pred_check
      _
    $region23: #{lstm_att_forward.1} parent=1 // pred_check_branch
      %4476 = sbr.rel (0) target = $region25
    $region24: #{lstm_att_forward.1} parent=1 // pred_region
      _
    $region25: #{lstm_att_forward.1} parent=1 // pred_fallthru
      _
    %4477 = vsyncpa [#allocation3], 1

</llo_original>
